<compile_context>
chip_gen: v6e
topology: v6e:2x2x1
jax: 0.10.0
libtpu: 0.0.40
codegen_flags: <defaults>
</compile_context>

<pallas_src>
import functools
import math

import jax
import jax.numpy as jnp
from jax.experimental import pallas as pl
from jax.experimental.pallas import tpu as pltpu

# ----------------------------- small config ---------------------------------
B = 2            # batch
S = 8            # sequence length
T = B * S        # stacked tokens (sublane dim inside the kernel)
HID = 32         # hidden size (= model.pooler.dense.out_features)
NH = 2           # attention heads
DH = HID // NH   # head dim
FF = 64          # intermediate size
VOCAB = 100
MAX_POS = 40
N_LAYERS = 2
PAD_IDX = 1
LN_EPS = 1e-5

# embedding slab layout (rows): [ln_g, ln_b, type, pad.., word (100), pad.., pos (40)]
TYPE_ROW = 2
WORD_OFF = 8
POS_OFF = 112
EMB_ROWS = 152                      # multiple of 8

# vec_pack row layout (one (8,128) tile):
#   per layer l: row 3l   = [bq_h0|bk_h0|bv_h0|bq_h1|bk_h1|bv_h1|bo]
#                row 3l+1 = [ln1_g|ln1_b|ln2_g|ln2_b]
#                row 3l+2 = [b1(64)|b2(32)|pad]
#   row 6 = head-conv biases (3 used), row 7 = sigmoid(seg) rank-1 weights (2 used)
ROW_HEAD_B = 3 * N_LAYERS
ROW_SIG_W = 3 * N_LAYERS + 1
QKV_COLS = 3 * DH * NH              # 96 (per-head q,k,v columns in w_a / bias row)


# ----------------------------- in-kernel helpers -----------------------------
def _layernorm(x, g, b):
    mu = jnp.mean(x, axis=-1, keepdims=True)
    var = jnp.mean((x - mu) * (x - mu), axis=-1, keepdims=True)
    return (x - mu) * jax.lax.rsqrt(var + LN_EPS) * g + b


def _gelu_tanh(x):
    # TODO(synk): HF RoBERTa uses erf-based GELU; tanh approximation kept for
    # robust Mosaic/EUP lowering (tiny numeric difference).
    c = math.sqrt(2.0 / math.pi)
    return 0.5 * x * (1.0 + jnp.tanh(c * (x + 0.044715 * x * x * x)))


# ----------------------------- fused forward kernel --------------------------
def _fused_forward_kernel(ids_ref, mask_ref, emb_ref, vec_ref,
                          wa_ref, wb_ref, wh_ref, out_ref):
    f32 = jnp.float32
    scale = 1.0 / math.sqrt(DH)

    ids = ids_ref[...]                                   # (T, 1) int32
    mask_row = mask_ref[...]                             # (1, T) f32 (1=keep)
    not_pad = (ids != PAD_IDX).astype(f32)               # (T, 1)

    # --- block-diagonal "same batch" matrix (comparisons only, no div) ---
    ri = jax.lax.broadcasted_iota(jnp.int32, (T, T), 0)
    ci = jax.lax.broadcasted_iota(jnp.int32, (T, T), 1)
    same_b = None
    for b in range(B):                                    # statically unrolled
        in_row = (ri >= b * S) & (ri < (b + 1) * S)
        in_col = (ci >= b * S) & (ci < (b + 1) * S)
        term = in_row & in_col
        same_b = term if same_b is None else (same_b | term)
    same_batch = same_b.astype(f32)                       # (T, T)

    # additive attention mask: 0 if (same batch AND key unmasked), else -1e9
    add_mask = (same_batch * mask_row - 1.0) * 1e9        # (T, T)

    # --- RoBERTa position ids: cumsum(not_pad) within sequence * not_pad + pad
    le = (ci <= ri).astype(f32)
    csum = jnp.dot(same_batch * le, not_pad,
                   preferred_element_type=f32)            # (T, 1)
    pos = (csum * not_pad + float(PAD_IDX)).astype(jnp.int32)

    # --- combined word + position + token-type gather: one one-hot matmul ---
    cidx = jax.lax.broadcasted_iota(jnp.int32, (T, EMB_ROWS), 1)
    onehot = ((cidx == ids + WORD_OFF)
              | (cidx == pos + POS_OFF)
              | (cidx == TYPE_ROW)).astype(f32)           # (T, EMB_ROWS)
    emb_tbl = emb_ref[...]                                # (EMB_ROWS, HID)
    h = jnp.dot(onehot, emb_tbl, preferred_element_type=f32)   # (T, HID)
    h = _layernorm(h, emb_tbl[0:1, :], emb_tbl[1:2, :])   # embedding LayerNorm

    vp = vec_ref[...]                                     # (8, 128) small params

    for l in range(N_LAYERS):                             # statically unrolled
        wa = wa_ref[l]                                    # (HID, 160)
        wb = wb_ref[l]                                    # (96, HID)
        brow = vp[3 * l:3 * l + 1, :]                     # attention biases
        lrow = vp[3 * l + 1:3 * l + 2, :]                 # layernorm params
        frow = vp[3 * l + 2:3 * l + 3, :]                 # ffn biases

        # --- self-attention: per-head matmuls, no activation lane slicing ---
        attn = jnp.zeros((T, HID), f32)
        for hh in range(NH):
            o = 3 * DH * hh
            q = jnp.dot(h, wa[:, o:o + DH],
                        preferred_element_type=f32) + brow[:, o:o + DH]
            k = jnp.dot(h, wa[:, o + DH:o + 2 * DH],
                        preferred_element_type=f32) + brow[:, o + DH:o + 2 * DH]
            v = jnp.dot(h, wa[:, o + 2 * DH:o + 3 * DH],
                        preferred_element_type=f32) + brow[:, o + 2 * DH:o + 3 * DH]
            s = jax.lax.dot_general(
                q, k, (((1,), (1,)), ((), ())),
                preferred_element_type=f32) * scale + add_mask        # (T, T)
            s = s - jnp.max(s, axis=-1, keepdims=True)
            p = jnp.exp(s)
            p = p * pl.reciprocal(jnp.sum(p, axis=-1, keepdims=True),
                                  approx=True)
            ctx = jnp.dot(p, v, preferred_element_type=f32)           # (T, DH)
            # per-head output projection accumulated -> no lane concat
            attn = attn + jnp.dot(ctx, wb[DH * hh:DH * (hh + 1), :],
                                  preferred_element_type=f32)         # (T, HID)
        attn = attn + brow[:, QKV_COLS:QKV_COLS + HID]                # + bo
        h = _layernorm(h + attn, lrow[:, 0:HID], lrow[:, HID:2 * HID])

        # --- feed-forward ---
        inter = _gelu_tanh(
            jnp.dot(h, wa[:, QKV_COLS:QKV_COLS + FF],
                    preferred_element_type=f32) + frow[:, 0:FF])      # (T, FF)
        ffn = (jnp.dot(inter, wb[HID:HID + FF, :],
                       preferred_element_type=f32) + frow[:, FF:FF + HID])
        h = _layernorm(h + ffn, lrow[:, 2 * HID:3 * HID],
                       lrow[:, 3 * HID:4 * HID])

    # --- heads (Dropout(0.2) is identity at inference) ---
    # wh_ref is (HID, 128): cols [head_x, tail_x, segmentation, zeros...].
    # sigmoid(seg) contribution of head/tail convs is a rank-1 update.
    lin = (jnp.dot(h, wh_ref[...], preferred_element_type=f32)
           + vp[ROW_HEAD_B:ROW_HEAD_B + 1, :])                        # (T, 128)
    sig = pl.reciprocal(1.0 + jnp.exp(-lin[:, 2:3]), approx=True)     # (T, 1)
    out_ref[...] = lin + sig * vp[ROW_SIG_W:ROW_SIG_W + 1, :]         # lane-dense


def fused_forward(ids_col, mask_row, p):
    """ids_col: (T,1) int32; mask_row: (1,T) f32; returns (T,128) f32."""
    ins = [ids_col, mask_row, p["emb_pack"], p["vec_pack"],
           p["w_a"], p["w_b"], p["w_heads"]]
    in_specs = [pl.BlockSpec(a.shape, lambda i, _nd=a.ndim: (0,) * _nd)
                for a in ins]
    return pl.pallas_call(
        _fused_forward_kernel,
        out_shape=jax.ShapeDtypeStruct((T, 128), jnp.float32),
        grid=(1,),                                  # single step, single core
        in_specs=in_specs,
        out_specs=pl.BlockSpec((T, 128), lambda i: (0, 0)),
        compiler_params=pltpu.CompilerParams(
            dimension_semantics=("arbitrary",)),
    )(*ins)


# ----------------------------- parameters ------------------------------------
def _init_params(key):
    keys = iter(jax.random.split(key, 48))

    def nrm(shape):
        return (0.02 * jax.random.normal(next(keys), shape)).astype(jnp.float32)

    # embedding slab
    word_emb = nrm((VOCAB, HID))
    pos_emb = nrm((MAX_POS, HID))
    type_emb = nrm((1, HID))
    emb_pack = jnp.zeros((EMB_ROWS, HID), jnp.float32)
    emb_pack = emb_pack.at[0].set(jnp.ones((HID,), jnp.float32))   # emb LN gamma
    emb_pack = emb_pack.at[1].set(jnp.zeros((HID,), jnp.float32))  # emb LN beta
    emb_pack = emb_pack.at[TYPE_ROW].set(type_emb[0])
    emb_pack = emb_pack.at[WORD_OFF:WORD_OFF + VOCAB].set(word_emb)
    emb_pack = emb_pack.at[POS_OFF:POS_OFF + MAX_POS].set(pos_emb)

    w_a_list, w_b_list, vec_rows = [], [], []
    for _ in range(N_LAYERS):
        wq, wk, wv, wo = nrm((HID, HID)), nrm((HID, HID)), nrm((HID, HID)), nrm((HID, HID))
        bq, bk, bv, bo = nrm((HID,)), nrm((HID,)), nrm((HID,)), nrm((HID,))
        w1, b1 = nrm((HID, FF)), nrm((FF,))
        w2, b2 = nrm((FF, HID)), nrm((HID,))
        ln1g = jnp.ones((HID,), jnp.float32); ln1b = jnp.zeros((HID,), jnp.float32)
        ln2g = jnp.ones((HID,), jnp.float32); ln2b = jnp.zeros((HID,), jnp.float32)

        cols, brow = [], []
        for h in range(NH):
            sl = slice(h * DH, (h + 1) * DH)
            cols += [wq[:, sl], wk[:, sl], wv[:, sl]]
            brow += [bq[sl], bk[sl], bv[sl]]
        cols.append(w1)
        brow.append(bo)
        w_a_list.append(jnp.concatenate(cols, axis=1))            # (HID, 160)
        w_b_list.append(jnp.concatenate([wo, w2], axis=0))        # (96, HID)
        vec_rows.append(jnp.concatenate(brow))                    # (128,)
        vec_rows.append(jnp.concatenate([ln1g, ln1b, ln2g, ln2b]))
        vec_rows.append(jnp.concatenate(
            [b1, b2, jnp.zeros((128 - FF - HID,), jnp.float32)]))

    # Heads: PyTorch-shaped 1x1 Conv1d weights (O, C, K=1), packed channels-last
    # into a lane-dense (HID, 128) slab; cols [head_x, tail_x, seg, zeros...].
    wh_pt = nrm((1, HID + 1, 1))   # classifier_conv_head: Conv1d(H+1, 1, 1)
    wt_pt = nrm((1, HID + 1, 1))   # classifier_conv_tail: Conv1d(H+1, 1, 1)
    ws_pt = nrm((1, HID, 1))       # classifier_conv_segmentation: Conv1d(H, 1, 1)
    bh, bt, bs = nrm((1,)), nrm((1,)), nrm((1,))
    w_heads = jnp.concatenate(
        [wh_pt[0, :HID, :], wt_pt[0, :HID, :], ws_pt[0, :, :],
         jnp.zeros((HID, 125), jnp.float32)], axis=1)             # (HID, 128)
    vec_rows.append(jnp.concatenate([bh, bt, bs, jnp.zeros((125,), jnp.float32)]))
    vec_rows.append(jnp.concatenate(
        [wh_pt[0, HID:HID + 1, 0], wt_pt[0, HID:HID + 1, 0],
         jnp.zeros((126,), jnp.float32)]))                        # sigmoid(seg) weights

    return {
        "emb_pack": emb_pack,                                     # (152, 32)
        "vec_pack": jnp.stack(vec_rows, axis=0),                  # (8, 128)
        "w_a": jnp.stack(w_a_list, axis=0),                       # (L, 32, 160)
        "w_b": jnp.stack(w_b_list, axis=0),                       # (L, 96, 32)
        "w_heads": w_heads,                                       # (32, 128)
    }


# ----------------------------- forward ----------------------------------------
def model_forward(params, input_ids, attention_mask, special_tokens_mask=None):
    bsz, seqlen = input_ids.shape
    assert bsz * seqlen == T and seqlen == S
    ids_col = input_ids.reshape(-1, 1).astype(jnp.int32)          # (T, 1)
    mask_row = attention_mask.reshape(1, -1).astype(jnp.float32)  # (1, T)

    out = fused_forward(ids_col, mask_row, params)                # (T, 128)
    logits = out[:, :3].reshape(bsz, seqlen, 3)
    logits_head = logits[..., 0]
    logits_tail = logits[..., 1]
    logits_seg = logits[..., 2]

    if special_tokens_mask is not None:
        neg_inf = jnp.float32(-jnp.inf)
        logits_head = jnp.where(special_tokens_mask == 0, logits_head, neg_inf)
        tail_mask = jnp.concatenate(
            [special_tokens_mask[:, -1:], special_tokens_mask[:, :-1]], axis=1)
        logits_tail = jnp.where(tail_mask == 0, logits_tail, neg_inf)

    return ((logits_head, logits_tail, logits_seg),)


# ----------------------------- main -------------------------------------------
if __name__ == "__main__":
    key = jax.random.PRNGKey(0)
    pkey, ikey = jax.random.split(key)
    params = _init_params(pkey)
    input_ids = jax.random.randint(ikey, (B, S), 2, VOCAB, dtype=jnp.int32)
    attention_mask = jnp.ones((B, S), dtype=jnp.int32)

    fwd = jax.jit(functools.partial(model_forward, params))
    (logits_head, logits_tail, logits_seg), = fwd(input_ids, attention_mask)
    jax.block_until_ready((logits_head, logits_tail, logits_seg))
    assert logits_head.shape == (B, S)
    assert logits_tail.shape == (B, S)
    assert logits_seg.shape == (B, S)
    assert bool(jnp.isfinite(logits_head).all())
    assert bool(jnp.isfinite(logits_tail).all())
    assert bool(jnp.isfinite(logits_seg).all())
    print("KERNEL_OK")
</pallas_src>

<mosaic_0001>
module attributes {stable_mosaic.version = 11 : i64} {
  func.func @_fused_forward_kernel(%arg0: i32, %arg1: memref<16x1xi32, #tpu.memory_space<vmem>>, %arg2: memref<1x16xf32, #tpu.memory_space<vmem>>, %arg3: memref<152x32xf32, #tpu.memory_space<vmem>>, %arg4: memref<8x128xf32, #tpu.memory_space<vmem>>, %arg5: memref<2x32x160xf32, #tpu.memory_space<vmem>>, %arg6: memref<2x96x32xf32, #tpu.memory_space<vmem>>, %arg7: memref<32x128xf32, #tpu.memory_space<vmem>>, %arg8: memref<16x128xf32, #tpu.memory_space<vmem>>) attributes {dimension_semantics = [#tpu.dimension_semantics<arbitrary>], iteration_bounds = array<i64: 1>, scalar_prefetch = 0 : i64, scratch_operands = 0 : i64, tpu.core_type = #tpu.core_type<tc>, window_params = [{pipeline_mode = #tpu.pipeline_mode<synchronous>, transform_indices = @transform_0, window_bounds = array<i64: 16, 1>}, {pipeline_mode = #tpu.pipeline_mode<synchronous>, transform_indices = @transform_1, window_bounds = array<i64: 1, 16>}, {pipeline_mode = #tpu.pipeline_mode<synchronous>, transform_indices = @transform_2, window_bounds = array<i64: 152, 32>}, {pipeline_mode = #tpu.pipeline_mode<synchronous>, transform_indices = @transform_3, window_bounds = array<i64: 8, 128>}, {pipeline_mode = #tpu.pipeline_mode<synchronous>, transform_indices = @transform_4, window_bounds = array<i64: 2, 32, 160>}, {pipeline_mode = #tpu.pipeline_mode<synchronous>, transform_indices = @transform_5, window_bounds = array<i64: 2, 96, 32>}, {pipeline_mode = #tpu.pipeline_mode<synchronous>, transform_indices = @transform_6, window_bounds = array<i64: 32, 128>}, {pipeline_mode = #tpu.pipeline_mode<synchronous>, transform_indices = @transform_7, window_bounds = array<i64: 16, 128>}]} {
    %c0 = arith.constant 0 : index
    %c0_0 = arith.constant 0 : index
    %0 = vector.load %arg1[%c0, %c0_0] : memref<16x1xi32, #tpu.memory_space<vmem>>, vector<16x1xi32>
    %c0_1 = arith.constant 0 : index
    %c0_2 = arith.constant 0 : index
    %1 = vector.load %arg2[%c0_1, %c0_2] : memref<1x16xf32, #tpu.memory_space<vmem>>, vector<1x16xf32>
    %c1_i32 = arith.constant 1 : i32
    %2 = vector.broadcast %c1_i32 : i32 to vector<16x1xi32>
    %3 = arith.cmpi ne, %0, %2 : vector<16x1xi32>
    %4 = arith.extui %3 : vector<16x1xi1> to vector<16x1xi32>
    %5 = arith.sitofp %4 : vector<16x1xi32> to vector<16x1xf32>
    %6 = tpu.iota {dimensions = array<i32: 0>} : vector<16x16xi32>
    %7 = tpu.iota {dimensions = array<i32: 1>} : vector<16x16xi32>
    %c0_i32 = arith.constant 0 : i32
    %8 = vector.broadcast %c0_i32 : i32 to vector<16x16xi32>
    %9 = arith.cmpi sge, %6, %8 : vector<16x16xi32>
    %c8_i32 = arith.constant 8 : i32
    %10 = vector.broadcast %c8_i32 : i32 to vector<16x16xi32>
    %11 = arith.cmpi slt, %6, %10 : vector<16x16xi32>
    %12 = arith.andi %9, %11 : vector<16x16xi1>
    %c0_i32_3 = arith.constant 0 : i32
    %13 = vector.broadcast %c0_i32_3 : i32 to vector<16x16xi32>
    %14 = arith.cmpi sge, %7, %13 : vector<16x16xi32>
    %c8_i32_4 = arith.constant 8 : i32
    %15 = vector.broadcast %c8_i32_4 : i32 to vector<16x16xi32>
    %16 = arith.cmpi slt, %7, %15 : vector<16x16xi32>
    %17 = arith.andi %14, %16 : vector<16x16xi1>
    %18 = arith.andi %12, %17 : vector<16x16xi1>
    %c8_i32_5 = arith.constant 8 : i32
    %19 = vector.broadcast %c8_i32_5 : i32 to vector<16x16xi32>
    %20 = arith.cmpi sge, %6, %19 : vector<16x16xi32>
    %c16_i32 = arith.constant 16 : i32
    %21 = vector.broadcast %c16_i32 : i32 to vector<16x16xi32>
    %22 = arith.cmpi slt, %6, %21 : vector<16x16xi32>
    %23 = arith.andi %20, %22 : vector<16x16xi1>
    %c8_i32_6 = arith.constant 8 : i32
    %24 = vector.broadcast %c8_i32_6 : i32 to vector<16x16xi32>
    %25 = arith.cmpi sge, %7, %24 : vector<16x16xi32>
    %c16_i32_7 = arith.constant 16 : i32
    %26 = vector.broadcast %c16_i32_7 : i32 to vector<16x16xi32>
    %27 = arith.cmpi slt, %7, %26 : vector<16x16xi32>
    %28 = arith.andi %25, %27 : vector<16x16xi1>
    %29 = arith.andi %23, %28 : vector<16x16xi1>
    %30 = arith.ori %18, %29 : vector<16x16xi1>
    %31 = arith.extui %30 : vector<16x16xi1> to vector<16x16xi32>
    %32 = arith.sitofp %31 : vector<16x16xi32> to vector<16x16xf32>
    %33 = vector.broadcast %1 : vector<1x16xf32> to vector<16x16xf32>
    %34 = arith.mulf %32, %33 : vector<16x16xf32>
    %cst = arith.constant 1.000000e+00 : f32
    %35 = vector.broadcast %cst : f32 to vector<16x16xf32>
    %36 = arith.subf %34, %35 : vector<16x16xf32>
    %cst_8 = arith.constant 1.000000e+09 : f32
    %37 = vector.broadcast %cst_8 : f32 to vector<16x16xf32>
    %38 = arith.mulf %36, %37 : vector<16x16xf32>
    %39 = arith.cmpi sle, %7, %6 : vector<16x16xi32>
    %40 = arith.extui %39 : vector<16x16xi1> to vector<16x16xi32>
    %41 = arith.sitofp %40 : vector<16x16xi32> to vector<16x16xf32>
    %42 = arith.mulf %32, %41 : vector<16x16xf32>
    %cst_9 = arith.constant dense<0.000000e+00> : vector<16x1xf32>
    %43 = tpu.matmul %42, %5, %cst_9 {dimension_numbers = #tpu.dot_dimension_numbers<[1], [0], [0], [1], [0, 0, 1, 1], [], []>} : vector<16x16xf32>, vector<16x1xf32>, vector<16x1xf32> -> vector<16x1xf32>
    %44 = arith.mulf %43, %5 : vector<16x1xf32>
    %cst_10 = arith.constant 1.000000e+00 : f32
    %45 = vector.broadcast %cst_10 : f32 to vector<16x1xf32>
    %46 = arith.addf %44, %45 : vector<16x1xf32>
    %47 = arith.fptosi %46 : vector<16x1xf32> to vector<16x1xi32>
    %48 = tpu.iota {dimensions = array<i32: 1>} : vector<16x152xi32>
    %c8_i32_11 = arith.constant 8 : i32
    %49 = vector.broadcast %c8_i32_11 : i32 to vector<16x1xi32>
    %50 = arith.addi %0, %49 : vector<16x1xi32>
    %51 = vector.broadcast %50 : vector<16x1xi32> to vector<16x152xi32>
    %52 = arith.cmpi eq, %48, %51 : vector<16x152xi32>
    %c112_i32 = arith.constant 112 : i32
    %53 = vector.broadcast %c112_i32 : i32 to vector<16x1xi32>
    %54 = arith.addi %47, %53 : vector<16x1xi32>
    %55 = vector.broadcast %54 : vector<16x1xi32> to vector<16x152xi32>
    %56 = arith.cmpi eq, %48, %55 : vector<16x152xi32>
    %57 = arith.ori %52, %56 : vector<16x152xi1>
    %c2_i32 = arith.constant 2 : i32
    %58 = vector.broadcast %c2_i32 : i32 to vector<16x152xi32>
    %59 = arith.cmpi eq, %48, %58 : vector<16x152xi32>
    %60 = arith.ori %57, %59 : vector<16x152xi1>
    %61 = arith.extui %60 : vector<16x152xi1> to vector<16x152xi32>
    %62 = arith.sitofp %61 : vector<16x152xi32> to vector<16x152xf32>
    %c0_12 = arith.constant 0 : index
    %c0_13 = arith.constant 0 : index
    %63 = vector.load %arg3[%c0_12, %c0_13] : memref<152x32xf32, #tpu.memory_space<vmem>>, vector<152x32xf32>
    %cst_14 = arith.constant dense<0.000000e+00> : vector<16x32xf32>
    %64 = tpu.matmul %62, %63, %cst_14 {dimension_numbers = #tpu.dot_dimension_numbers<[1], [0], [0], [1], [0, 0, 1, 1], [], []>} : vector<16x152xf32>, vector<152x32xf32>, vector<16x32xf32> -> vector<16x32xf32>
    %65 = vector.extract_strided_slice %63 {offsets = [0, 0], sizes = [1, 32], strides = [1, 1]} : vector<152x32xf32> to vector<1x32xf32>
    %66 = vector.extract_strided_slice %63 {offsets = [1, 0], sizes = [1, 32], strides = [1, 1]} : vector<152x32xf32> to vector<1x32xf32>
    %cst_15 = arith.constant dense<0.000000e+00> : vector<16xf32>
    %67 = vector.multi_reduction <add>, %64, %cst_15 [1] : vector<16x32xf32> to vector<16xf32>
    %68 = vector.shape_cast %67 : vector<16xf32> to vector<16x1xf32>
    %cst_16 = arith.constant 3.200000e+01 : f32
    %69 = vector.broadcast %cst_16 : f32 to vector<16x1xf32>
    %70 = arith.divf %68, %69 : vector<16x1xf32>
    %71 = vector.broadcast %70 : vector<16x1xf32> to vector<16x32xf32>
    %72 = arith.subf %64, %71 : vector<16x32xf32>
    %73 = vector.broadcast %70 : vector<16x1xf32> to vector<16x32xf32>
    %74 = arith.subf %64, %73 : vector<16x32xf32>
    %75 = arith.mulf %72, %74 : vector<16x32xf32>
    %cst_17 = arith.constant dense<0.000000e+00> : vector<16xf32>
    %76 = vector.multi_reduction <add>, %75, %cst_17 [1] : vector<16x32xf32> to vector<16xf32>
    %77 = vector.shape_cast %76 : vector<16xf32> to vector<16x1xf32>
    %cst_18 = arith.constant 3.200000e+01 : f32
    %78 = vector.broadcast %cst_18 : f32 to vector<16x1xf32>
    %79 = arith.divf %77, %78 : vector<16x1xf32>
    %80 = vector.broadcast %70 : vector<16x1xf32> to vector<16x32xf32>
    %81 = arith.subf %64, %80 : vector<16x32xf32>
    %cst_19 = arith.constant 9.99999974E-6 : f32
    %82 = vector.broadcast %cst_19 : f32 to vector<16x1xf32>
    %83 = arith.addf %79, %82 : vector<16x1xf32>
    %84 = math.rsqrt %83 : vector<16x1xf32>
    %85 = vector.broadcast %84 : vector<16x1xf32> to vector<16x32xf32>
    %86 = arith.mulf %81, %85 : vector<16x32xf32>
    %87 = vector.broadcast %65 : vector<1x32xf32> to vector<16x32xf32>
    %88 = arith.mulf %86, %87 : vector<16x32xf32>
    %89 = vector.broadcast %66 : vector<1x32xf32> to vector<16x32xf32>
    %90 = arith.addf %88, %89 : vector<16x32xf32>
    %c0_20 = arith.constant 0 : index
    %c0_21 = arith.constant 0 : index
    %91 = vector.load %arg4[%c0_20, %c0_21] : memref<8x128xf32, #tpu.memory_space<vmem>>, vector<8x128xf32>
    %c0_22 = arith.constant 0 : index
    %c0_23 = arith.constant 0 : index
    %c0_24 = arith.constant 0 : index
    %92 = vector.load %arg5[%c0_22, %c0_23, %c0_24] : memref<2x32x160xf32, #tpu.memory_space<vmem>>, vector<1x32x160xf32>
    %93 = vector.shape_cast %92 : vector<1x32x160xf32> to vector<32x160xf32>
    %c0_25 = arith.constant 0 : index
    %c0_26 = arith.constant 0 : index
    %c0_27 = arith.constant 0 : index
    %94 = vector.load %arg6[%c0_25, %c0_26, %c0_27] : memref<2x96x32xf32, #tpu.memory_space<vmem>>, vector<1x96x32xf32>
    %95 = vector.shape_cast %94 : vector<1x96x32xf32> to vector<96x32xf32>
    %96 = vector.extract_strided_slice %91 {offsets = [0, 0], sizes = [1, 128], strides = [1, 1]} : vector<8x128xf32> to vector<1x128xf32>
    %97 = vector.extract_strided_slice %91 {offsets = [1, 0], sizes = [1, 128], strides = [1, 1]} : vector<8x128xf32> to vector<1x128xf32>
    %98 = vector.extract_strided_slice %91 {offsets = [2, 0], sizes = [1, 128], strides = [1, 1]} : vector<8x128xf32> to vector<1x128xf32>
    %cst_28 = arith.constant 0.000000e+00 : f32
    %99 = vector.broadcast %cst_28 : f32 to vector<16x32xf32>
    %100 = vector.extract_strided_slice %93 {offsets = [0, 0], sizes = [32, 16], strides = [1, 1]} : vector<32x160xf32> to vector<32x16xf32>
    %cst_29 = arith.constant dense<0.000000e+00> : vector<16x16xf32>
    %101 = tpu.matmul %90, %100, %cst_29 {dimension_numbers = #tpu.dot_dimension_numbers<[1], [0], [0], [1], [0, 0, 1, 1], [], []>} : vector<16x32xf32>, vector<32x16xf32>, vector<16x16xf32> -> vector<16x16xf32>
    %102 = vector.extract_strided_slice %96 {offsets = [0, 0], sizes = [1, 16], strides = [1, 1]} : vector<1x128xf32> to vector<1x16xf32>
    %103 = vector.broadcast %102 : vector<1x16xf32> to vector<16x16xf32>
    %104 = arith.addf %101, %103 : vector<16x16xf32>
    %105 = vector.extract_strided_slice %93 {offsets = [0, 16], sizes = [32, 16], strides = [1, 1]} : vector<32x160xf32> to vector<32x16xf32>
    %cst_30 = arith.constant dense<0.000000e+00> : vector<16x16xf32>
    %106 = tpu.matmul %90, %105, %cst_30 {dimension_numbers = #tpu.dot_dimension_numbers<[1], [0], [0], [1], [0, 0, 1, 1], [], []>} : vector<16x32xf32>, vector<32x16xf32>, vector<16x16xf32> -> vector<16x16xf32>
    %107 = vector.extract_strided_slice %96 {offsets = [0, 16], sizes = [1, 16], strides = [1, 1]} : vector<1x128xf32> to vector<1x16xf32>
    %108 = vector.broadcast %107 : vector<1x16xf32> to vector<16x16xf32>
    %109 = arith.addf %106, %108 : vector<16x16xf32>
    %110 = vector.extract_strided_slice %93 {offsets = [0, 32], sizes = [32, 16], strides = [1, 1]} : vector<32x160xf32> to vector<32x16xf32>
    %cst_31 = arith.constant dense<0.000000e+00> : vector<16x16xf32>
    %111 = tpu.matmul %90, %110, %cst_31 {dimension_numbers = #tpu.dot_dimension_numbers<[1], [0], [0], [1], [0, 0, 1, 1], [], []>} : vector<16x32xf32>, vector<32x16xf32>, vector<16x16xf32> -> vector<16x16xf32>
    %112 = vector.extract_strided_slice %96 {offsets = [0, 32], sizes = [1, 16], strides = [1, 1]} : vector<1x128xf32> to vector<1x16xf32>
    %113 = vector.broadcast %112 : vector<1x16xf32> to vector<16x16xf32>
    %114 = arith.addf %111, %113 : vector<16x16xf32>
    %cst_32 = arith.constant dense<0.000000e+00> : vector<16x16xf32>
    %115 = tpu.matmul %104, %109, %cst_32 {dimension_numbers = #tpu.dot_dimension_numbers<[1], [1], [0], [0], [0, 0, 1, 0], [], []>} : vector<16x16xf32>, vector<16x16xf32>, vector<16x16xf32> -> vector<16x16xf32>
    %cst_33 = arith.constant 2.500000e-01 : f32
    %116 = vector.broadcast %cst_33 : f32 to vector<16x16xf32>
    %117 = arith.mulf %115, %116 : vector<16x16xf32>
    %118 = arith.addf %117, %38 : vector<16x16xf32>
    %cst_34 = arith.constant dense<0xFF800000> : vector<16xf32>
    %119 = vector.multi_reduction <maximumf>, %118, %cst_34 [1] : vector<16x16xf32> to vector<16xf32>
    %120 = vector.shape_cast %119 : vector<16xf32> to vector<16x1xf32>
    %121 = vector.broadcast %120 : vector<16x1xf32> to vector<16x16xf32>
    %122 = arith.subf %118, %121 : vector<16x16xf32>
    %123 = math.exp %122 : vector<16x16xf32>
    %cst_35 = arith.constant dense<0.000000e+00> : vector<16xf32>
    %124 = vector.multi_reduction <add>, %123, %cst_35 [1] : vector<16x16xf32> to vector<16xf32>
    %125 = vector.shape_cast %124 : vector<16xf32> to vector<16x1xf32>
    %126 = tpu.reciprocal %125 {approx = true} : vector<16x1xf32> -> vector<16x1xf32>
    %127 = vector.broadcast %126 : vector<16x1xf32> to vector<16x16xf32>
    %128 = arith.mulf %123, %127 : vector<16x16xf32>
    %cst_36 = arith.constant dense<0.000000e+00> : vector<16x16xf32>
    %129 = tpu.matmul %128, %114, %cst_36 {dimension_numbers = #tpu.dot_dimension_numbers<[1], [0], [0], [1], [0, 0, 1, 1], [], []>} : vector<16x16xf32>, vector<16x16xf32>, vector<16x16xf32> -> vector<16x16xf32>
    %130 = vector.extract_strided_slice %95 {offsets = [0, 0], sizes = [16, 32], strides = [1, 1]} : vector<96x32xf32> to vector<16x32xf32>
    %cst_37 = arith.constant dense<0.000000e+00> : vector<16x32xf32>
    %131 = tpu.matmul %129, %130, %cst_37 {dimension_numbers = #tpu.dot_dimension_numbers<[1], [0], [0], [1], [0, 0, 1, 1], [], []>} : vector<16x16xf32>, vector<16x32xf32>, vector<16x32xf32> -> vector<16x32xf32>
    %132 = arith.addf %99, %131 : vector<16x32xf32>
    %133 = vector.extract_strided_slice %93 {offsets = [0, 48], sizes = [32, 16], strides = [1, 1]} : vector<32x160xf32> to vector<32x16xf32>
    %cst_38 = arith.constant dense<0.000000e+00> : vector<16x16xf32>
    %134 = tpu.matmul %90, %133, %cst_38 {dimension_numbers = #tpu.dot_dimension_numbers<[1], [0], [0], [1], [0, 0, 1, 1], [], []>} : vector<16x32xf32>, vector<32x16xf32>, vector<16x16xf32> -> vector<16x16xf32>
    %135 = vector.extract_strided_slice %96 {offsets = [0, 48], sizes = [1, 16], strides = [1, 1]} : vector<1x128xf32> to vector<1x16xf32>
    %136 = vector.broadcast %135 : vector<1x16xf32> to vector<16x16xf32>
    %137 = arith.addf %134, %136 : vector<16x16xf32>
    %138 = vector.extract_strided_slice %93 {offsets = [0, 64], sizes = [32, 16], strides = [1, 1]} : vector<32x160xf32> to vector<32x16xf32>
    %cst_39 = arith.constant dense<0.000000e+00> : vector<16x16xf32>
    %139 = tpu.matmul %90, %138, %cst_39 {dimension_numbers = #tpu.dot_dimension_numbers<[1], [0], [0], [1], [0, 0, 1, 1], [], []>} : vector<16x32xf32>, vector<32x16xf32>, vector<16x16xf32> -> vector<16x16xf32>
    %140 = vector.extract_strided_slice %96 {offsets = [0, 64], sizes = [1, 16], strides = [1, 1]} : vector<1x128xf32> to vector<1x16xf32>
    %141 = vector.broadcast %140 : vector<1x16xf32> to vector<16x16xf32>
    %142 = arith.addf %139, %141 : vector<16x16xf32>
    %143 = vector.extract_strided_slice %93 {offsets = [0, 80], sizes = [32, 16], strides = [1, 1]} : vector<32x160xf32> to vector<32x16xf32>
    %cst_40 = arith.constant dense<0.000000e+00> : vector<16x16xf32>
    %144 = tpu.matmul %90, %143, %cst_40 {dimension_numbers = #tpu.dot_dimension_numbers<[1], [0], [0], [1], [0, 0, 1, 1], [], []>} : vector<16x32xf32>, vector<32x16xf32>, vector<16x16xf32> -> vector<16x16xf32>
    %145 = vector.extract_strided_slice %96 {offsets = [0, 80], sizes = [1, 16], strides = [1, 1]} : vector<1x128xf32> to vector<1x16xf32>
    %146 = vector.broadcast %145 : vector<1x16xf32> to vector<16x16xf32>
    %147 = arith.addf %144, %146 : vector<16x16xf32>
    %cst_41 = arith.constant dense<0.000000e+00> : vector<16x16xf32>
    %148 = tpu.matmul %137, %142, %cst_41 {dimension_numbers = #tpu.dot_dimension_numbers<[1], [1], [0], [0], [0, 0, 1, 0], [], []>} : vector<16x16xf32>, vector<16x16xf32>, vector<16x16xf32> -> vector<16x16xf32>
    %cst_42 = arith.constant 2.500000e-01 : f32
    %149 = vector.broadcast %cst_42 : f32 to vector<16x16xf32>
    %150 = arith.mulf %148, %149 : vector<16x16xf32>
    %151 = arith.addf %150, %38 : vector<16x16xf32>
    %cst_43 = arith.constant dense<0xFF800000> : vector<16xf32>
    %152 = vector.multi_reduction <maximumf>, %151, %cst_43 [1] : vector<16x16xf32> to vector<16xf32>
    %153 = vector.shape_cast %152 : vector<16xf32> to vector<16x1xf32>
    %154 = vector.broadcast %153 : vector<16x1xf32> to vector<16x16xf32>
    %155 = arith.subf %151, %154 : vector<16x16xf32>
    %156 = math.exp %155 : vector<16x16xf32>
    %cst_44 = arith.constant dense<0.000000e+00> : vector<16xf32>
    %157 = vector.multi_reduction <add>, %156, %cst_44 [1] : vector<16x16xf32> to vector<16xf32>
    %158 = vector.shape_cast %157 : vector<16xf32> to vector<16x1xf32>
    %159 = tpu.reciprocal %158 {approx = true} : vector<16x1xf32> -> vector<16x1xf32>
    %160 = vector.broadcast %159 : vector<16x1xf32> to vector<16x16xf32>
    %161 = arith.mulf %156, %160 : vector<16x16xf32>
    %cst_45 = arith.constant dense<0.000000e+00> : vector<16x16xf32>
    %162 = tpu.matmul %161, %147, %cst_45 {dimension_numbers = #tpu.dot_dimension_numbers<[1], [0], [0], [1], [0, 0, 1, 1], [], []>} : vector<16x16xf32>, vector<16x16xf32>, vector<16x16xf32> -> vector<16x16xf32>
    %163 = vector.extract_strided_slice %95 {offsets = [16, 0], sizes = [16, 32], strides = [1, 1]} : vector<96x32xf32> to vector<16x32xf32>
    %cst_46 = arith.constant dense<0.000000e+00> : vector<16x32xf32>
    %164 = tpu.matmul %162, %163, %cst_46 {dimension_numbers = #tpu.dot_dimension_numbers<[1], [0], [0], [1], [0, 0, 1, 1], [], []>} : vector<16x16xf32>, vector<16x32xf32>, vector<16x32xf32> -> vector<16x32xf32>
    %165 = arith.addf %132, %164 : vector<16x32xf32>
    %166 = vector.extract_strided_slice %96 {offsets = [0, 96], sizes = [1, 32], strides = [1, 1]} : vector<1x128xf32> to vector<1x32xf32>
    %167 = vector.broadcast %166 : vector<1x32xf32> to vector<16x32xf32>
    %168 = arith.addf %165, %167 : vector<16x32xf32>
    %169 = arith.addf %90, %168 : vector<16x32xf32>
    %170 = vector.extract_strided_slice %97 {offsets = [0, 0], sizes = [1, 32], strides = [1, 1]} : vector<1x128xf32> to vector<1x32xf32>
    %171 = vector.extract_strided_slice %97 {offsets = [0, 32], sizes = [1, 32], strides = [1, 1]} : vector<1x128xf32> to vector<1x32xf32>
    %cst_47 = arith.constant dense<0.000000e+00> : vector<16xf32>
    %172 = vector.multi_reduction <add>, %169, %cst_47 [1] : vector<16x32xf32> to vector<16xf32>
    %173 = vector.shape_cast %172 : vector<16xf32> to vector<16x1xf32>
    %cst_48 = arith.constant 3.200000e+01 : f32
    %174 = vector.broadcast %cst_48 : f32 to vector<16x1xf32>
    %175 = arith.divf %173, %174 : vector<16x1xf32>
    %176 = vector.broadcast %175 : vector<16x1xf32> to vector<16x32xf32>
    %177 = arith.subf %169, %176 : vector<16x32xf32>
    %178 = vector.broadcast %175 : vector<16x1xf32> to vector<16x32xf32>
    %179 = arith.subf %169, %178 : vector<16x32xf32>
    %180 = arith.mulf %177, %179 : vector<16x32xf32>
    %cst_49 = arith.constant dense<0.000000e+00> : vector<16xf32>
    %181 = vector.multi_reduction <add>, %180, %cst_49 [1] : vector<16x32xf32> to vector<16xf32>
    %182 = vector.shape_cast %181 : vector<16xf32> to vector<16x1xf32>
    %cst_50 = arith.constant 3.200000e+01 : f32
    %183 = vector.broadcast %cst_50 : f32 to vector<16x1xf32>
    %184 = arith.divf %182, %183 : vector<16x1xf32>
    %185 = vector.broadcast %175 : vector<16x1xf32> to vector<16x32xf32>
    %186 = arith.subf %169, %185 : vector<16x32xf32>
    %cst_51 = arith.constant 9.99999974E-6 : f32
    %187 = vector.broadcast %cst_51 : f32 to vector<16x1xf32>
    %188 = arith.addf %184, %187 : vector<16x1xf32>
    %189 = math.rsqrt %188 : vector<16x1xf32>
    %190 = vector.broadcast %189 : vector<16x1xf32> to vector<16x32xf32>
    %191 = arith.mulf %186, %190 : vector<16x32xf32>
    %192 = vector.broadcast %170 : vector<1x32xf32> to vector<16x32xf32>
    %193 = arith.mulf %191, %192 : vector<16x32xf32>
    %194 = vector.broadcast %171 : vector<1x32xf32> to vector<16x32xf32>
    %195 = arith.addf %193, %194 : vector<16x32xf32>
    %196 = vector.extract_strided_slice %93 {offsets = [0, 96], sizes = [32, 64], strides = [1, 1]} : vector<32x160xf32> to vector<32x64xf32>
    %cst_52 = arith.constant dense<0.000000e+00> : vector<16x64xf32>
    %197 = tpu.matmul %195, %196, %cst_52 {dimension_numbers = #tpu.dot_dimension_numbers<[1], [0], [0], [1], [0, 0, 1, 1], [], []>} : vector<16x32xf32>, vector<32x64xf32>, vector<16x64xf32> -> vector<16x64xf32>
    %198 = vector.extract_strided_slice %98 {offsets = [0, 0], sizes = [1, 64], strides = [1, 1]} : vector<1x128xf32> to vector<1x64xf32>
    %199 = vector.broadcast %198 : vector<1x64xf32> to vector<16x64xf32>
    %200 = arith.addf %197, %199 : vector<16x64xf32>
    %cst_53 = arith.constant 5.000000e-01 : f32
    %201 = vector.broadcast %cst_53 : f32 to vector<16x64xf32>
    %202 = arith.mulf %201, %200 : vector<16x64xf32>
    %cst_54 = arith.constant 4.471500e-02 : f32
    %203 = vector.broadcast %cst_54 : f32 to vector<16x64xf32>
    %204 = arith.mulf %203, %200 : vector<16x64xf32>
    %205 = arith.mulf %204, %200 : vector<16x64xf32>
    %206 = arith.mulf %205, %200 : vector<16x64xf32>
    %207 = arith.addf %200, %206 : vector<16x64xf32>
    %cst_55 = arith.constant 0.797884583 : f32
    %208 = vector.broadcast %cst_55 : f32 to vector<16x64xf32>
    %209 = arith.mulf %208, %207 : vector<16x64xf32>
    %210 = math.tanh %209 : vector<16x64xf32>
    %cst_56 = arith.constant 1.000000e+00 : f32
    %211 = vector.broadcast %cst_56 : f32 to vector<16x64xf32>
    %212 = arith.addf %211, %210 : vector<16x64xf32>
    %213 = arith.mulf %202, %212 : vector<16x64xf32>
    %214 = vector.extract_strided_slice %95 {offsets = [32, 0], sizes = [64, 32], strides = [1, 1]} : vector<96x32xf32> to vector<64x32xf32>
    %cst_57 = arith.constant dense<0.000000e+00> : vector<16x32xf32>
    %215 = tpu.matmul %213, %214, %cst_57 {dimension_numbers = #tpu.dot_dimension_numbers<[1], [0], [0], [1], [0, 0, 1, 1], [], []>} : vector<16x64xf32>, vector<64x32xf32>, vector<16x32xf32> -> vector<16x32xf32>
    %216 = vector.extract_strided_slice %98 {offsets = [0, 64], sizes = [1, 32], strides = [1, 1]} : vector<1x128xf32> to vector<1x32xf32>
    %217 = vector.broadcast %216 : vector<1x32xf32> to vector<16x32xf32>
    %218 = arith.addf %215, %217 : vector<16x32xf32>
    %219 = arith.addf %195, %218 : vector<16x32xf32>
    %220 = vector.extract_strided_slice %97 {offsets = [0, 64], sizes = [1, 32], strides = [1, 1]} : vector<1x128xf32> to vector<1x32xf32>
    %221 = vector.extract_strided_slice %97 {offsets = [0, 96], sizes = [1, 32], strides = [1, 1]} : vector<1x128xf32> to vector<1x32xf32>
    %cst_58 = arith.constant dense<0.000000e+00> : vector<16xf32>
    %222 = vector.multi_reduction <add>, %219, %cst_58 [1] : vector<16x32xf32> to vector<16xf32>
    %223 = vector.shape_cast %222 : vector<16xf32> to vector<16x1xf32>
    %cst_59 = arith.constant 3.200000e+01 : f32
    %224 = vector.broadcast %cst_59 : f32 to vector<16x1xf32>
    %225 = arith.divf %223, %224 : vector<16x1xf32>
    %226 = vector.broadcast %225 : vector<16x1xf32> to vector<16x32xf32>
    %227 = arith.subf %219, %226 : vector<16x32xf32>
    %228 = vector.broadcast %225 : vector<16x1xf32> to vector<16x32xf32>
    %229 = arith.subf %219, %228 : vector<16x32xf32>
    %230 = arith.mulf %227, %229 : vector<16x32xf32>
    %cst_60 = arith.constant dense<0.000000e+00> : vector<16xf32>
    %231 = vector.multi_reduction <add>, %230, %cst_60 [1] : vector<16x32xf32> to vector<16xf32>
    %232 = vector.shape_cast %231 : vector<16xf32> to vector<16x1xf32>
    %cst_61 = arith.constant 3.200000e+01 : f32
    %233 = vector.broadcast %cst_61 : f32 to vector<16x1xf32>
    %234 = arith.divf %232, %233 : vector<16x1xf32>
    %235 = vector.broadcast %225 : vector<16x1xf32> to vector<16x32xf32>
    %236 = arith.subf %219, %235 : vector<16x32xf32>
    %cst_62 = arith.constant 9.99999974E-6 : f32
    %237 = vector.broadcast %cst_62 : f32 to vector<16x1xf32>
    %238 = arith.addf %234, %237 : vector<16x1xf32>
    %239 = math.rsqrt %238 : vector<16x1xf32>
    %240 = vector.broadcast %239 : vector<16x1xf32> to vector<16x32xf32>
    %241 = arith.mulf %236, %240 : vector<16x32xf32>
    %242 = vector.broadcast %220 : vector<1x32xf32> to vector<16x32xf32>
    %243 = arith.mulf %241, %242 : vector<16x32xf32>
    %244 = vector.broadcast %221 : vector<1x32xf32> to vector<16x32xf32>
    %245 = arith.addf %243, %244 : vector<16x32xf32>
    %c1 = arith.constant 1 : index
    %c0_63 = arith.constant 0 : index
    %c0_64 = arith.constant 0 : index
    %246 = vector.load %arg5[%c1, %c0_63, %c0_64] : memref<2x32x160xf32, #tpu.memory_space<vmem>>, vector<1x32x160xf32>
    %247 = vector.shape_cast %246 : vector<1x32x160xf32> to vector<32x160xf32>
    %c1_65 = arith.constant 1 : index
    %c0_66 = arith.constant 0 : index
    %c0_67 = arith.constant 0 : index
    %248 = vector.load %arg6[%c1_65, %c0_66, %c0_67] : memref<2x96x32xf32, #tpu.memory_space<vmem>>, vector<1x96x32xf32>
    %249 = vector.shape_cast %248 : vector<1x96x32xf32> to vector<96x32xf32>
    %250 = vector.extract_strided_slice %91 {offsets = [3, 0], sizes = [1, 128], strides = [1, 1]} : vector<8x128xf32> to vector<1x128xf32>
    %251 = vector.extract_strided_slice %91 {offsets = [4, 0], sizes = [1, 128], strides = [1, 1]} : vector<8x128xf32> to vector<1x128xf32>
    %252 = vector.extract_strided_slice %91 {offsets = [5, 0], sizes = [1, 128], strides = [1, 1]} : vector<8x128xf32> to vector<1x128xf32>
    %cst_68 = arith.constant 0.000000e+00 : f32
    %253 = vector.broadcast %cst_68 : f32 to vector<16x32xf32>
    %254 = vector.extract_strided_slice %247 {offsets = [0, 0], sizes = [32, 16], strides = [1, 1]} : vector<32x160xf32> to vector<32x16xf32>
    %cst_69 = arith.constant dense<0.000000e+00> : vector<16x16xf32>
    %255 = tpu.matmul %245, %254, %cst_69 {dimension_numbers = #tpu.dot_dimension_numbers<[1], [0], [0], [1], [0, 0, 1, 1], [], []>} : vector<16x32xf32>, vector<32x16xf32>, vector<16x16xf32> -> vector<16x16xf32>
    %256 = vector.extract_strided_slice %250 {offsets = [0, 0], sizes = [1, 16], strides = [1, 1]} : vector<1x128xf32> to vector<1x16xf32>
    %257 = vector.broadcast %256 : vector<1x16xf32> to vector<16x16xf32>
    %258 = arith.addf %255, %257 : vector<16x16xf32>
    %259 = vector.extract_strided_slice %247 {offsets = [0, 16], sizes = [32, 16], strides = [1, 1]} : vector<32x160xf32> to vector<32x16xf32>
    %cst_70 = arith.constant dense<0.000000e+00> : vector<16x16xf32>
    %260 = tpu.matmul %245, %259, %cst_70 {dimension_numbers = #tpu.dot_dimension_numbers<[1], [0], [0], [1], [0, 0, 1, 1], [], []>} : vector<16x32xf32>, vector<32x16xf32>, vector<16x16xf32> -> vector<16x16xf32>
    %261 = vector.extract_strided_slice %250 {offsets = [0, 16], sizes = [1, 16], strides = [1, 1]} : vector<1x128xf32> to vector<1x16xf32>
    %262 = vector.broadcast %261 : vector<1x16xf32> to vector<16x16xf32>
    %263 = arith.addf %260, %262 : vector<16x16xf32>
    %264 = vector.extract_strided_slice %247 {offsets = [0, 32], sizes = [32, 16], strides = [1, 1]} : vector<32x160xf32> to vector<32x16xf32>
    %cst_71 = arith.constant dense<0.000000e+00> : vector<16x16xf32>
    %265 = tpu.matmul %245, %264, %cst_71 {dimension_numbers = #tpu.dot_dimension_numbers<[1], [0], [0], [1], [0, 0, 1, 1], [], []>} : vector<16x32xf32>, vector<32x16xf32>, vector<16x16xf32> -> vector<16x16xf32>
    %266 = vector.extract_strided_slice %250 {offsets = [0, 32], sizes = [1, 16], strides = [1, 1]} : vector<1x128xf32> to vector<1x16xf32>
    %267 = vector.broadcast %266 : vector<1x16xf32> to vector<16x16xf32>
    %268 = arith.addf %265, %267 : vector<16x16xf32>
    %cst_72 = arith.constant dense<0.000000e+00> : vector<16x16xf32>
    %269 = tpu.matmul %258, %263, %cst_72 {dimension_numbers = #tpu.dot_dimension_numbers<[1], [1], [0], [0], [0, 0, 1, 0], [], []>} : vector<16x16xf32>, vector<16x16xf32>, vector<16x16xf32> -> vector<16x16xf32>
    %cst_73 = arith.constant 2.500000e-01 : f32
    %270 = vector.broadcast %cst_73 : f32 to vector<16x16xf32>
    %271 = arith.mulf %269, %270 : vector<16x16xf32>
    %272 = arith.addf %271, %38 : vector<16x16xf32>
    %cst_74 = arith.constant dense<0xFF800000> : vector<16xf32>
    %273 = vector.multi_reduction <maximumf>, %272, %cst_74 [1] : vector<16x16xf32> to vector<16xf32>
    %274 = vector.shape_cast %273 : vector<16xf32> to vector<16x1xf32>
    %275 = vector.broadcast %274 : vector<16x1xf32> to vector<16x16xf32>
    %276 = arith.subf %272, %275 : vector<16x16xf32>
    %277 = math.exp %276 : vector<16x16xf32>
    %cst_75 = arith.constant dense<0.000000e+00> : vector<16xf32>
    %278 = vector.multi_reduction <add>, %277, %cst_75 [1] : vector<16x16xf32> to vector<16xf32>
    %279 = vector.shape_cast %278 : vector<16xf32> to vector<16x1xf32>
    %280 = tpu.reciprocal %279 {approx = true} : vector<16x1xf32> -> vector<16x1xf32>
    %281 = vector.broadcast %280 : vector<16x1xf32> to vector<16x16xf32>
    %282 = arith.mulf %277, %281 : vector<16x16xf32>
    %cst_76 = arith.constant dense<0.000000e+00> : vector<16x16xf32>
    %283 = tpu.matmul %282, %268, %cst_76 {dimension_numbers = #tpu.dot_dimension_numbers<[1], [0], [0], [1], [0, 0, 1, 1], [], []>} : vector<16x16xf32>, vector<16x16xf32>, vector<16x16xf32> -> vector<16x16xf32>
    %284 = vector.extract_strided_slice %249 {offsets = [0, 0], sizes = [16, 32], strides = [1, 1]} : vector<96x32xf32> to vector<16x32xf32>
    %cst_77 = arith.constant dense<0.000000e+00> : vector<16x32xf32>
    %285 = tpu.matmul %283, %284, %cst_77 {dimension_numbers = #tpu.dot_dimension_numbers<[1], [0], [0], [1], [0, 0, 1, 1], [], []>} : vector<16x16xf32>, vector<16x32xf32>, vector<16x32xf32> -> vector<16x32xf32>
    %286 = arith.addf %253, %285 : vector<16x32xf32>
    %287 = vector.extract_strided_slice %247 {offsets = [0, 48], sizes = [32, 16], strides = [1, 1]} : vector<32x160xf32> to vector<32x16xf32>
    %cst_78 = arith.constant dense<0.000000e+00> : vector<16x16xf32>
    %288 = tpu.matmul %245, %287, %cst_78 {dimension_numbers = #tpu.dot_dimension_numbers<[1], [0], [0], [1], [0, 0, 1, 1], [], []>} : vector<16x32xf32>, vector<32x16xf32>, vector<16x16xf32> -> vector<16x16xf32>
    %289 = vector.extract_strided_slice %250 {offsets = [0, 48], sizes = [1, 16], strides = [1, 1]} : vector<1x128xf32> to vector<1x16xf32>
    %290 = vector.broadcast %289 : vector<1x16xf32> to vector<16x16xf32>
    %291 = arith.addf %288, %290 : vector<16x16xf32>
    %292 = vector.extract_strided_slice %247 {offsets = [0, 64], sizes = [32, 16], strides = [1, 1]} : vector<32x160xf32> to vector<32x16xf32>
    %cst_79 = arith.constant dense<0.000000e+00> : vector<16x16xf32>
    %293 = tpu.matmul %245, %292, %cst_79 {dimension_numbers = #tpu.dot_dimension_numbers<[1], [0], [0], [1], [0, 0, 1, 1], [], []>} : vector<16x32xf32>, vector<32x16xf32>, vector<16x16xf32> -> vector<16x16xf32>
    %294 = vector.extract_strided_slice %250 {offsets = [0, 64], sizes = [1, 16], strides = [1, 1]} : vector<1x128xf32> to vector<1x16xf32>
    %295 = vector.broadcast %294 : vector<1x16xf32> to vector<16x16xf32>
    %296 = arith.addf %293, %295 : vector<16x16xf32>
    %297 = vector.extract_strided_slice %247 {offsets = [0, 80], sizes = [32, 16], strides = [1, 1]} : vector<32x160xf32> to vector<32x16xf32>
    %cst_80 = arith.constant dense<0.000000e+00> : vector<16x16xf32>
    %298 = tpu.matmul %245, %297, %cst_80 {dimension_numbers = #tpu.dot_dimension_numbers<[1], [0], [0], [1], [0, 0, 1, 1], [], []>} : vector<16x32xf32>, vector<32x16xf32>, vector<16x16xf32> -> vector<16x16xf32>
    %299 = vector.extract_strided_slice %250 {offsets = [0, 80], sizes = [1, 16], strides = [1, 1]} : vector<1x128xf32> to vector<1x16xf32>
    %300 = vector.broadcast %299 : vector<1x16xf32> to vector<16x16xf32>
    %301 = arith.addf %298, %300 : vector<16x16xf32>
    %cst_81 = arith.constant dense<0.000000e+00> : vector<16x16xf32>
    %302 = tpu.matmul %291, %296, %cst_81 {dimension_numbers = #tpu.dot_dimension_numbers<[1], [1], [0], [0], [0, 0, 1, 0], [], []>} : vector<16x16xf32>, vector<16x16xf32>, vector<16x16xf32> -> vector<16x16xf32>
    %cst_82 = arith.constant 2.500000e-01 : f32
    %303 = vector.broadcast %cst_82 : f32 to vector<16x16xf32>
    %304 = arith.mulf %302, %303 : vector<16x16xf32>
    %305 = arith.addf %304, %38 : vector<16x16xf32>
    %cst_83 = arith.constant dense<0xFF800000> : vector<16xf32>
    %306 = vector.multi_reduction <maximumf>, %305, %cst_83 [1] : vector<16x16xf32> to vector<16xf32>
    %307 = vector.shape_cast %306 : vector<16xf32> to vector<16x1xf32>
    %308 = vector.broadcast %307 : vector<16x1xf32> to vector<16x16xf32>
    %309 = arith.subf %305, %308 : vector<16x16xf32>
    %310 = math.exp %309 : vector<16x16xf32>
    %cst_84 = arith.constant dense<0.000000e+00> : vector<16xf32>
    %311 = vector.multi_reduction <add>, %310, %cst_84 [1] : vector<16x16xf32> to vector<16xf32>
    %312 = vector.shape_cast %311 : vector<16xf32> to vector<16x1xf32>
    %313 = tpu.reciprocal %312 {approx = true} : vector<16x1xf32> -> vector<16x1xf32>
    %314 = vector.broadcast %313 : vector<16x1xf32> to vector<16x16xf32>
    %315 = arith.mulf %310, %314 : vector<16x16xf32>
    %cst_85 = arith.constant dense<0.000000e+00> : vector<16x16xf32>
    %316 = tpu.matmul %315, %301, %cst_85 {dimension_numbers = #tpu.dot_dimension_numbers<[1], [0], [0], [1], [0, 0, 1, 1], [], []>} : vector<16x16xf32>, vector<16x16xf32>, vector<16x16xf32> -> vector<16x16xf32>
    %317 = vector.extract_strided_slice %249 {offsets = [16, 0], sizes = [16, 32], strides = [1, 1]} : vector<96x32xf32> to vector<16x32xf32>
    %cst_86 = arith.constant dense<0.000000e+00> : vector<16x32xf32>
    %318 = tpu.matmul %316, %317, %cst_86 {dimension_numbers = #tpu.dot_dimension_numbers<[1], [0], [0], [1], [0, 0, 1, 1], [], []>} : vector<16x16xf32>, vector<16x32xf32>, vector<16x32xf32> -> vector<16x32xf32>
    %319 = arith.addf %286, %318 : vector<16x32xf32>
    %320 = vector.extract_strided_slice %250 {offsets = [0, 96], sizes = [1, 32], strides = [1, 1]} : vector<1x128xf32> to vector<1x32xf32>
    %321 = vector.broadcast %320 : vector<1x32xf32> to vector<16x32xf32>
    %322 = arith.addf %319, %321 : vector<16x32xf32>
    %323 = arith.addf %245, %322 : vector<16x32xf32>
    %324 = vector.extract_strided_slice %251 {offsets = [0, 0], sizes = [1, 32], strides = [1, 1]} : vector<1x128xf32> to vector<1x32xf32>
    %325 = vector.extract_strided_slice %251 {offsets = [0, 32], sizes = [1, 32], strides = [1, 1]} : vector<1x128xf32> to vector<1x32xf32>
    %cst_87 = arith.constant dense<0.000000e+00> : vector<16xf32>
    %326 = vector.multi_reduction <add>, %323, %cst_87 [1] : vector<16x32xf32> to vector<16xf32>
    %327 = vector.shape_cast %326 : vector<16xf32> to vector<16x1xf32>
    %cst_88 = arith.constant 3.200000e+01 : f32
    %328 = vector.broadcast %cst_88 : f32 to vector<16x1xf32>
    %329 = arith.divf %327, %328 : vector<16x1xf32>
    %330 = vector.broadcast %329 : vector<16x1xf32> to vector<16x32xf32>
    %331 = arith.subf %323, %330 : vector<16x32xf32>
    %332 = vector.broadcast %329 : vector<16x1xf32> to vector<16x32xf32>
    %333 = arith.subf %323, %332 : vector<16x32xf32>
    %334 = arith.mulf %331, %333 : vector<16x32xf32>
    %cst_89 = arith.constant dense<0.000000e+00> : vector<16xf32>
    %335 = vector.multi_reduction <add>, %334, %cst_89 [1] : vector<16x32xf32> to vector<16xf32>
    %336 = vector.shape_cast %335 : vector<16xf32> to vector<16x1xf32>
    %cst_90 = arith.constant 3.200000e+01 : f32
    %337 = vector.broadcast %cst_90 : f32 to vector<16x1xf32>
    %338 = arith.divf %336, %337 : vector<16x1xf32>
    %339 = vector.broadcast %329 : vector<16x1xf32> to vector<16x32xf32>
    %340 = arith.subf %323, %339 : vector<16x32xf32>
    %cst_91 = arith.constant 9.99999974E-6 : f32
    %341 = vector.broadcast %cst_91 : f32 to vector<16x1xf32>
    %342 = arith.addf %338, %341 : vector<16x1xf32>
    %343 = math.rsqrt %342 : vector<16x1xf32>
    %344 = vector.broadcast %343 : vector<16x1xf32> to vector<16x32xf32>
    %345 = arith.mulf %340, %344 : vector<16x32xf32>
    %346 = vector.broadcast %324 : vector<1x32xf32> to vector<16x32xf32>
    %347 = arith.mulf %345, %346 : vector<16x32xf32>
    %348 = vector.broadcast %325 : vector<1x32xf32> to vector<16x32xf32>
    %349 = arith.addf %347, %348 : vector<16x32xf32>
    %350 = vector.extract_strided_slice %247 {offsets = [0, 96], sizes = [32, 64], strides = [1, 1]} : vector<32x160xf32> to vector<32x64xf32>
    %cst_92 = arith.constant dense<0.000000e+00> : vector<16x64xf32>
    %351 = tpu.matmul %349, %350, %cst_92 {dimension_numbers = #tpu.dot_dimension_numbers<[1], [0], [0], [1], [0, 0, 1, 1], [], []>} : vector<16x32xf32>, vector<32x64xf32>, vector<16x64xf32> -> vector<16x64xf32>
    %352 = vector.extract_strided_slice %252 {offsets = [0, 0], sizes = [1, 64], strides = [1, 1]} : vector<1x128xf32> to vector<1x64xf32>
    %353 = vector.broadcast %352 : vector<1x64xf32> to vector<16x64xf32>
    %354 = arith.addf %351, %353 : vector<16x64xf32>
    %cst_93 = arith.constant 5.000000e-01 : f32
    %355 = vector.broadcast %cst_93 : f32 to vector<16x64xf32>
    %356 = arith.mulf %355, %354 : vector<16x64xf32>
    %cst_94 = arith.constant 4.471500e-02 : f32
    %357 = vector.broadcast %cst_94 : f32 to vector<16x64xf32>
    %358 = arith.mulf %357, %354 : vector<16x64xf32>
    %359 = arith.mulf %358, %354 : vector<16x64xf32>
    %360 = arith.mulf %359, %354 : vector<16x64xf32>
    %361 = arith.addf %354, %360 : vector<16x64xf32>
    %cst_95 = arith.constant 0.797884583 : f32
    %362 = vector.broadcast %cst_95 : f32 to vector<16x64xf32>
    %363 = arith.mulf %362, %361 : vector<16x64xf32>
    %364 = math.tanh %363 : vector<16x64xf32>
    %cst_96 = arith.constant 1.000000e+00 : f32
    %365 = vector.broadcast %cst_96 : f32 to vector<16x64xf32>
    %366 = arith.addf %365, %364 : vector<16x64xf32>
    %367 = arith.mulf %356, %366 : vector<16x64xf32>
    %368 = vector.extract_strided_slice %249 {offsets = [32, 0], sizes = [64, 32], strides = [1, 1]} : vector<96x32xf32> to vector<64x32xf32>
    %cst_97 = arith.constant dense<0.000000e+00> : vector<16x32xf32>
    %369 = tpu.matmul %367, %368, %cst_97 {dimension_numbers = #tpu.dot_dimension_numbers<[1], [0], [0], [1], [0, 0, 1, 1], [], []>} : vector<16x64xf32>, vector<64x32xf32>, vector<16x32xf32> -> vector<16x32xf32>
    %370 = vector.extract_strided_slice %252 {offsets = [0, 64], sizes = [1, 32], strides = [1, 1]} : vector<1x128xf32> to vector<1x32xf32>
    %371 = vector.broadcast %370 : vector<1x32xf32> to vector<16x32xf32>
    %372 = arith.addf %369, %371 : vector<16x32xf32>
    %373 = arith.addf %349, %372 : vector<16x32xf32>
    %374 = vector.extract_strided_slice %251 {offsets = [0, 64], sizes = [1, 32], strides = [1, 1]} : vector<1x128xf32> to vector<1x32xf32>
    %375 = vector.extract_strided_slice %251 {offsets = [0, 96], sizes = [1, 32], strides = [1, 1]} : vector<1x128xf32> to vector<1x32xf32>
    %cst_98 = arith.constant dense<0.000000e+00> : vector<16xf32>
    %376 = vector.multi_reduction <add>, %373, %cst_98 [1] : vector<16x32xf32> to vector<16xf32>
    %377 = vector.shape_cast %376 : vector<16xf32> to vector<16x1xf32>
    %cst_99 = arith.constant 3.200000e+01 : f32
    %378 = vector.broadcast %cst_99 : f32 to vector<16x1xf32>
    %379 = arith.divf %377, %378 : vector<16x1xf32>
    %380 = vector.broadcast %379 : vector<16x1xf32> to vector<16x32xf32>
    %381 = arith.subf %373, %380 : vector<16x32xf32>
    %382 = vector.broadcast %379 : vector<16x1xf32> to vector<16x32xf32>
    %383 = arith.subf %373, %382 : vector<16x32xf32>
    %384 = arith.mulf %381, %383 : vector<16x32xf32>
    %cst_100 = arith.constant dense<0.000000e+00> : vector<16xf32>
    %385 = vector.multi_reduction <add>, %384, %cst_100 [1] : vector<16x32xf32> to vector<16xf32>
    %386 = vector.shape_cast %385 : vector<16xf32> to vector<16x1xf32>
    %cst_101 = arith.constant 3.200000e+01 : f32
    %387 = vector.broadcast %cst_101 : f32 to vector<16x1xf32>
    %388 = arith.divf %386, %387 : vector<16x1xf32>
    %389 = vector.broadcast %379 : vector<16x1xf32> to vector<16x32xf32>
    %390 = arith.subf %373, %389 : vector<16x32xf32>
    %cst_102 = arith.constant 9.99999974E-6 : f32
    %391 = vector.broadcast %cst_102 : f32 to vector<16x1xf32>
    %392 = arith.addf %388, %391 : vector<16x1xf32>
    %393 = math.rsqrt %392 : vector<16x1xf32>
    %394 = vector.broadcast %393 : vector<16x1xf32> to vector<16x32xf32>
    %395 = arith.mulf %390, %394 : vector<16x32xf32>
    %396 = vector.broadcast %374 : vector<1x32xf32> to vector<16x32xf32>
    %397 = arith.mulf %395, %396 : vector<16x32xf32>
    %398 = vector.broadcast %375 : vector<1x32xf32> to vector<16x32xf32>
    %399 = arith.addf %397, %398 : vector<16x32xf32>
    %c0_103 = arith.constant 0 : index
    %c0_104 = arith.constant 0 : index
    %400 = vector.load %arg7[%c0_103, %c0_104] : memref<32x128xf32, #tpu.memory_space<vmem>>, vector<32x128xf32>
    %cst_105 = arith.constant dense<0.000000e+00> : vector<16x128xf32>
    %401 = tpu.matmul %399, %400, %cst_105 {dimension_numbers = #tpu.dot_dimension_numbers<[1], [0], [0], [1], [0, 0, 1, 1], [], []>} : vector<16x32xf32>, vector<32x128xf32>, vector<16x128xf32> -> vector<16x128xf32>
    %402 = vector.extract_strided_slice %91 {offsets = [6, 0], sizes = [1, 128], strides = [1, 1]} : vector<8x128xf32> to vector<1x128xf32>
    %403 = vector.broadcast %402 : vector<1x128xf32> to vector<16x128xf32>
    %404 = arith.addf %401, %403 : vector<16x128xf32>
    %405 = vector.extract_strided_slice %404 {offsets = [0, 2], sizes = [16, 1], strides = [1, 1]} : vector<16x128xf32> to vector<16x1xf32>
    %cst_106 = arith.constant 0.000000e+00 : f32
    %406 = vector.broadcast %cst_106 : f32 to vector<16x1xf32>
    %407 = arith.subf %406, %405 : vector<16x1xf32>
    %408 = math.exp %407 : vector<16x1xf32>
    %cst_107 = arith.constant 1.000000e+00 : f32
    %409 = vector.broadcast %cst_107 : f32 to vector<16x1xf32>
    %410 = arith.addf %409, %408 : vector<16x1xf32>
    %411 = tpu.reciprocal %410 {approx = true} : vector<16x1xf32> -> vector<16x1xf32>
    %412 = vector.extract_strided_slice %91 {offsets = [7, 0], sizes = [1, 128], strides = [1, 1]} : vector<8x128xf32> to vector<1x128xf32>
    %413 = vector.broadcast %411 : vector<16x1xf32> to vector<16x128xf32>
    %414 = vector.broadcast %412 : vector<1x128xf32> to vector<16x128xf32>
    %415 = arith.mulf %413, %414 : vector<16x128xf32>
    %416 = arith.addf %404, %415 : vector<16x128xf32>
    %c0_108 = arith.constant 0 : index
    %c0_109 = arith.constant 0 : index
    %417 = vector.load %arg8[%c0_108, %c0_109] : memref<16x128xf32, #tpu.memory_space<vmem>>, vector<16x128xf32>
    tpu.vector_store %arg8[%c0_108, %c0_109], %416 {strides = array<i32>} : memref<16x128xf32, #tpu.memory_space<vmem>>, vector<16x128xf32>,
    return
  }
  func.func @transform_0(%arg0: i32) -> (i32, i32) {
    %c0_i32 = arith.constant 0 : i32
    %c0_i32_0 = arith.constant 0 : i32
    %c0_i32_1 = arith.constant 0 : i32
    return %c0_i32, %c0_i32_0 : i32, i32
  }
  func.func @transform_1(%arg0: i32) -> (i32, i32) {
    %c0_i32 = arith.constant 0 : i32
    %c0_i32_0 = arith.constant 0 : i32
    %c0_i32_1 = arith.constant 0 : i32
    return %c0_i32, %c0_i32_0 : i32, i32
  }
  func.func @transform_2(%arg0: i32) -> (i32, i32) {
    %c0_i32 = arith.constant 0 : i32
    %c0_i32_0 = arith.constant 0 : i32
    %c0_i32_1 = arith.constant 0 : i32
    return %c0_i32, %c0_i32_0 : i32, i32
  }
  func.func @transform_3(%arg0: i32) -> (i32, i32) {
    %c0_i32 = arith.constant 0 : i32
    %c0_i32_0 = arith.constant 0 : i32
    %c0_i32_1 = arith.constant 0 : i32
    return %c0_i32, %c0_i32_0 : i32, i32
  }
  func.func @transform_4(%arg0: i32) -> (i32, i32, i32) {
    %c0_i32 = arith.constant 0 : i32
    %c0_i32_0 = arith.constant 0 : i32
    %c0_i32_1 = arith.constant 0 : i32
    %c0_i32_2 = arith.constant 0 : i32
    return %c0_i32, %c0_i32_0, %c0_i32_1 : i32, i32, i32
  }
  func.func @transform_5(%arg0: i32) -> (i32, i32, i32) {
    %c0_i32 = arith.constant 0 : i32
    %c0_i32_0 = arith.constant 0 : i32
    %c0_i32_1 = arith.constant 0 : i32
    %c0_i32_2 = arith.constant 0 : i32
    return %c0_i32, %c0_i32_0, %c0_i32_1 : i32, i32, i32
  }
  func.func @transform_6(%arg0: i32) -> (i32, i32) {
    %c0_i32 = arith.constant 0 : i32
    %c0_i32_0 = arith.constant 0 : i32
    %c0_i32_1 = arith.constant 0 : i32
    return %c0_i32, %c0_i32_0 : i32, i32
  }
  func.func @transform_7(%arg0: i32) -> (i32, i32) {
    %c0_i32 = arith.constant 0 : i32
    %c0_i32_0 = arith.constant 0 : i32
    %c0_i32_1 = arith.constant 0 : i32
    return %c0_i32, %c0_i32_0 : i32, i32
  }
}

</mosaic_0001>

<llo_original>
// kernel: model_forward.1
$region0: #{model_forward.1}
  #allocation0 [shape = 'u32[]', space=smem, size = 0x4, offset = 0x4, fixed_abs, tag = 'smem constant byte address 0x4 - core index']
  #allocation1 [shape = 'u32[144,128]{1,0:T(1,128)}', space=vmem, size = 0x12000, scoped, tag = 'internal scratch']
  %s0 = inlined_call_operand.vmem [shape: s32[16,1], index: 0, kind: input, shape index: {}]
  %s1 = inlined_call_operand.vmem [shape: f32[1,16], index: 1, kind: input, shape index: {}]
  %s2 = inlined_call_operand.hbm [shape: f32[152,32], index: 2, kind: input, shape index: {}]
  %s3 = inlined_call_operand.hbm [shape: f32[8,128], index: 3, kind: input, shape index: {}]
  %s4 = inlined_call_operand.hbm [shape: f32[2,32,160], index: 4, kind: input, shape index: {}]
  %s5 = inlined_call_operand.hbm [shape: f32[2,96,32], index: 5, kind: input, shape index: {}]
  %s6 = inlined_call_operand.vmem [shape: f32[32,128], index: 6, kind: input, shape index: {}]
  %s7 = inlined_call_operand.vmem [shape: f32[16,128], index: 7, kind: output, shape index: {}]
  %s8 = sld [smem:[#allocation0]]
  $region54: #{model_forward.1} parent=0
    _
  %s10 = ssub.s32 1, %s8
  %s11 = scalar_select 0, %s10, %s8
  $region1: #{model_forward.1} parent=0
    #allocation2 [shape = 'u8[77824]{0}', space=vmem, size = 0x13000, scoped, tag = 'input window, operand 2, single buffered']
    #allocation3 [shape = 's32[1]{0}', space=sflag, size = 0x4, scoped, tag = 'scoped memory for model_forward.1']
    #allocation4 [shape = 'u8[4096]{0}', space=vmem, size = 0x1000, scoped, tag = 'input window, operand 3, single buffered']
    #allocation5 [shape = 's32[1]{0}', space=sflag, size = 0x4, scoped, tag = 'scoped memory for model_forward.1']
    #allocation6 [shape = 'u8[65536]{0}', space=vmem, size = 0x10000, scoped, tag = 'input window, operand 4, single buffered']
    #allocation7 [shape = 'u8[98304]{0}', space=vmem, size = 0x18000, scoped, tag = 'input window, operand 5, single buffered']
    #allocation8 [shape = 's32[1]{0}', space=sflag, size = 0x4, scoped, tag = 'scoped memory for model_forward.1']
    %12 = vsyncpa [#allocation3], 0
    %13 = vsyncpa [#allocation5], 0
    %14 = vsyncpa [#allocation8], 0
    // Predicated region
    $region2: #{model_forward.1} parent=1 // pred_check
      _
    $region3: #{model_forward.1} parent=1 // pred_check_branch
      %16 = sbr.rel (0) target = $region5
    $region4: #{model_forward.1} parent=1 // pred_region
      _
    $region5: #{model_forward.1} parent=1 // pred_fallthru
      _
    // Predicated region
    $region6: #{model_forward.1} parent=1 // pred_check
      _
    $region7: #{model_forward.1} parent=1 // pred_check_branch
      %18 = sbr.rel (0) target = $region9
    $region8: #{model_forward.1} parent=1 // pred_region
      _
    $region9: #{model_forward.1} parent=1 // pred_fallthru
      _
    // Predicated region
    $region10: #{model_forward.1} parent=1 // pred_check
      _
    $region11: #{model_forward.1} parent=1 // pred_check_branch
      %20 = sbr.rel (0) target = $region13
    $region12: #{model_forward.1} parent=1 // pred_region
      %s22 = ssub.s32 2432, 2432
      %23 = vsyncadd [#allocation3], %s22
      %s24 = sshll.u32 [#allocation2], 4
      %s25 = int_to_ptr.vmem [resolvable:$true] %s24
      %30 = dma.hbm_to_vmem [thread:$0]  %s2, 2432, %s25, [#allocation3], 128, 128, 8
    $region13: #{model_forward.1} parent=1 // pred_fallthru
      _
    // Predicated region
    $region14: #{model_forward.1} parent=1 // pred_check
      _
    $region15: #{model_forward.1} parent=1 // pred_check_branch
      %32 = sbr.rel (0) target = $region17
    $region16: #{model_forward.1} parent=1 // pred_region
      %s34 = ssub.s32 128, 128
      %35 = vsyncadd [#allocation5], %s34
      %s37 = sshll.u32 [#allocation4], 4
      %s38 = int_to_ptr.vmem [resolvable:$true] %s37
      %40 = dma.hbm_to_vmem [thread:$0]  %s3, 128, %s38, [#allocation5]
    $region17: #{model_forward.1} parent=1 // pred_fallthru
      _
    // Predicated region
    $region18: #{model_forward.1} parent=1 // pred_check
      _
    $region19: #{model_forward.1} parent=1 // pred_check_branch
      %42 = sbr.rel (0) target = $region21
    $region20: #{model_forward.1} parent=1 // pred_region
      %s44 = ssub.s32 2048, 2048
      %45 = vsyncadd [#allocation5], %s44
      %s46 = sshll.u32 [#allocation6], 4
      %s47 = int_to_ptr.vmem [resolvable:$true] %s46
      %52 = dma.hbm_to_vmem [thread:$0]  %s4, 2048, %s47, [#allocation5], 256, 256, 16
    $region21: #{model_forward.1} parent=1 // pred_fallthru
      _
    // Predicated region
    $region22: #{model_forward.1} parent=1 // pred_check
      _
    $region23: #{model_forward.1} parent=1 // pred_check_branch
      %54 = sbr.rel (0) target = $region25
    $region24: #{model_forward.1} parent=1 // pred_region
      %s56 = ssub.s32 3072, 3072
      %57 = vsyncadd [#allocation8], %s56
      %s58 = sshll.u32 [#allocation7], 4
      %s59 = int_to_ptr.vmem [resolvable:$true] %s58
      %64 = dma.hbm_to_vmem [thread:$0]  %s5, 3072, %s59, [#allocation8], 128, 128, 8
    $region25: #{model_forward.1} parent=1 // pred_fallthru
      _
    // Predicated region
    $region26: #{model_forward.1} parent=1 // pred_check
      _
    $region27: #{model_forward.1} parent=1 // pred_check_branch
      %66 = sbr.rel (0) target = $region29
    $region28: #{model_forward.1} parent=1 // pred_region
      _
    $region29: #{model_forward.1} parent=1 // pred_fallthru
      _
    // Predicated region
    $region30: #{model_forward.1} parent=1 // pred_check
      _
    $region31: #{model_forward.1} parent=1 // pred_check_branch
      %68 = sbr.rel (0) target = $region33
    $region32: #{model_forward.1} parent=1 // pred_region
      %69 = dma.done [#allocation3], 2432
    $region33: #{model_forward.1} parent=1 // pred_fallthru
      _
    // Predicated region
    $region34: #{model_forward.1} parent=1 // pred_check
      _
    $region35: #{model_forward.1} parent=1 // pred_check_branch
      %71 = sbr.rel (0) target = $region37
    $region36: #{model_forward.1} parent=1 // pred_region
      %72 = dma.done [#allocation5], 128
    $region37: #{model_forward.1} parent=1 // pred_fallthru
      _
    // Predicated region
    $region38: #{model_forward.1} parent=1 // pred_check
      _
    $region39: #{model_forward.1} parent=1 // pred_check_branch
      %74 = sbr.rel (0) target = $region41
    $region40: #{model_forward.1} parent=1 // pred_region
      %75 = dma.done [#allocation5], 2048
    $region41: #{model_forward.1} parent=1 // pred_fallthru
      _
    // Predicated region
    $region42: #{model_forward.1} parent=1 // pred_check
      _
    $region43: #{model_forward.1} parent=1 // pred_check_branch
      %77 = sbr.rel (0) target = $region45
    $region44: #{model_forward.1} parent=1 // pred_region
      %78 = dma.done [#allocation8], 3072
    $region45: #{model_forward.1} parent=1 // pred_fallthru
      _
    %v79 = vld [vmem:[%s0] sm:$0xff]
    %v80 = vld [vmem:[%s0 + $0x8] sm:$0xff]
    %v81 = vld [vmem:[%s1] sm:$0x1]
    %vm82 = vcmp.ne.s32.totalorder %v79, 1
    %vm83 = vcmp.ne.s32.totalorder %v80, 1
    %v84 = vsel %vm82, 1, 0
    %v85 = vsel %vm83, 1, 0
    %v86 = vcvt.s32.f32 %v84
    %v87 = vcvt.s32.f32 %v85
    %v88 = vlaneseq
    %v89 = vshrl.u32 %v88, 7
    %v90 = vadd.s32 %v89, 8
    %v91 = vlaneseq
    %v92 = vand.u32 %v91, 127
    %vm93 = vcmp.ge.s32.totalorder %v89, 0
    %vm94 = vcmp.ge.s32.totalorder %v90, 0
    %vm95 = vcmp.lt.s32.totalorder %v89, 8
    %vm96 = vcmp.lt.s32.totalorder %v90, 8
    %vm97 = vmand %vm93, %vm95
    %vm98 = vmand %vm94, %vm96
    %vm99 = vcmp.ge.s32.totalorder %v92, 0
    %vm100 = vcmp.lt.s32.totalorder %v92, 8
    %vm101 = vmand %vm99, %vm100
    %vm102 = vmand %vm97, %vm101
    %vm103 = vmand %vm98, %vm101
    %vm104 = vcmp.ge.s32.totalorder %v89, 8
    %vm105 = vcmp.ge.s32.totalorder %v90, 8
    %vm106 = vcmp.lt.s32.totalorder %v89, 16
    %vm107 = vcmp.lt.s32.totalorder %v90, 16
    %vm108 = vmand %vm104, %vm106
    %vm109 = vmand %vm105, %vm107
    %vm110 = vcmp.ge.s32.totalorder %v92, 8
    %vm111 = vcmp.lt.s32.totalorder %v92, 16
    %vm112 = vmand %vm110, %vm111
    %vm113 = vmand %vm108, %vm112
    %vm114 = vmand %vm109, %vm112
    %vm115 = vmor %vm102, %vm113
    %vm116 = vmor %vm103, %vm114
    %v117 = vsel %vm115, 1, 0
    %v118 = vsel %vm116, 1, 0
    %v119 = vcvt.s32.f32 %v117
    %v120 = vcvt.s32.f32 %v118
    %v122 = vlaneseq
    %v123 = vshrl.u32 %v122, 7
    %v124 = vsub.s32 0, %v123
    %v125 = vrot.slane %v81, %v124
    %v127 = vmul.f32 %v119, %v125
    %v128 = vmul.f32 %v120, %v125
    %v129 = vsub.f32 %v127, 1.0
    %v130 = vsub.f32 %v128, 1.0
    %v131 = vmul.f32 %v129, 1e+09
    %v132 = vmul.f32 %v130, 1e+09
    %vm133 = vcmp.le.s32.totalorder %v92, %v89
    %vm134 = vcmp.le.s32.totalorder %v92, %v90
    %v135 = vsel %vm133, 1, 0
    %v136 = vsel %vm134, 1, 0
    %v137 = vcvt.s32.f32 %v135
    %v138 = vcvt.s32.f32 %v136
    %v139 = vmul.f32 %v119, %v137
    %v140 = vmul.f32 %v120, %v138
    %vm141 = vcmask 130048
    %v143 = vsel %vm141, %v139, 0
    %v146 = vsel %vm141, %v140, 0
    %148 = vmatprep.subr.mxu0 0.0
    %149 = vmatpush1.msra.mxu0 0.0
    %150 = vmatprep.subr.mxu0 0.0
    %151 = vmatpush1.msra.mxu0 0.0
    %152 = vmatprep.subr.mxu0 0.0
    %153 = vmatpush1.msra.mxu0 0.0
    %154 = vmatprep.subr.mxu0 0.0
    %155 = vmatpush1.msra.mxu0 0.0
    %156 = vmatprep.subr.mxu0 0.0
    %157 = vmatpush1.msra.mxu0 0.0
    %158 = vmatprep.subr.mxu0 0.0
    %159 = vmatpush1.msra.mxu0 0.0
    %160 = vmatprep.subr.mxu0 0.0
    %161 = vmatpush1.msra.mxu0 0.0
    %162 = vmatprep.subr.mxu0 0.0
    %163 = vmatpush1.msra.mxu0 0.0
    %164 = vmatprep.subr.mxu0 0.0
    %165 = vmatpush1.msra.mxu0 0.0
    %166 = vmatprep.subr.mxu0 0.0
    %167 = vmatpush1.msra.mxu0 0.0
    %168 = vmatprep.subr.mxu0 0.0
    %169 = vmatpush1.msra.mxu0 0.0
    %170 = vmatprep.subr.mxu0 0.0
    %171 = vmatpush1.msra.mxu0 0.0
    %172 = vmatprep.subr.mxu0 0.0
    %173 = vmatpush1.msra.mxu0 0.0
    %174 = vmatprep.subr.mxu0 0.0
    %175 = vmatpush1.msra.mxu0 0.0
    %176 = vmatprep.subr.mxu0 0.0
    %177 = vmatpush1.msra.mxu0 %v87
    %178 = vmatprep.subr.mxu0 0.0
    %179 = vmatpush1.msra.mxu0 %v86
    %180 = vmatprep.subr.mxu0 0.0
    %181 = vmatpush2.msra.mxu0 0.0
    %182 = vmatprep.subr.mxu0 0.0
    %183 = vmatpush2.msra.mxu0 0.0
    %184 = vmatprep.subr.mxu0 0.0
    %185 = vmatpush2.msra.mxu0 0.0
    %186 = vmatprep.subr.mxu0 0.0
    %187 = vmatpush2.msra.mxu0 0.0
    %188 = vmatprep.subr.mxu0 0.0
    %189 = vmatpush2.msra.mxu0 0.0
    %190 = vmatprep.subr.mxu0 0.0
    %191 = vmatpush2.msra.mxu0 0.0
    %192 = vmatprep.subr.mxu0 0.0
    %193 = vmatpush2.msra.mxu0 0.0
    %194 = vmatprep.subr.mxu0 0.0
    %195 = vmatpush2.msra.mxu0 0.0
    %196 = vmatprep.subr.mxu0 0.0
    %197 = vmatpush2.msra.mxu0 0.0
    %198 = vmatprep.subr.mxu0 0.0
    %199 = vmatpush2.msra.mxu0 0.0
    %200 = vmatprep.subr.mxu0 0.0
    %201 = vmatpush2.msra.mxu0 0.0
    %202 = vmatprep.subr.mxu0 0.0
    %203 = vmatpush2.msra.mxu0 0.0
    %204 = vmatprep.subr.mxu0 0.0
    %205 = vmatpush2.msra.mxu0 0.0
    %206 = vmatprep.subr.mxu0 0.0
    %207 = vmatpush2.msra.mxu0 0.0
    %208 = vmatprep.subr.mxu0 0.0
    %209 = vmatpush2.msra.mxu0 0.0
    %210 = vmatprep.subr.mxu0 0.0
    %211 = vmatpush2.msra.mxu0 0.0
    %212 = vmatprep.mubr.f32.mxu0 0.0
    %213 = vmatmul.mubr.f32.gmra.mxu0 %v143
    %v214 = vpop.f32.mrf.mxu0
    %v215 = vadd.f32 0.0, %v214
    %v216 = vpop.f32.mrf.mxu0
    %217 = vmatprep.mubr.f32.mxu0 0.0
    %218 = vmatmul.mubr.f32.gmra.mxu0 %v146
    %v219 = vpop.f32.mrf.mxu0
    %v220 = vadd.f32 0.0, %v219
    %v221 = vpop.f32.mrf.mxu0
    %222 = vdwg.mxu0
    %v223 = vmul.f32 %v215, %v86
    %v224 = vmul.f32 %v220, %v87
    %v225 = vadd.f32 %v223, 1.0
    %v226 = vadd.f32 %v224, 1.0
    %v227 = vcvt.f32.s32.to.zero.pseudo %v225
    %v228 = vcvt.f32.s32.to.zero.pseudo %v226
    %v229 = vadd.s32 %v92, 128
    %v230 = vadd.s32 %v79, 8
    %v231 = vadd.s32 %v80, 8
    %232 = vset.pattern.permute.xlu0 0
    %233 = vperm.xlu0 %232, %v230
    %v234 = vpop.permute.xlu0 %233
    %235 = vset.pattern.permute.xlu0 0
    %236 = vperm.xlu0 %235, %v231
    %v237 = vpop.permute.xlu0 %236
    %vm238 = vcmp.eq.s32.totalorder %v92, %v234
    %vm239 = vcmp.eq.s32.totalorder %v229, %v234
    %vm240 = vcmp.eq.s32.totalorder %v92, %v237
    %vm241 = vcmp.eq.s32.totalorder %v229, %v237
    %v242 = vadd.s32 %v227, 112
    %v243 = vadd.s32 %v228, 112
    %244 = vset.pattern.permute.xlu0 0
    %245 = vperm.xlu0 %244, %v242
    %v246 = vpop.permute.xlu0 %245
    %247 = vset.pattern.permute.xlu0 0
    %248 = vperm.xlu0 %247, %v243
    %v249 = vpop.permute.xlu0 %248
    %vm250 = vcmp.eq.s32.totalorder %v92, %v246
    %vm251 = vcmp.eq.s32.totalorder %v229, %v246
    %vm252 = vcmp.eq.s32.totalorder %v92, %v249
    %vm253 = vcmp.eq.s32.totalorder %v229, %v249
    %vm254 = vmor %vm238, %vm250
    %vm255 = vmor %vm239, %vm251
    %vm256 = vmor %vm240, %vm252
    %vm257 = vmor %vm241, %vm253
    %vm258 = vcmp.eq.s32.totalorder %v92, 2
    %vm259 = vcmp.eq.s32.totalorder %v229, 2
    %vm260 = vmor %vm254, %vm258
    %vm261 = vmor %vm255, %vm259
    %vm262 = vmor %vm256, %vm258
    %vm263 = vmor %vm257, %vm259
    %v264 = vsel %vm260, 1, 0
    %v265 = vsel %vm261, 1, 0
    %v266 = vsel %vm262, 1, 0
    %v267 = vsel %vm263, 1, 0
    %v268 = vcvt.s32.f32 %v264
    %v269 = vcvt.s32.f32 %v265
    %v270 = vcvt.s32.f32 %v266
    %v271 = vcvt.s32.f32 %v267
    %v272 = vld [vmem:[#allocation2] sm:$0xff]
    %v273 = vld [vmem:[#allocation2 + $0x8] sm:$0xff]
    %v274 = vld [vmem:[#allocation2 + $0x10] sm:$0xff]
    %v275 = vld [vmem:[#allocation2 + $0x18] sm:$0xff]
    %v276 = vld [vmem:[#allocation2 + $0x20] sm:$0xff]
    %v277 = vld [vmem:[#allocation2 + $0x28] sm:$0xff]
    %v278 = vld [vmem:[#allocation2 + $0x30] sm:$0xff]
    %v279 = vld [vmem:[#allocation2 + $0x38] sm:$0xff]
    %v280 = vld [vmem:[#allocation2 + $0x40] sm:$0xff]
    %v281 = vld [vmem:[#allocation2 + $0x48] sm:$0xff]
    %v282 = vld [vmem:[#allocation2 + $0x50] sm:$0xff]
    %v283 = vld [vmem:[#allocation2 + $0x58] sm:$0xff]
    %v284 = vld [vmem:[#allocation2 + $0x60] sm:$0xff]
    %v285 = vld [vmem:[#allocation2 + $0x68] sm:$0xff]
    %v286 = vld [vmem:[#allocation2 + $0x70] sm:$0xff]
    %v287 = vld [vmem:[#allocation2 + $0x78] sm:$0xff]
    %v288 = vld [vmem:[#allocation2 + $0x80] sm:$0xff]
    %v289 = vld [vmem:[#allocation2 + $0x88] sm:$0xff]
    %v290 = vld [vmem:[#allocation2 + $0x90] sm:$0xff]
    %vm291 = vcmask 195584
    %v293 = vsel %vm291, %v269, 0
    %v296 = vsel %vm291, %v271, 0
    %298 = vmatprep.subr.mxu0 0.0
    %299 = vmatpush1.msra.mxu0 %v287
    %300 = vmatprep.subr.mxu0 0.0
    %301 = vmatpush1.msra.mxu0 %v286
    %302 = vmatprep.subr.mxu0 0.0
    %303 = vmatpush1.msra.mxu0 %v285
    %304 = vmatprep.subr.mxu0 0.0
    %305 = vmatpush1.msra.mxu0 %v284
    %306 = vmatprep.subr.mxu0 0.0
    %307 = vmatpush1.msra.mxu0 %v283
    %308 = vmatprep.subr.mxu0 0.0
    %309 = vmatpush1.msra.mxu0 %v282
    %310 = vmatprep.subr.mxu0 0.0
    %311 = vmatpush1.msra.mxu0 %v281
    %312 = vmatprep.subr.mxu0 0.0
    %313 = vmatpush1.msra.mxu0 %v280
    %314 = vmatprep.subr.mxu0 0.0
    %315 = vmatpush1.msra.mxu0 %v279
    %316 = vmatprep.subr.mxu0 0.0
    %317 = vmatpush1.msra.mxu0 %v278
    %318 = vmatprep.subr.mxu0 0.0
    %319 = vmatpush1.msra.mxu0 %v277
    %320 = vmatprep.subr.mxu0 0.0
    %321 = vmatpush1.msra.mxu0 %v276
    %322 = vmatprep.subr.mxu0 0.0
    %323 = vmatpush1.msra.mxu0 %v275
    %324 = vmatprep.subr.mxu0 0.0
    %325 = vmatpush1.msra.mxu0 %v274
    %326 = vmatprep.subr.mxu0 0.0
    %327 = vmatpush1.msra.mxu0 %v273
    %328 = vmatprep.subr.mxu0 0.0
    %329 = vmatpush1.msra.mxu0 %v272
    %330 = vmatprep.subr.mxu0 0.0
    %331 = vmatpush2.msra.mxu0 0.0
    %332 = vmatprep.subr.mxu0 0.0
    %333 = vmatpush2.msra.mxu0 0.0
    %334 = vmatprep.subr.mxu0 0.0
    %335 = vmatpush2.msra.mxu0 0.0
    %336 = vmatprep.subr.mxu0 0.0
    %337 = vmatpush2.msra.mxu0 0.0
    %338 = vmatprep.subr.mxu0 0.0
    %339 = vmatpush2.msra.mxu0 0.0
    %340 = vmatprep.subr.mxu0 0.0
    %341 = vmatpush2.msra.mxu0 0.0
    %342 = vmatprep.subr.mxu0 0.0
    %343 = vmatpush2.msra.mxu0 0.0
    %344 = vmatprep.subr.mxu0 0.0
    %345 = vmatpush2.msra.mxu0 0.0
    %346 = vmatprep.subr.mxu0 0.0
    %347 = vmatpush2.msra.mxu0 0.0
    %348 = vmatprep.subr.mxu0 0.0
    %349 = vmatpush2.msra.mxu0 0.0
    %350 = vmatprep.subr.mxu0 0.0
    %351 = vmatpush2.msra.mxu0 0.0
    %352 = vmatprep.subr.mxu0 0.0
    %353 = vmatpush2.msra.mxu0 0.0
    %354 = vmatprep.subr.mxu0 0.0
    %355 = vmatpush2.msra.mxu0 0.0
    %356 = vmatprep.subr.mxu0 0.0
    %357 = vmatpush2.msra.mxu0 %v290
    %358 = vmatprep.subr.mxu0 0.0
    %359 = vmatpush2.msra.mxu0 %v289
    %360 = vmatprep.subr.mxu0 0.0
    %361 = vmatpush2.msra.mxu0 %v288
    %362 = vmatprep.mubr.f32.mxu0 %v293
    %363 = vmatmul.mubr.f32.gmra.mxu0 %v268
    %v364 = vpop.f32.mrf.mxu0
    %v365 = vadd.f32 0.0, %v364
    %v366 = vpop.f32.mrf.mxu0
    %367 = vmatprep.mubr.f32.mxu0 %v296
    %368 = vmatmul.mubr.f32.gmra.mxu0 %v270
    %v369 = vpop.f32.mrf.mxu0
    %v370 = vadd.f32 0.0, %v369
    %v371 = vpop.f32.mrf.mxu0
    %372 = vdwg.mxu0
    %vm373 = vcmask 261120
    %v374 = vsel %vm373, %v365, 0.0
    %375 = vadd.xlane.f32.xlu0 %v374
    %v376 = vpop.xlane.xlu0 %375
    %v377 = vsel %vm373, %v370, 0.0
    %378 = vadd.xlane.f32.xlu0 %v377
    %v379 = vpop.xlane.xlu0 %378
    %v380 = vrcp.pop 32.0
    %v381 = vmul.f32 %v376, %v380
    %v382 = vmul.f32 %v379, %v380
    %v383 = vsub.f32 %v365, %v381
    %v384 = vsub.f32 %v370, %v382
    %v385 = vmul.f32 %v383, %v383
    %v386 = vmul.f32 %v384, %v384
    %v387 = vsel %vm373, %v385, 0.0
    %388 = vadd.xlane.f32.xlu0 %v387
    %v389 = vpop.xlane.xlu0 %388
    %v390 = vsel %vm373, %v386, 0.0
    %391 = vadd.xlane.f32.xlu0 %v390
    %v392 = vpop.xlane.xlu0 %391
    %v393 = vmul.f32 %v389, %v380
    %v394 = vmul.f32 %v392, %v380
    %v395 = vadd.f32 %v393, 1e-05
    %v396 = vadd.f32 %v394, 1e-05
    %v397 = vrsqrt.pop %v395
    %v398 = vrsqrt.pop %v396
    %v399 = vmul.f32 %v383, %v397
    %v400 = vmul.f32 %v384, %v398
    %v401 = vlaneseq
    %v402 = vshrl.u32 %v401, 7
    %v403 = vsub.s32 0, %v402
    %v404 = vrot.slane %v272, %v403
    %v405 = vmul.f32 %v399, %v404
    %v406 = vmul.f32 %v400, %v404
    %v407 = vlaneseq
    %v408 = vshrl.u32 %v407, 7
    %v409 = vsub.s32 1, %v408
    %v410 = vrot.slane %v272, %v409
    %v411 = vadd.f32 %v405, %v410
    %v412 = vadd.f32 %v406, %v410
    %v413 = vld [vmem:[#allocation4] sm:$0xff]
    %v414 = vld [vmem:[#allocation6] sm:$0xff]
    %v415 = vld [vmem:[#allocation6 + $0x8] sm:$0xff]
    %v416 = vld [vmem:[#allocation6 + $0x10] sm:$0xff]
    %v417 = vld [vmem:[#allocation6 + $0x18] sm:$0xff]
    %v418 = vld [vmem:[#allocation6 + $0x20] sm:$0xff]
    %v419 = vld [vmem:[#allocation6 + $0x28] sm:$0xff]
    %v420 = vld [vmem:[#allocation6 + $0x30] sm:$0xff]
    %v421 = vld [vmem:[#allocation6 + $0x38] sm:$0xff]
    %v422 = vld [vmem:[#allocation7] sm:$0xff]
    %v423 = vld [vmem:[#allocation7 + $0x8] sm:$0xff]
    %v424 = vld [vmem:[#allocation7 + $0x10] sm:$0xff]
    %v425 = vld [vmem:[#allocation7 + $0x18] sm:$0xff]
    %v426 = vld [vmem:[#allocation7 + $0x20] sm:$0xff]
    %v427 = vld [vmem:[#allocation7 + $0x28] sm:$0xff]
    %v428 = vld [vmem:[#allocation7 + $0x30] sm:$0xff]
    %v429 = vld [vmem:[#allocation7 + $0x38] sm:$0xff]
    %v430 = vld [vmem:[#allocation7 + $0x40] sm:$0xff]
    %v431 = vld [vmem:[#allocation7 + $0x48] sm:$0xff]
    %v432 = vld [vmem:[#allocation7 + $0x50] sm:$0xff]
    %v433 = vld [vmem:[#allocation7 + $0x58] sm:$0xff]
    %v434 = vlaneseq
    %v435 = vshrl.u32 %v434, 7
    %v436 = vsub.s32 0, %v435
    %v437 = vrot.slane %v413, %v436
    %v439 = vsel %vm373, %v411, 0
    %v442 = vsel %vm373, %v412, 0
    %444 = vmatprep.subr.mxu0 0.0
    %445 = vmatpush1.msra.mxu0 0.0
    %446 = vmatprep.subr.mxu0 0.0
    %447 = vmatpush1.msra.mxu0 0.0
    %448 = vmatprep.subr.mxu0 0.0
    %449 = vmatpush1.msra.mxu0 0.0
    %450 = vmatprep.subr.mxu0 0.0
    %451 = vmatpush1.msra.mxu0 0.0
    %452 = vmatprep.subr.mxu0 0.0
    %453 = vmatpush1.msra.mxu0 0.0
    %454 = vmatprep.subr.mxu0 0.0
    %455 = vmatpush1.msra.mxu0 0.0
    %456 = vmatprep.subr.mxu0 0.0
    %457 = vmatpush1.msra.mxu0 0.0
    %458 = vmatprep.subr.mxu0 0.0
    %459 = vmatpush1.msra.mxu0 0.0
    %460 = vmatprep.subr.mxu0 0.0
    %461 = vmatpush1.msra.mxu0 0.0
    %462 = vmatprep.subr.mxu0 0.0
    %463 = vmatpush1.msra.mxu0 0.0
    %464 = vmatprep.subr.mxu0 0.0
    %465 = vmatpush1.msra.mxu0 0.0
    %466 = vmatprep.subr.mxu0 0.0
    %467 = vmatpush1.msra.mxu0 0.0
    %468 = vmatprep.subr.mxu0 0.0
    %469 = vmatpush1.msra.mxu0 %v420
    %470 = vmatprep.subr.mxu0 0.0
    %471 = vmatpush1.msra.mxu0 %v418
    %472 = vmatprep.subr.mxu0 0.0
    %473 = vmatpush1.msra.mxu0 %v416
    %474 = vmatprep.subr.mxu0 0.0
    %475 = vmatpush1.msra.mxu0 %v414
    %476 = vmatprep.subr.mxu0 0.0
    %477 = vmatpush2.msra.mxu0 0.0
    %478 = vmatprep.subr.mxu0 0.0
    %479 = vmatpush2.msra.mxu0 0.0
    %480 = vmatprep.subr.mxu0 0.0
    %481 = vmatpush2.msra.mxu0 0.0
    %482 = vmatprep.subr.mxu0 0.0
    %483 = vmatpush2.msra.mxu0 0.0
    %484 = vmatprep.subr.mxu0 0.0
    %485 = vmatpush2.msra.mxu0 0.0
    %486 = vmatprep.subr.mxu0 0.0
    %487 = vmatpush2.msra.mxu0 0.0
    %488 = vmatprep.subr.mxu0 0.0
    %489 = vmatpush2.msra.mxu0 0.0
    %490 = vmatprep.subr.mxu0 0.0
    %491 = vmatpush2.msra.mxu0 0.0
    %492 = vmatprep.subr.mxu0 0.0
    %493 = vmatpush2.msra.mxu0 0.0
    %494 = vmatprep.subr.mxu0 0.0
    %495 = vmatpush2.msra.mxu0 0.0
    %496 = vmatprep.subr.mxu0 0.0
    %497 = vmatpush2.msra.mxu0 0.0
    %498 = vmatprep.subr.mxu0 0.0
    %499 = vmatpush2.msra.mxu0 0.0
    %500 = vmatprep.subr.mxu0 0.0
    %501 = vmatpush2.msra.mxu0 0.0
    %502 = vmatprep.subr.mxu0 0.0
    %503 = vmatpush2.msra.mxu0 0.0
    %504 = vmatprep.subr.mxu0 0.0
    %505 = vmatpush2.msra.mxu0 0.0
    %506 = vmatprep.subr.mxu0 0.0
    %507 = vmatpush2.msra.mxu0 0.0
    %508 = vmatprep.mubr.f32.mxu0 0.0
    %509 = vmatmul.mubr.f32.gmra.mxu0 %v439
    %v510 = vpop.f32.mrf.mxu0
    %v511 = vadd.f32 %v437, %v510
    %v512 = vpop.f32.mrf.mxu0
    %513 = vmatprep.mubr.f32.mxu0 0.0
    %514 = vmatmul.mubr.f32.gmra.mxu0 %v442
    %v515 = vpop.f32.mrf.mxu0
    %v516 = vadd.f32 %v437, %v515
    %v517 = vpop.f32.mrf.mxu0
    %518 = vdwg.mxu0
    %523 = vrot.lane.b32.xlu0 %v414, 112
    %v524 = vpop.permute.xlu0 %523
    %525 = vrot.lane.b32.xlu0 %v416, 112
    %v526 = vpop.permute.xlu0 %525
    %527 = vrot.lane.b32.xlu0 %v418, 112
    %v528 = vpop.permute.xlu0 %527
    %529 = vrot.lane.b32.xlu0 %v420, 112
    %v530 = vpop.permute.xlu0 %529
    %536 = vrot.lane.b32.xlu0 %v437, 112
    %v537 = vpop.permute.xlu0 %536
    %539 = vmatprep.subr.mxu0 0.0
    %540 = vmatpush1.msra.mxu0 0.0
    %541 = vmatprep.subr.mxu0 0.0
    %542 = vmatpush1.msra.mxu0 0.0
    %543 = vmatprep.subr.mxu0 0.0
    %544 = vmatpush1.msra.mxu0 0.0
    %545 = vmatprep.subr.mxu0 0.0
    %546 = vmatpush1.msra.mxu0 0.0
    %547 = vmatprep.subr.mxu0 0.0
    %548 = vmatpush1.msra.mxu0 0.0
    %549 = vmatprep.subr.mxu0 0.0
    %550 = vmatpush1.msra.mxu0 0.0
    %551 = vmatprep.subr.mxu0 0.0
    %552 = vmatpush1.msra.mxu0 0.0
    %553 = vmatprep.subr.mxu0 0.0
    %554 = vmatpush1.msra.mxu0 0.0
    %555 = vmatprep.subr.mxu0 0.0
    %556 = vmatpush1.msra.mxu0 0.0
    %557 = vmatprep.subr.mxu0 0.0
    %558 = vmatpush1.msra.mxu0 0.0
    %559 = vmatprep.subr.mxu0 0.0
    %560 = vmatpush1.msra.mxu0 0.0
    %561 = vmatprep.subr.mxu0 0.0
    %562 = vmatpush1.msra.mxu0 0.0
    %563 = vmatprep.subr.mxu0 0.0
    %564 = vmatpush1.msra.mxu0 %v530
    %565 = vmatprep.subr.mxu0 0.0
    %566 = vmatpush1.msra.mxu0 %v528
    %567 = vmatprep.subr.mxu0 0.0
    %568 = vmatpush1.msra.mxu0 %v526
    %569 = vmatprep.subr.mxu0 0.0
    %570 = vmatpush1.msra.mxu0 %v524
    %571 = vmatprep.subr.mxu0 0.0
    %572 = vmatpush2.msra.mxu0 0.0
    %573 = vmatprep.subr.mxu0 0.0
    %574 = vmatpush2.msra.mxu0 0.0
    %575 = vmatprep.subr.mxu0 0.0
    %576 = vmatpush2.msra.mxu0 0.0
    %577 = vmatprep.subr.mxu0 0.0
    %578 = vmatpush2.msra.mxu0 0.0
    %579 = vmatprep.subr.mxu0 0.0
    %580 = vmatpush2.msra.mxu0 0.0
    %581 = vmatprep.subr.mxu0 0.0
    %582 = vmatpush2.msra.mxu0 0.0
    %583 = vmatprep.subr.mxu0 0.0
    %584 = vmatpush2.msra.mxu0 0.0
    %585 = vmatprep.subr.mxu0 0.0
    %586 = vmatpush2.msra.mxu0 0.0
    %587 = vmatprep.subr.mxu0 0.0
    %588 = vmatpush2.msra.mxu0 0.0
    %589 = vmatprep.subr.mxu0 0.0
    %590 = vmatpush2.msra.mxu0 0.0
    %591 = vmatprep.subr.mxu0 0.0
    %592 = vmatpush2.msra.mxu0 0.0
    %593 = vmatprep.subr.mxu0 0.0
    %594 = vmatpush2.msra.mxu0 0.0
    %595 = vmatprep.subr.mxu0 0.0
    %596 = vmatpush2.msra.mxu0 0.0
    %597 = vmatprep.subr.mxu0 0.0
    %598 = vmatpush2.msra.mxu0 0.0
    %599 = vmatprep.subr.mxu0 0.0
    %600 = vmatpush2.msra.mxu0 0.0
    %601 = vmatprep.subr.mxu0 0.0
    %602 = vmatpush2.msra.mxu0 0.0
    %603 = vmatprep.mubr.f32.mxu0 0.0
    %604 = vmatmul.mubr.f32.gmra.mxu0 %v439
    %v605 = vpop.f32.mrf.mxu0
    %v606 = vadd.f32 %v537, %v605
    %v607 = vpop.f32.mrf.mxu0
    %608 = vmatprep.mubr.f32.mxu0 0.0
    %609 = vmatmul.mubr.f32.gmra.mxu0 %v442
    %v610 = vpop.f32.mrf.mxu0
    %v611 = vadd.f32 %v537, %v610
    %v612 = vpop.f32.mrf.mxu0
    %613 = vdwg.mxu0
    %614 = vrot.lane.b32.xlu0 %v414, 96
    %v615 = vpop.permute.xlu0 %614
    %616 = vrot.lane.b32.xlu0 %v416, 96
    %v617 = vpop.permute.xlu0 %616
    %618 = vrot.lane.b32.xlu0 %v418, 96
    %v619 = vpop.permute.xlu0 %618
    %620 = vrot.lane.b32.xlu0 %v420, 96
    %v621 = vpop.permute.xlu0 %620
    %626 = vrot.lane.b32.xlu0 %v437, 96
    %v627 = vpop.permute.xlu0 %626
    %629 = vmatprep.subr.mxu0 0.0
    %630 = vmatpush1.msra.mxu0 0.0
    %631 = vmatprep.subr.mxu0 0.0
    %632 = vmatpush1.msra.mxu0 0.0
    %633 = vmatprep.subr.mxu0 0.0
    %634 = vmatpush1.msra.mxu0 0.0
    %635 = vmatprep.subr.mxu0 0.0
    %636 = vmatpush1.msra.mxu0 0.0
    %637 = vmatprep.subr.mxu0 0.0
    %638 = vmatpush1.msra.mxu0 0.0
    %639 = vmatprep.subr.mxu0 0.0
    %640 = vmatpush1.msra.mxu0 0.0
    %641 = vmatprep.subr.mxu0 0.0
    %642 = vmatpush1.msra.mxu0 0.0
    %643 = vmatprep.subr.mxu0 0.0
    %644 = vmatpush1.msra.mxu0 0.0
    %645 = vmatprep.subr.mxu0 0.0
    %646 = vmatpush1.msra.mxu0 0.0
    %647 = vmatprep.subr.mxu0 0.0
    %648 = vmatpush1.msra.mxu0 0.0
    %649 = vmatprep.subr.mxu0 0.0
    %650 = vmatpush1.msra.mxu0 0.0
    %651 = vmatprep.subr.mxu0 0.0
    %652 = vmatpush1.msra.mxu0 0.0
    %653 = vmatprep.subr.mxu0 0.0
    %654 = vmatpush1.msra.mxu0 %v621
    %655 = vmatprep.subr.mxu0 0.0
    %656 = vmatpush1.msra.mxu0 %v619
    %657 = vmatprep.subr.mxu0 0.0
    %658 = vmatpush1.msra.mxu0 %v617
    %659 = vmatprep.subr.mxu0 0.0
    %660 = vmatpush1.msra.mxu0 %v615
    %661 = vmatprep.subr.mxu0 0.0
    %662 = vmatpush2.msra.mxu0 0.0
    %663 = vmatprep.subr.mxu0 0.0
    %664 = vmatpush2.msra.mxu0 0.0
    %665 = vmatprep.subr.mxu0 0.0
    %666 = vmatpush2.msra.mxu0 0.0
    %667 = vmatprep.subr.mxu0 0.0
    %668 = vmatpush2.msra.mxu0 0.0
    %669 = vmatprep.subr.mxu0 0.0
    %670 = vmatpush2.msra.mxu0 0.0
    %671 = vmatprep.subr.mxu0 0.0
    %672 = vmatpush2.msra.mxu0 0.0
    %673 = vmatprep.subr.mxu0 0.0
    %674 = vmatpush2.msra.mxu0 0.0
    %675 = vmatprep.subr.mxu0 0.0
    %676 = vmatpush2.msra.mxu0 0.0
    %677 = vmatprep.subr.mxu0 0.0
    %678 = vmatpush2.msra.mxu0 0.0
    %679 = vmatprep.subr.mxu0 0.0
    %680 = vmatpush2.msra.mxu0 0.0
    %681 = vmatprep.subr.mxu0 0.0
    %682 = vmatpush2.msra.mxu0 0.0
    %683 = vmatprep.subr.mxu0 0.0
    %684 = vmatpush2.msra.mxu0 0.0
    %685 = vmatprep.subr.mxu0 0.0
    %686 = vmatpush2.msra.mxu0 0.0
    %687 = vmatprep.subr.mxu0 0.0
    %688 = vmatpush2.msra.mxu0 0.0
    %689 = vmatprep.subr.mxu0 0.0
    %690 = vmatpush2.msra.mxu0 0.0
    %691 = vmatprep.subr.mxu0 0.0
    %692 = vmatpush2.msra.mxu0 0.0
    %693 = vmatprep.mubr.f32.mxu0 0.0
    %694 = vmatmul.mubr.f32.gmra.mxu0 %v439
    %v695 = vpop.f32.mrf.mxu0
    %v696 = vadd.f32 %v627, %v695
    %v697 = vpop.f32.mrf.mxu0
    %698 = vmatprep.mubr.f32.mxu0 0.0
    %699 = vmatmul.mubr.f32.gmra.mxu0 %v442
    %v700 = vpop.f32.mrf.mxu0
    %v701 = vadd.f32 %v627, %v700
    %v702 = vpop.f32.mrf.mxu0
    %703 = vdwg.mxu0
    %v705 = vsel %vm141, %v511, 0
    %v708 = vsel %vm141, %v516, 0
    %v711 = vsel %vm141, %v606, 0
    %v714 = vsel %vm141, %v611, 0
    %716 = vmatprep.subr.mxu0 0.0
    %717 = vmatpush1.xpose.msra.mxu0 0.0
    %718 = vmatprep.subr.mxu0 0.0
    %719 = vmatpush1.xpose.msra.mxu0 0.0
    %720 = vmatprep.subr.mxu0 0.0
    %721 = vmatpush1.xpose.msra.mxu0 0.0
    %722 = vmatprep.subr.mxu0 0.0
    %723 = vmatpush1.xpose.msra.mxu0 0.0
    %724 = vmatprep.subr.mxu0 0.0
    %725 = vmatpush1.xpose.msra.mxu0 0.0
    %726 = vmatprep.subr.mxu0 0.0
    %727 = vmatpush1.xpose.msra.mxu0 0.0
    %728 = vmatprep.subr.mxu0 0.0
    %729 = vmatpush1.xpose.msra.mxu0 0.0
    %730 = vmatprep.subr.mxu0 0.0
    %731 = vmatpush1.xpose.msra.mxu0 0.0
    %732 = vmatprep.subr.mxu0 0.0
    %733 = vmatpush1.xpose.msra.mxu0 0.0
    %734 = vmatprep.subr.mxu0 0.0
    %735 = vmatpush1.xpose.msra.mxu0 0.0
    %736 = vmatprep.subr.mxu0 0.0
    %737 = vmatpush1.xpose.msra.mxu0 0.0
    %738 = vmatprep.subr.mxu0 0.0
    %739 = vmatpush1.xpose.msra.mxu0 0.0
    %740 = vmatprep.subr.mxu0 0.0
    %741 = vmatpush1.xpose.msra.mxu0 0.0
    %742 = vmatprep.subr.mxu0 0.0
    %743 = vmatpush1.xpose.msra.mxu0 0.0
    %744 = vmatprep.subr.mxu0 0.0
    %745 = vmatpush1.xpose.msra.mxu0 %v714
    %746 = vmatprep.subr.mxu0 0.0
    %747 = vmatpush1.xpose.msra.mxu0 %v711
    %748 = vmatprep.subr.mxu0 0.0
    %749 = vmatpush2.xpose.msra.mxu0 0.0
    %750 = vmatprep.subr.mxu0 0.0
    %751 = vmatpush2.xpose.msra.mxu0 0.0
    %752 = vmatprep.subr.mxu0 0.0
    %753 = vmatpush2.xpose.msra.mxu0 0.0
    %754 = vmatprep.subr.mxu0 0.0
    %755 = vmatpush2.xpose.msra.mxu0 0.0
    %756 = vmatprep.subr.mxu0 0.0
    %757 = vmatpush2.xpose.msra.mxu0 0.0
    %758 = vmatprep.subr.mxu0 0.0
    %759 = vmatpush2.xpose.msra.mxu0 0.0
    %760 = vmatprep.subr.mxu0 0.0
    %761 = vmatpush2.xpose.msra.mxu0 0.0
    %762 = vmatprep.subr.mxu0 0.0
    %763 = vmatpush2.xpose.msra.mxu0 0.0
    %764 = vmatprep.subr.mxu0 0.0
    %765 = vmatpush2.xpose.msra.mxu0 0.0
    %766 = vmatprep.subr.mxu0 0.0
    %767 = vmatpush2.xpose.msra.mxu0 0.0
    %768 = vmatprep.subr.mxu0 0.0
    %769 = vmatpush2.xpose.msra.mxu0 0.0
    %770 = vmatprep.subr.mxu0 0.0
    %771 = vmatpush2.xpose.msra.mxu0 0.0
    %772 = vmatprep.subr.mxu0 0.0
    %773 = vmatpush2.xpose.msra.mxu0 0.0
    %774 = vmatprep.subr.mxu0 0.0
    %775 = vmatpush2.xpose.msra.mxu0 0.0
    %776 = vmatprep.subr.mxu0 0.0
    %777 = vmatpush2.xpose.msra.mxu0 0.0
    %778 = vmatprep.subr.mxu0 0.0
    %779 = vmatpush2.xpose.msra.mxu0 0.0
    %780 = vmatprep.mubr.f32.mxu0 0.0
    %781 = vmatmul.mubr.f32.gmra.mxu0 %v705
    %v782 = vpop.f32.mrf.mxu0
    %v783 = vadd.f32 0.0, %v782
    %v784 = vpop.f32.mrf.mxu0
    %785 = vmatprep.mubr.f32.mxu0 0.0
    %786 = vmatmul.mubr.f32.gmra.mxu0 %v708
    %v787 = vpop.f32.mrf.mxu0
    %v788 = vadd.f32 0.0, %v787
    %v789 = vpop.f32.mrf.mxu0
    %790 = vdwg.mxu0
    %v791 = vmul.f32 %v783, 0.25
    %v792 = vmul.f32 %v788, 0.25
    %v793 = vadd.f32 %v791, %v131
    %v794 = vadd.f32 %v792, %v132
    %v795 = vsel %vm141, %v793, -inf
    %796 = vmax.xlane.f32.xlu0 %v795
    %v797 = vpop.xlane.xlu0 %796
    %v798 = vsel %vm141, %v794, -inf
    %799 = vmax.xlane.f32.xlu0 %v798
    %v800 = vpop.xlane.xlu0 %799
    %v801 = vsub.f32 %v793, %v797
    %v802 = vsub.f32 %v794, %v800
    %v803 = vmul.f32 %v801, 1.442695
    %v804 = vpow.pop %v803
    %v805 = vmul.f32 %v802, 1.442695
    %v806 = vpow.pop %v805
    %v807 = vsel %vm141, %v804, 0.0
    %808 = vadd.xlane.f32.xlu0 %v807
    %v809 = vpop.xlane.xlu0 %808
    %v810 = vsel %vm141, %v806, 0.0
    %811 = vadd.xlane.f32.xlu0 %v810
    %v812 = vpop.xlane.xlu0 %811
    %v813 = vrcp.pop %v809
    %v814 = vrcp.pop %v812
    %v815 = vmul.f32 %v804, %v813
    %v816 = vmul.f32 %v806, %v814
    %v818 = vsel %vm141, %v815, 0
    %v821 = vsel %vm141, %v816, 0
    %823 = vmatprep.subr.mxu0 0.0
    %824 = vmatpush1.msra.mxu0 0.0
    %825 = vmatprep.subr.mxu0 0.0
    %826 = vmatpush1.msra.mxu0 0.0
    %827 = vmatprep.subr.mxu0 0.0
    %828 = vmatpush1.msra.mxu0 0.0
    %829 = vmatprep.subr.mxu0 0.0
    %830 = vmatpush1.msra.mxu0 0.0
    %831 = vmatprep.subr.mxu0 0.0
    %832 = vmatpush1.msra.mxu0 0.0
    %833 = vmatprep.subr.mxu0 0.0
    %834 = vmatpush1.msra.mxu0 0.0
    %835 = vmatprep.subr.mxu0 0.0
    %836 = vmatpush1.msra.mxu0 0.0
    %837 = vmatprep.subr.mxu0 0.0
    %838 = vmatpush1.msra.mxu0 0.0
    %839 = vmatprep.subr.mxu0 0.0
    %840 = vmatpush1.msra.mxu0 0.0
    %841 = vmatprep.subr.mxu0 0.0
    %842 = vmatpush1.msra.mxu0 0.0
    %843 = vmatprep.subr.mxu0 0.0
    %844 = vmatpush1.msra.mxu0 0.0
    %845 = vmatprep.subr.mxu0 0.0
    %846 = vmatpush1.msra.mxu0 0.0
    %847 = vmatprep.subr.mxu0 0.0
    %848 = vmatpush1.msra.mxu0 0.0
    %849 = vmatprep.subr.mxu0 0.0
    %850 = vmatpush1.msra.mxu0 0.0
    %851 = vmatprep.subr.mxu0 0.0
    %852 = vmatpush1.msra.mxu0 %v701
    %853 = vmatprep.subr.mxu0 0.0
    %854 = vmatpush1.msra.mxu0 %v696
    %855 = vmatprep.subr.mxu0 0.0
    %856 = vmatpush2.msra.mxu0 0.0
    %857 = vmatprep.subr.mxu0 0.0
    %858 = vmatpush2.msra.mxu0 0.0
    %859 = vmatprep.subr.mxu0 0.0
    %860 = vmatpush2.msra.mxu0 0.0
    %861 = vmatprep.subr.mxu0 0.0
    %862 = vmatpush2.msra.mxu0 0.0
    %863 = vmatprep.subr.mxu0 0.0
    %864 = vmatpush2.msra.mxu0 0.0
    %865 = vmatprep.subr.mxu0 0.0
    %866 = vmatpush2.msra.mxu0 0.0
    %867 = vmatprep.subr.mxu0 0.0
    %868 = vmatpush2.msra.mxu0 0.0
    %869 = vmatprep.subr.mxu0 0.0
    %870 = vmatpush2.msra.mxu0 0.0
    %871 = vmatprep.subr.mxu0 0.0
    %872 = vmatpush2.msra.mxu0 0.0
    %873 = vmatprep.subr.mxu0 0.0
    %874 = vmatpush2.msra.mxu0 0.0
    %875 = vmatprep.subr.mxu0 0.0
    %876 = vmatpush2.msra.mxu0 0.0
    %877 = vmatprep.subr.mxu0 0.0
    %878 = vmatpush2.msra.mxu0 0.0
    %879 = vmatprep.subr.mxu0 0.0
    %880 = vmatpush2.msra.mxu0 0.0
    %881 = vmatprep.subr.mxu0 0.0
    %882 = vmatpush2.msra.mxu0 0.0
    %883 = vmatprep.subr.mxu0 0.0
    %884 = vmatpush2.msra.mxu0 0.0
    %885 = vmatprep.subr.mxu0 0.0
    %886 = vmatpush2.msra.mxu0 0.0
    %887 = vmatprep.mubr.f32.mxu0 0.0
    %888 = vmatmul.mubr.f32.gmra.mxu0 %v818
    %v889 = vpop.f32.mrf.mxu0
    %v890 = vadd.f32 0.0, %v889
    %v891 = vpop.f32.mrf.mxu0
    %892 = vmatprep.mubr.f32.mxu0 0.0
    %893 = vmatmul.mubr.f32.gmra.mxu0 %v821
    %v894 = vpop.f32.mrf.mxu0
    %v895 = vadd.f32 0.0, %v894
    %v896 = vpop.f32.mrf.mxu0
    %897 = vdwg.mxu0
    %898 = vrot.lane.b32.xlu0 %v414, 80
    %v899 = vpop.permute.xlu0 %898
    %900 = vrot.lane.b32.xlu0 %v416, 80
    %v901 = vpop.permute.xlu0 %900
    %902 = vrot.lane.b32.xlu0 %v418, 80
    %v903 = vpop.permute.xlu0 %902
    %904 = vrot.lane.b32.xlu0 %v420, 80
    %v905 = vpop.permute.xlu0 %904
    %910 = vrot.lane.b32.xlu0 %v437, 80
    %v911 = vpop.permute.xlu0 %910
    %913 = vmatprep.subr.mxu0 0.0
    %914 = vmatpush1.msra.mxu0 0.0
    %915 = vmatprep.subr.mxu0 0.0
    %916 = vmatpush1.msra.mxu0 0.0
    %917 = vmatprep.subr.mxu0 0.0
    %918 = vmatpush1.msra.mxu0 0.0
    %919 = vmatprep.subr.mxu0 0.0
    %920 = vmatpush1.msra.mxu0 0.0
    %921 = vmatprep.subr.mxu0 0.0
    %922 = vmatpush1.msra.mxu0 0.0
    %923 = vmatprep.subr.mxu0 0.0
    %924 = vmatpush1.msra.mxu0 0.0
    %925 = vmatprep.subr.mxu0 0.0
    %926 = vmatpush1.msra.mxu0 0.0
    %927 = vmatprep.subr.mxu0 0.0
    %928 = vmatpush1.msra.mxu0 0.0
    %929 = vmatprep.subr.mxu0 0.0
    %930 = vmatpush1.msra.mxu0 0.0
    %931 = vmatprep.subr.mxu0 0.0
    %932 = vmatpush1.msra.mxu0 0.0
    %933 = vmatprep.subr.mxu0 0.0
    %934 = vmatpush1.msra.mxu0 0.0
    %935 = vmatprep.subr.mxu0 0.0
    %936 = vmatpush1.msra.mxu0 0.0
    %937 = vmatprep.subr.mxu0 0.0
    %938 = vmatpush1.msra.mxu0 %v905
    %939 = vmatprep.subr.mxu0 0.0
    %940 = vmatpush1.msra.mxu0 %v903
    %941 = vmatprep.subr.mxu0 0.0
    %942 = vmatpush1.msra.mxu0 %v901
    %943 = vmatprep.subr.mxu0 0.0
    %944 = vmatpush1.msra.mxu0 %v899
    %945 = vmatprep.subr.mxu0 0.0
    %946 = vmatpush2.msra.mxu0 0.0
    %947 = vmatprep.subr.mxu0 0.0
    %948 = vmatpush2.msra.mxu0 0.0
    %949 = vmatprep.subr.mxu0 0.0
    %950 = vmatpush2.msra.mxu0 0.0
    %951 = vmatprep.subr.mxu0 0.0
    %952 = vmatpush2.msra.mxu0 0.0
    %953 = vmatprep.subr.mxu0 0.0
    %954 = vmatpush2.msra.mxu0 0.0
    %955 = vmatprep.subr.mxu0 0.0
    %956 = vmatpush2.msra.mxu0 0.0
    %957 = vmatprep.subr.mxu0 0.0
    %958 = vmatpush2.msra.mxu0 0.0
    %959 = vmatprep.subr.mxu0 0.0
    %960 = vmatpush2.msra.mxu0 0.0
    %961 = vmatprep.subr.mxu0 0.0
    %962 = vmatpush2.msra.mxu0 0.0
    %963 = vmatprep.subr.mxu0 0.0
    %964 = vmatpush2.msra.mxu0 0.0
    %965 = vmatprep.subr.mxu0 0.0
    %966 = vmatpush2.msra.mxu0 0.0
    %967 = vmatprep.subr.mxu0 0.0
    %968 = vmatpush2.msra.mxu0 0.0
    %969 = vmatprep.subr.mxu0 0.0
    %970 = vmatpush2.msra.mxu0 0.0
    %971 = vmatprep.subr.mxu0 0.0
    %972 = vmatpush2.msra.mxu0 0.0
    %973 = vmatprep.subr.mxu0 0.0
    %974 = vmatpush2.msra.mxu0 0.0
    %975 = vmatprep.subr.mxu0 0.0
    %976 = vmatpush2.msra.mxu0 0.0
    %977 = vmatprep.mubr.f32.mxu0 0.0
    %978 = vmatmul.mubr.f32.gmra.mxu0 %v439
    %v979 = vpop.f32.mrf.mxu0
    %v980 = vadd.f32 %v911, %v979
    %v981 = vpop.f32.mrf.mxu0
    %982 = vmatprep.mubr.f32.mxu0 0.0
    %983 = vmatmul.mubr.f32.gmra.mxu0 %v442
    %v984 = vpop.f32.mrf.mxu0
    %v985 = vadd.f32 %v911, %v984
    %v986 = vpop.f32.mrf.mxu0
    %987 = vdwg.mxu0
    %988 = vrot.lane.b32.xlu0 %v414, 64
    %v989 = vpop.permute.xlu0 %988
    %990 = vrot.lane.b32.xlu0 %v416, 64
    %v991 = vpop.permute.xlu0 %990
    %992 = vrot.lane.b32.xlu0 %v418, 64
    %v993 = vpop.permute.xlu0 %992
    %994 = vrot.lane.b32.xlu0 %v420, 64
    %v995 = vpop.permute.xlu0 %994
    %1000 = vrot.lane.b32.xlu0 %v437, 64
    %v1001 = vpop.permute.xlu0 %1000
    %1003 = vmatprep.subr.mxu0 0.0
    %1004 = vmatpush1.msra.mxu0 0.0
    %1005 = vmatprep.subr.mxu0 0.0
    %1006 = vmatpush1.msra.mxu0 0.0
    %1007 = vmatprep.subr.mxu0 0.0
    %1008 = vmatpush1.msra.mxu0 0.0
    %1009 = vmatprep.subr.mxu0 0.0
    %1010 = vmatpush1.msra.mxu0 0.0
    %1011 = vmatprep.subr.mxu0 0.0
    %1012 = vmatpush1.msra.mxu0 0.0
    %1013 = vmatprep.subr.mxu0 0.0
    %1014 = vmatpush1.msra.mxu0 0.0
    %1015 = vmatprep.subr.mxu0 0.0
    %1016 = vmatpush1.msra.mxu0 0.0
    %1017 = vmatprep.subr.mxu0 0.0
    %1018 = vmatpush1.msra.mxu0 0.0
    %1019 = vmatprep.subr.mxu0 0.0
    %1020 = vmatpush1.msra.mxu0 0.0
    %1021 = vmatprep.subr.mxu0 0.0
    %1022 = vmatpush1.msra.mxu0 0.0
    %1023 = vmatprep.subr.mxu0 0.0
    %1024 = vmatpush1.msra.mxu0 0.0
    %1025 = vmatprep.subr.mxu0 0.0
    %1026 = vmatpush1.msra.mxu0 0.0
    %1027 = vmatprep.subr.mxu0 0.0
    %1028 = vmatpush1.msra.mxu0 %v995
    %1029 = vmatprep.subr.mxu0 0.0
    %1030 = vmatpush1.msra.mxu0 %v993
    %1031 = vmatprep.subr.mxu0 0.0
    %1032 = vmatpush1.msra.mxu0 %v991
    %1033 = vmatprep.subr.mxu0 0.0
    %1034 = vmatpush1.msra.mxu0 %v989
    %1035 = vmatprep.subr.mxu0 0.0
    %1036 = vmatpush2.msra.mxu0 0.0
    %1037 = vmatprep.subr.mxu0 0.0
    %1038 = vmatpush2.msra.mxu0 0.0
    %1039 = vmatprep.subr.mxu0 0.0
    %1040 = vmatpush2.msra.mxu0 0.0
    %1041 = vmatprep.subr.mxu0 0.0
    %1042 = vmatpush2.msra.mxu0 0.0
    %1043 = vmatprep.subr.mxu0 0.0
    %1044 = vmatpush2.msra.mxu0 0.0
    %1045 = vmatprep.subr.mxu0 0.0
    %1046 = vmatpush2.msra.mxu0 0.0
    %1047 = vmatprep.subr.mxu0 0.0
    %1048 = vmatpush2.msra.mxu0 0.0
    %1049 = vmatprep.subr.mxu0 0.0
    %1050 = vmatpush2.msra.mxu0 0.0
    %1051 = vmatprep.subr.mxu0 0.0
    %1052 = vmatpush2.msra.mxu0 0.0
    %1053 = vmatprep.subr.mxu0 0.0
    %1054 = vmatpush2.msra.mxu0 0.0
    %1055 = vmatprep.subr.mxu0 0.0
    %1056 = vmatpush2.msra.mxu0 0.0
    %1057 = vmatprep.subr.mxu0 0.0
    %1058 = vmatpush2.msra.mxu0 0.0
    %1059 = vmatprep.subr.mxu0 0.0
    %1060 = vmatpush2.msra.mxu0 0.0
    %1061 = vmatprep.subr.mxu0 0.0
    %1062 = vmatpush2.msra.mxu0 0.0
    %1063 = vmatprep.subr.mxu0 0.0
    %1064 = vmatpush2.msra.mxu0 0.0
    %1065 = vmatprep.subr.mxu0 0.0
    %1066 = vmatpush2.msra.mxu0 0.0
    %1067 = vmatprep.mubr.f32.mxu0 0.0
    %1068 = vmatmul.mubr.f32.gmra.mxu0 %v439
    %v1069 = vpop.f32.mrf.mxu0
    %v1070 = vadd.f32 %v1001, %v1069
    %v1071 = vpop.f32.mrf.mxu0
    %1072 = vmatprep.mubr.f32.mxu0 0.0
    %1073 = vmatmul.mubr.f32.gmra.mxu0 %v442
    %v1074 = vpop.f32.mrf.mxu0
    %v1075 = vadd.f32 %v1001, %v1074
    %v1076 = vpop.f32.mrf.mxu0
    %1077 = vdwg.mxu0
    %1078 = vrot.lane.b32.xlu0 %v414, 48
    %v1079 = vpop.permute.xlu0 %1078
    %1080 = vrot.lane.b32.xlu0 %v416, 48
    %v1081 = vpop.permute.xlu0 %1080
    %1082 = vrot.lane.b32.xlu0 %v418, 48
    %v1083 = vpop.permute.xlu0 %1082
    %1084 = vrot.lane.b32.xlu0 %v420, 48
    %v1085 = vpop.permute.xlu0 %1084
    %1090 = vrot.lane.b32.xlu0 %v437, 48
    %v1091 = vpop.permute.xlu0 %1090
    %1093 = vmatprep.subr.mxu0 0.0
    %1094 = vmatpush1.msra.mxu0 0.0
    %1095 = vmatprep.subr.mxu0 0.0
    %1096 = vmatpush1.msra.mxu0 0.0
    %1097 = vmatprep.subr.mxu0 0.0
    %1098 = vmatpush1.msra.mxu0 0.0
    %1099 = vmatprep.subr.mxu0 0.0
    %1100 = vmatpush1.msra.mxu0 0.0
    %1101 = vmatprep.subr.mxu0 0.0
    %1102 = vmatpush1.msra.mxu0 0.0
    %1103 = vmatprep.subr.mxu0 0.0
    %1104 = vmatpush1.msra.mxu0 0.0
    %1105 = vmatprep.subr.mxu0 0.0
    %1106 = vmatpush1.msra.mxu0 0.0
    %1107 = vmatprep.subr.mxu0 0.0
    %1108 = vmatpush1.msra.mxu0 0.0
    %1109 = vmatprep.subr.mxu0 0.0
    %1110 = vmatpush1.msra.mxu0 0.0
    %1111 = vmatprep.subr.mxu0 0.0
    %1112 = vmatpush1.msra.mxu0 0.0
    %1113 = vmatprep.subr.mxu0 0.0
    %1114 = vmatpush1.msra.mxu0 0.0
    %1115 = vmatprep.subr.mxu0 0.0
    %1116 = vmatpush1.msra.mxu0 0.0
    %1117 = vmatprep.subr.mxu0 0.0
    %1118 = vmatpush1.msra.mxu0 %v1085
    %1119 = vmatprep.subr.mxu0 0.0
    %1120 = vmatpush1.msra.mxu0 %v1083
    %1121 = vmatprep.subr.mxu0 0.0
    %1122 = vmatpush1.msra.mxu0 %v1081
    %1123 = vmatprep.subr.mxu0 0.0
    %1124 = vmatpush1.msra.mxu0 %v1079
    %1125 = vmatprep.subr.mxu0 0.0
    %1126 = vmatpush2.msra.mxu0 0.0
    %1127 = vmatprep.subr.mxu0 0.0
    %1128 = vmatpush2.msra.mxu0 0.0
    %1129 = vmatprep.subr.mxu0 0.0
    %1130 = vmatpush2.msra.mxu0 0.0
    %1131 = vmatprep.subr.mxu0 0.0
    %1132 = vmatpush2.msra.mxu0 0.0
    %1133 = vmatprep.subr.mxu0 0.0
    %1134 = vmatpush2.msra.mxu0 0.0
    %1135 = vmatprep.subr.mxu0 0.0
    %1136 = vmatpush2.msra.mxu0 0.0
    %1137 = vmatprep.subr.mxu0 0.0
    %1138 = vmatpush2.msra.mxu0 0.0
    %1139 = vmatprep.subr.mxu0 0.0
    %1140 = vmatpush2.msra.mxu0 0.0
    %1141 = vmatprep.subr.mxu0 0.0
    %1142 = vmatpush2.msra.mxu0 0.0
    %1143 = vmatprep.subr.mxu0 0.0
    %1144 = vmatpush2.msra.mxu0 0.0
    %1145 = vmatprep.subr.mxu0 0.0
    %1146 = vmatpush2.msra.mxu0 0.0
    %1147 = vmatprep.subr.mxu0 0.0
    %1148 = vmatpush2.msra.mxu0 0.0
    %1149 = vmatprep.subr.mxu0 0.0
    %1150 = vmatpush2.msra.mxu0 0.0
    %1151 = vmatprep.subr.mxu0 0.0
    %1152 = vmatpush2.msra.mxu0 0.0
    %1153 = vmatprep.subr.mxu0 0.0
    %1154 = vmatpush2.msra.mxu0 0.0
    %1155 = vmatprep.subr.mxu0 0.0
    %1156 = vmatpush2.msra.mxu0 0.0
    %1157 = vmatprep.mubr.f32.mxu0 0.0
    %1158 = vmatmul.mubr.f32.gmra.mxu0 %v439
    %v1159 = vpop.f32.mrf.mxu0
    %v1160 = vadd.f32 %v1091, %v1159
    %v1161 = vpop.f32.mrf.mxu0
    %1162 = vmatprep.mubr.f32.mxu0 0.0
    %1163 = vmatmul.mubr.f32.gmra.mxu0 %v442
    %v1164 = vpop.f32.mrf.mxu0
    %v1165 = vadd.f32 %v1091, %v1164
    %v1166 = vpop.f32.mrf.mxu0
    %1167 = vdwg.mxu0
    %v1169 = vsel %vm141, %v980, 0
    %v1172 = vsel %vm141, %v985, 0
    %v1175 = vsel %vm141, %v1070, 0
    %v1178 = vsel %vm141, %v1075, 0
    %1180 = vmatprep.subr.mxu0 0.0
    %1181 = vmatpush1.xpose.msra.mxu0 0.0
    %1182 = vmatprep.subr.mxu0 0.0
    %1183 = vmatpush1.xpose.msra.mxu0 0.0
    %1184 = vmatprep.subr.mxu0 0.0
    %1185 = vmatpush1.xpose.msra.mxu0 0.0
    %1186 = vmatprep.subr.mxu0 0.0
    %1187 = vmatpush1.xpose.msra.mxu0 0.0
    %1188 = vmatprep.subr.mxu0 0.0
    %1189 = vmatpush1.xpose.msra.mxu0 0.0
    %1190 = vmatprep.subr.mxu0 0.0
    %1191 = vmatpush1.xpose.msra.mxu0 0.0
    %1192 = vmatprep.subr.mxu0 0.0
    %1193 = vmatpush1.xpose.msra.mxu0 0.0
    %1194 = vmatprep.subr.mxu0 0.0
    %1195 = vmatpush1.xpose.msra.mxu0 0.0
    %1196 = vmatprep.subr.mxu0 0.0
    %1197 = vmatpush1.xpose.msra.mxu0 0.0
    %1198 = vmatprep.subr.mxu0 0.0
    %1199 = vmatpush1.xpose.msra.mxu0 0.0
    %1200 = vmatprep.subr.mxu0 0.0
    %1201 = vmatpush1.xpose.msra.mxu0 0.0
    %1202 = vmatprep.subr.mxu0 0.0
    %1203 = vmatpush1.xpose.msra.mxu0 0.0
    %1204 = vmatprep.subr.mxu0 0.0
    %1205 = vmatpush1.xpose.msra.mxu0 0.0
    %1206 = vmatprep.subr.mxu0 0.0
    %1207 = vmatpush1.xpose.msra.mxu0 0.0
    %1208 = vmatprep.subr.mxu0 0.0
    %1209 = vmatpush1.xpose.msra.mxu0 %v1178
    %1210 = vmatprep.subr.mxu0 0.0
    %1211 = vmatpush1.xpose.msra.mxu0 %v1175
    %1212 = vmatprep.subr.mxu0 0.0
    %1213 = vmatpush2.xpose.msra.mxu0 0.0
    %1214 = vmatprep.subr.mxu0 0.0
    %1215 = vmatpush2.xpose.msra.mxu0 0.0
    %1216 = vmatprep.subr.mxu0 0.0
    %1217 = vmatpush2.xpose.msra.mxu0 0.0
    %1218 = vmatprep.subr.mxu0 0.0
    %1219 = vmatpush2.xpose.msra.mxu0 0.0
    %1220 = vmatprep.subr.mxu0 0.0
    %1221 = vmatpush2.xpose.msra.mxu0 0.0
    %1222 = vmatprep.subr.mxu0 0.0
    %1223 = vmatpush2.xpose.msra.mxu0 0.0
    %1224 = vmatprep.subr.mxu0 0.0
    %1225 = vmatpush2.xpose.msra.mxu0 0.0
    %1226 = vmatprep.subr.mxu0 0.0
    %1227 = vmatpush2.xpose.msra.mxu0 0.0
    %1228 = vmatprep.subr.mxu0 0.0
    %1229 = vmatpush2.xpose.msra.mxu0 0.0
    %1230 = vmatprep.subr.mxu0 0.0
    %1231 = vmatpush2.xpose.msra.mxu0 0.0
    %1232 = vmatprep.subr.mxu0 0.0
    %1233 = vmatpush2.xpose.msra.mxu0 0.0
    %1234 = vmatprep.subr.mxu0 0.0
    %1235 = vmatpush2.xpose.msra.mxu0 0.0
    %1236 = vmatprep.subr.mxu0 0.0
    %1237 = vmatpush2.xpose.msra.mxu0 0.0
    %1238 = vmatprep.subr.mxu0 0.0
    %1239 = vmatpush2.xpose.msra.mxu0 0.0
    %1240 = vmatprep.subr.mxu0 0.0
    %1241 = vmatpush2.xpose.msra.mxu0 0.0
    %1242 = vmatprep.subr.mxu0 0.0
    %1243 = vmatpush2.xpose.msra.mxu0 0.0
    %1244 = vmatprep.mubr.f32.mxu0 0.0
    %1245 = vmatmul.mubr.f32.gmra.mxu0 %v1169
    %v1246 = vpop.f32.mrf.mxu0
    %v1247 = vadd.f32 0.0, %v1246
    %v1248 = vpop.f32.mrf.mxu0
    %1249 = vmatprep.mubr.f32.mxu0 0.0
    %1250 = vmatmul.mubr.f32.gmra.mxu0 %v1172
    %v1251 = vpop.f32.mrf.mxu0
    %v1252 = vadd.f32 0.0, %v1251
    %v1253 = vpop.f32.mrf.mxu0
    %1254 = vdwg.mxu0
    %v1255 = vmul.f32 %v1247, 0.25
    %v1256 = vmul.f32 %v1252, 0.25
    %v1257 = vadd.f32 %v1255, %v131
    %v1258 = vadd.f32 %v1256, %v132
    %v1259 = vsel %vm141, %v1257, -inf
    %1260 = vmax.xlane.f32.xlu0 %v1259
    %v1261 = vpop.xlane.xlu0 %1260
    %v1262 = vsel %vm141, %v1258, -inf
    %1263 = vmax.xlane.f32.xlu0 %v1262
    %v1264 = vpop.xlane.xlu0 %1263
    %v1265 = vsub.f32 %v1257, %v1261
    %v1266 = vsub.f32 %v1258, %v1264
    %v1267 = vmul.f32 %v1265, 1.442695
    %v1268 = vpow.pop %v1267
    %v1269 = vmul.f32 %v1266, 1.442695
    %v1270 = vpow.pop %v1269
    %v1271 = vsel %vm141, %v1268, 0.0
    %1272 = vadd.xlane.f32.xlu0 %v1271
    %v1273 = vpop.xlane.xlu0 %1272
    %v1274 = vsel %vm141, %v1270, 0.0
    %1275 = vadd.xlane.f32.xlu0 %v1274
    %v1276 = vpop.xlane.xlu0 %1275
    %v1277 = vrcp.pop %v1273
    %v1278 = vrcp.pop %v1276
    %v1279 = vmul.f32 %v1268, %v1277
    %v1280 = vmul.f32 %v1270, %v1278
    %v1282 = vsel %vm141, %v1279, 0
    %v1285 = vsel %vm141, %v1280, 0
    %1287 = vmatprep.subr.mxu0 0.0
    %1288 = vmatpush1.msra.mxu0 0.0
    %1289 = vmatprep.subr.mxu0 0.0
    %1290 = vmatpush1.msra.mxu0 0.0
    %1291 = vmatprep.subr.mxu0 0.0
    %1292 = vmatpush1.msra.mxu0 0.0
    %1293 = vmatprep.subr.mxu0 0.0
    %1294 = vmatpush1.msra.mxu0 0.0
    %1295 = vmatprep.subr.mxu0 0.0
    %1296 = vmatpush1.msra.mxu0 0.0
    %1297 = vmatprep.subr.mxu0 0.0
    %1298 = vmatpush1.msra.mxu0 0.0
    %1299 = vmatprep.subr.mxu0 0.0
    %1300 = vmatpush1.msra.mxu0 0.0
    %1301 = vmatprep.subr.mxu0 0.0
    %1302 = vmatpush1.msra.mxu0 0.0
    %1303 = vmatprep.subr.mxu0 0.0
    %1304 = vmatpush1.msra.mxu0 0.0
    %1305 = vmatprep.subr.mxu0 0.0
    %1306 = vmatpush1.msra.mxu0 0.0
    %1307 = vmatprep.subr.mxu0 0.0
    %1308 = vmatpush1.msra.mxu0 0.0
    %1309 = vmatprep.subr.mxu0 0.0
    %1310 = vmatpush1.msra.mxu0 0.0
    %1311 = vmatprep.subr.mxu0 0.0
    %1312 = vmatpush1.msra.mxu0 0.0
    %1313 = vmatprep.subr.mxu0 0.0
    %1314 = vmatpush1.msra.mxu0 0.0
    %1315 = vmatprep.subr.mxu0 0.0
    %1316 = vmatpush1.msra.mxu0 %v1165
    %1317 = vmatprep.subr.mxu0 0.0
    %1318 = vmatpush1.msra.mxu0 %v1160
    %1319 = vmatprep.subr.mxu0 0.0
    %1320 = vmatpush2.msra.mxu0 0.0
    %1321 = vmatprep.subr.mxu0 0.0
    %1322 = vmatpush2.msra.mxu0 0.0
    %1323 = vmatprep.subr.mxu0 0.0
    %1324 = vmatpush2.msra.mxu0 0.0
    %1325 = vmatprep.subr.mxu0 0.0
    %1326 = vmatpush2.msra.mxu0 0.0
    %1327 = vmatprep.subr.mxu0 0.0
    %1328 = vmatpush2.msra.mxu0 0.0
    %1329 = vmatprep.subr.mxu0 0.0
    %1330 = vmatpush2.msra.mxu0 0.0
    %1331 = vmatprep.subr.mxu0 0.0
    %1332 = vmatpush2.msra.mxu0 0.0
    %1333 = vmatprep.subr.mxu0 0.0
    %1334 = vmatpush2.msra.mxu0 0.0
    %1335 = vmatprep.subr.mxu0 0.0
    %1336 = vmatpush2.msra.mxu0 0.0
    %1337 = vmatprep.subr.mxu0 0.0
    %1338 = vmatpush2.msra.mxu0 0.0
    %1339 = vmatprep.subr.mxu0 0.0
    %1340 = vmatpush2.msra.mxu0 0.0
    %1341 = vmatprep.subr.mxu0 0.0
    %1342 = vmatpush2.msra.mxu0 0.0
    %1343 = vmatprep.subr.mxu0 0.0
    %1344 = vmatpush2.msra.mxu0 0.0
    %1345 = vmatprep.subr.mxu0 0.0
    %1346 = vmatpush2.msra.mxu0 0.0
    %1347 = vmatprep.subr.mxu0 0.0
    %1348 = vmatpush2.msra.mxu0 0.0
    %1349 = vmatprep.subr.mxu0 0.0
    %1350 = vmatpush2.msra.mxu0 0.0
    %1351 = vmatprep.mubr.f32.mxu0 0.0
    %1352 = vmatmul.mubr.f32.gmra.mxu0 %v1282
    %v1353 = vpop.f32.mrf.mxu0
    %v1354 = vadd.f32 0.0, %v1353
    %v1355 = vpop.f32.mrf.mxu0
    %1356 = vmatprep.mubr.f32.mxu0 0.0
    %1357 = vmatmul.mubr.f32.gmra.mxu0 %v1285
    %v1358 = vpop.f32.mrf.mxu0
    %v1359 = vadd.f32 0.0, %v1358
    %v1360 = vpop.f32.mrf.mxu0
    %1361 = vdwg.mxu0
    %v1363 = vsel %vm141, %v1354, 0
    %v1366 = vsel %vm141, %v1359, 0
    %1368 = vmatprep.subr.mxu0 0.0
    %1369 = vmatpush1.msra.mxu0 0.0
    %1370 = vmatprep.subr.mxu0 0.0
    %1371 = vmatpush1.msra.mxu0 0.0
    %1372 = vmatprep.subr.mxu0 0.0
    %1373 = vmatpush1.msra.mxu0 0.0
    %1374 = vmatprep.subr.mxu0 0.0
    %1375 = vmatpush1.msra.mxu0 0.0
    %1376 = vmatprep.subr.mxu0 0.0
    %1377 = vmatpush1.msra.mxu0 0.0
    %1378 = vmatprep.subr.mxu0 0.0
    %1379 = vmatpush1.msra.mxu0 0.0
    %1380 = vmatprep.subr.mxu0 0.0
    %1381 = vmatpush1.msra.mxu0 0.0
    %1382 = vmatprep.subr.mxu0 0.0
    %1383 = vmatpush1.msra.mxu0 0.0
    %1384 = vmatprep.subr.mxu0 0.0
    %1385 = vmatpush1.msra.mxu0 0.0
    %1386 = vmatprep.subr.mxu0 0.0
    %1387 = vmatpush1.msra.mxu0 0.0
    %1388 = vmatprep.subr.mxu0 0.0
    %1389 = vmatpush1.msra.mxu0 0.0
    %1390 = vmatprep.subr.mxu0 0.0
    %1391 = vmatpush1.msra.mxu0 0.0
    %1392 = vmatprep.subr.mxu0 0.0
    %1393 = vmatpush1.msra.mxu0 0.0
    %1394 = vmatprep.subr.mxu0 0.0
    %1395 = vmatpush1.msra.mxu0 0.0
    %1396 = vmatprep.subr.mxu0 0.0
    %1397 = vmatpush1.msra.mxu0 %v425
    %1398 = vmatprep.subr.mxu0 0.0
    %1399 = vmatpush1.msra.mxu0 %v424
    %1400 = vmatprep.subr.mxu0 0.0
    %1401 = vmatpush2.msra.mxu0 0.0
    %1402 = vmatprep.subr.mxu0 0.0
    %1403 = vmatpush2.msra.mxu0 0.0
    %1404 = vmatprep.subr.mxu0 0.0
    %1405 = vmatpush2.msra.mxu0 0.0
    %1406 = vmatprep.subr.mxu0 0.0
    %1407 = vmatpush2.msra.mxu0 0.0
    %1408 = vmatprep.subr.mxu0 0.0
    %1409 = vmatpush2.msra.mxu0 0.0
    %1410 = vmatprep.subr.mxu0 0.0
    %1411 = vmatpush2.msra.mxu0 0.0
    %1412 = vmatprep.subr.mxu0 0.0
    %1413 = vmatpush2.msra.mxu0 0.0
    %1414 = vmatprep.subr.mxu0 0.0
    %1415 = vmatpush2.msra.mxu0 0.0
    %1416 = vmatprep.subr.mxu0 0.0
    %1417 = vmatpush2.msra.mxu0 0.0
    %1418 = vmatprep.subr.mxu0 0.0
    %1419 = vmatpush2.msra.mxu0 0.0
    %1420 = vmatprep.subr.mxu0 0.0
    %1421 = vmatpush2.msra.mxu0 0.0
    %1422 = vmatprep.subr.mxu0 0.0
    %1423 = vmatpush2.msra.mxu0 0.0
    %1424 = vmatprep.subr.mxu0 0.0
    %1425 = vmatpush2.msra.mxu0 0.0
    %1426 = vmatprep.subr.mxu0 0.0
    %1427 = vmatpush2.msra.mxu0 0.0
    %1428 = vmatprep.subr.mxu0 0.0
    %1429 = vmatpush2.msra.mxu0 0.0
    %1430 = vmatprep.subr.mxu0 0.0
    %1431 = vmatpush2.msra.mxu0 0.0
    %1432 = vmatprep.mubr.f32.mxu0 0.0
    %1433 = vmatmul.mubr.f32.gmra.mxu0 %v1363
    %v1434 = vpop.f32.mrf.mxu0
    %v1435 = vadd.f32 0.0, %v1434
    %v1436 = vpop.f32.mrf.mxu0
    %1437 = vmatprep.mubr.f32.mxu0 0.0
    %1438 = vmatmul.mubr.f32.gmra.mxu0 %v1366
    %v1439 = vpop.f32.mrf.mxu0
    %v1440 = vadd.f32 0.0, %v1439
    %v1441 = vpop.f32.mrf.mxu0
    %1442 = vdwg.mxu0
    %v1444 = vsel %vm141, %v890, 0
    %v1447 = vsel %vm141, %v895, 0
    %1449 = vmatprep.subr.mxu0 0.0
    %1450 = vmatpush1.msra.mxu0 0.0
    %1451 = vmatprep.subr.mxu0 0.0
    %1452 = vmatpush1.msra.mxu0 0.0
    %1453 = vmatprep.subr.mxu0 0.0
    %1454 = vmatpush1.msra.mxu0 0.0
    %1455 = vmatprep.subr.mxu0 0.0
    %1456 = vmatpush1.msra.mxu0 0.0
    %1457 = vmatprep.subr.mxu0 0.0
    %1458 = vmatpush1.msra.mxu0 0.0
    %1459 = vmatprep.subr.mxu0 0.0
    %1460 = vmatpush1.msra.mxu0 0.0
    %1461 = vmatprep.subr.mxu0 0.0
    %1462 = vmatpush1.msra.mxu0 0.0
    %1463 = vmatprep.subr.mxu0 0.0
    %1464 = vmatpush1.msra.mxu0 0.0
    %1465 = vmatprep.subr.mxu0 0.0
    %1466 = vmatpush1.msra.mxu0 0.0
    %1467 = vmatprep.subr.mxu0 0.0
    %1468 = vmatpush1.msra.mxu0 0.0
    %1469 = vmatprep.subr.mxu0 0.0
    %1470 = vmatpush1.msra.mxu0 0.0
    %1471 = vmatprep.subr.mxu0 0.0
    %1472 = vmatpush1.msra.mxu0 0.0
    %1473 = vmatprep.subr.mxu0 0.0
    %1474 = vmatpush1.msra.mxu0 0.0
    %1475 = vmatprep.subr.mxu0 0.0
    %1476 = vmatpush1.msra.mxu0 0.0
    %1477 = vmatprep.subr.mxu0 0.0
    %1478 = vmatpush1.msra.mxu0 %v423
    %1479 = vmatprep.subr.mxu0 0.0
    %1480 = vmatpush1.msra.mxu0 %v422
    %1481 = vmatprep.subr.mxu0 0.0
    %1482 = vmatpush2.msra.mxu0 0.0
    %1483 = vmatprep.subr.mxu0 0.0
    %1484 = vmatpush2.msra.mxu0 0.0
    %1485 = vmatprep.subr.mxu0 0.0
    %1486 = vmatpush2.msra.mxu0 0.0
    %1487 = vmatprep.subr.mxu0 0.0
    %1488 = vmatpush2.msra.mxu0 0.0
    %1489 = vmatprep.subr.mxu0 0.0
    %1490 = vmatpush2.msra.mxu0 0.0
    %1491 = vmatprep.subr.mxu0 0.0
    %1492 = vmatpush2.msra.mxu0 0.0
    %1493 = vmatprep.subr.mxu0 0.0
    %1494 = vmatpush2.msra.mxu0 0.0
    %1495 = vmatprep.subr.mxu0 0.0
    %1496 = vmatpush2.msra.mxu0 0.0
    %1497 = vmatprep.subr.mxu0 0.0
    %1498 = vmatpush2.msra.mxu0 0.0
    %1499 = vmatprep.subr.mxu0 0.0
    %1500 = vmatpush2.msra.mxu0 0.0
    %1501 = vmatprep.subr.mxu0 0.0
    %1502 = vmatpush2.msra.mxu0 0.0
    %1503 = vmatprep.subr.mxu0 0.0
    %1504 = vmatpush2.msra.mxu0 0.0
    %1505 = vmatprep.subr.mxu0 0.0
    %1506 = vmatpush2.msra.mxu0 0.0
    %1507 = vmatprep.subr.mxu0 0.0
    %1508 = vmatpush2.msra.mxu0 0.0
    %1509 = vmatprep.subr.mxu0 0.0
    %1510 = vmatpush2.msra.mxu0 0.0
    %1511 = vmatprep.subr.mxu0 0.0
    %1512 = vmatpush2.msra.mxu0 0.0
    %1513 = vmatprep.mubr.f32.mxu0 0.0
    %1514 = vmatmul.mubr.f32.gmra.mxu0 %v1444
    %v1515 = vpop.f32.mrf.mxu0
    %v1516 = vadd.f32 %v1435, %v1515
    %v1517 = vpop.f32.mrf.mxu0
    %1518 = vmatprep.mubr.f32.mxu0 0.0
    %1519 = vmatmul.mubr.f32.gmra.mxu0 %v1447
    %v1520 = vpop.f32.mrf.mxu0
    %v1521 = vadd.f32 %v1440, %v1520
    %v1522 = vpop.f32.mrf.mxu0
    %1523 = vdwg.mxu0
    %1524 = vrot.lane.b32.xlu0 %v437, 32
    %v1525 = vpop.permute.xlu0 %1524
    %v1527 = vadd.f32 %v1516, %v1525
    %v1528 = vadd.f32 %v1521, %v1525
    %v1529 = vadd.f32 %v411, %v1527
    %v1530 = vadd.f32 %v412, %v1528
    %v1531 = vsel %vm373, %v1529, 0.0
    %1532 = vadd.xlane.f32.xlu0 %v1531
    %v1533 = vpop.xlane.xlu0 %1532
    %v1534 = vsel %vm373, %v1530, 0.0
    %1535 = vadd.xlane.f32.xlu0 %v1534
    %v1536 = vpop.xlane.xlu0 %1535
    %v1537 = vmul.f32 %v1533, %v380
    %v1538 = vmul.f32 %v1536, %v380
    %v1539 = vsub.f32 %v1529, %v1537
    %v1540 = vsub.f32 %v1530, %v1538
    %v1541 = vmul.f32 %v1539, %v1539
    %v1542 = vmul.f32 %v1540, %v1540
    %v1543 = vsel %vm373, %v1541, 0.0
    %1544 = vadd.xlane.f32.xlu0 %v1543
    %v1545 = vpop.xlane.xlu0 %1544
    %v1546 = vsel %vm373, %v1542, 0.0
    %1547 = vadd.xlane.f32.xlu0 %v1546
    %v1548 = vpop.xlane.xlu0 %1547
    %v1549 = vmul.f32 %v1545, %v380
    %v1550 = vmul.f32 %v1548, %v380
    %v1551 = vadd.f32 %v1549, 1e-05
    %v1552 = vadd.f32 %v1550, 1e-05
    %v1553 = vrsqrt.pop %v1551
    %v1554 = vrsqrt.pop %v1552
    %v1555 = vmul.f32 %v1539, %v1553
    %v1556 = vmul.f32 %v1540, %v1554
    %v1557 = vlaneseq
    %v1558 = vshrl.u32 %v1557, 7
    %v1559 = vsub.s32 1, %v1558
    %v1560 = vrot.slane %v413, %v1559
    %v1561 = vmul.f32 %v1555, %v1560
    %v1562 = vmul.f32 %v1556, %v1560
    %1564 = vrot.lane.b32.xlu0 %v1560, 96
    %v1565 = vpop.permute.xlu0 %1564
    %v1567 = vadd.f32 %v1561, %v1565
    %v1568 = vadd.f32 %v1562, %v1565
    %v1569 = vlaneseq
    %v1570 = vshrl.u32 %v1569, 7
    %v1571 = vsub.s32 2, %v1570
    %v1572 = vrot.slane %v413, %v1571
    %1577 = vrot.lane.b32.xlu0 %v414, 32
    %v1578 = vpop.permute.xlu0 %1577
    %1579 = vrot.lane.b32.xlu0 %v415, 32
    %v1580 = vpop.permute.xlu0 %1579
    %1581 = vrot.lane.b32.xlu0 %v416, 32
    %v1582 = vpop.permute.xlu0 %1581
    %1583 = vrot.lane.b32.xlu0 %v417, 32
    %v1584 = vpop.permute.xlu0 %1583
    %1585 = vrot.lane.b32.xlu0 %v418, 32
    %v1586 = vpop.permute.xlu0 %1585
    %1587 = vrot.lane.b32.xlu0 %v419, 32
    %v1588 = vpop.permute.xlu0 %1587
    %1589 = vrot.lane.b32.xlu0 %v420, 32
    %v1590 = vpop.permute.xlu0 %1589
    %1591 = vrot.lane.b32.xlu0 %v421, 32
    %v1592 = vpop.permute.xlu0 %1591
    %v1593 = vsel %vm373, %v1578, %v1580
    %v1594 = vsel %vm373, %v1582, %v1584
    %v1595 = vsel %vm373, %v1586, %v1588
    %v1596 = vsel %vm373, %v1590, %v1592
    %v1602 = vsel %vm373, %v1567, 0
    %v1605 = vsel %vm373, %v1568, 0
    %1607 = vmatprep.subr.mxu0 0.0
    %1608 = vmatpush1.msra.mxu0 0.0
    %1609 = vmatprep.subr.mxu0 0.0
    %1610 = vmatpush1.msra.mxu0 0.0
    %1611 = vmatprep.subr.mxu0 0.0
    %1612 = vmatpush1.msra.mxu0 0.0
    %1613 = vmatprep.subr.mxu0 0.0
    %1614 = vmatpush1.msra.mxu0 0.0
    %1615 = vmatprep.subr.mxu0 0.0
    %1616 = vmatpush1.msra.mxu0 0.0
    %1617 = vmatprep.subr.mxu0 0.0
    %1618 = vmatpush1.msra.mxu0 0.0
    %1619 = vmatprep.subr.mxu0 0.0
    %1620 = vmatpush1.msra.mxu0 0.0
    %1621 = vmatprep.subr.mxu0 0.0
    %1622 = vmatpush1.msra.mxu0 0.0
    %1623 = vmatprep.subr.mxu0 0.0
    %1624 = vmatpush1.msra.mxu0 0.0
    %1625 = vmatprep.subr.mxu0 0.0
    %1626 = vmatpush1.msra.mxu0 0.0
    %1627 = vmatprep.subr.mxu0 0.0
    %1628 = vmatpush1.msra.mxu0 0.0
    %1629 = vmatprep.subr.mxu0 0.0
    %1630 = vmatpush1.msra.mxu0 0.0
    %1631 = vmatprep.subr.mxu0 0.0
    %1632 = vmatpush1.msra.mxu0 %v1596
    %1633 = vmatprep.subr.mxu0 0.0
    %1634 = vmatpush1.msra.mxu0 %v1595
    %1635 = vmatprep.subr.mxu0 0.0
    %1636 = vmatpush1.msra.mxu0 %v1594
    %1637 = vmatprep.subr.mxu0 0.0
    %1638 = vmatpush1.msra.mxu0 %v1593
    %1639 = vmatprep.subr.mxu0 0.0
    %1640 = vmatpush2.msra.mxu0 0.0
    %1641 = vmatprep.subr.mxu0 0.0
    %1642 = vmatpush2.msra.mxu0 0.0
    %1643 = vmatprep.subr.mxu0 0.0
    %1644 = vmatpush2.msra.mxu0 0.0
    %1645 = vmatprep.subr.mxu0 0.0
    %1646 = vmatpush2.msra.mxu0 0.0
    %1647 = vmatprep.subr.mxu0 0.0
    %1648 = vmatpush2.msra.mxu0 0.0
    %1649 = vmatprep.subr.mxu0 0.0
    %1650 = vmatpush2.msra.mxu0 0.0
    %1651 = vmatprep.subr.mxu0 0.0
    %1652 = vmatpush2.msra.mxu0 0.0
    %1653 = vmatprep.subr.mxu0 0.0
    %1654 = vmatpush2.msra.mxu0 0.0
    %1655 = vmatprep.subr.mxu0 0.0
    %1656 = vmatpush2.msra.mxu0 0.0
    %1657 = vmatprep.subr.mxu0 0.0
    %1658 = vmatpush2.msra.mxu0 0.0
    %1659 = vmatprep.subr.mxu0 0.0
    %1660 = vmatpush2.msra.mxu0 0.0
    %1661 = vmatprep.subr.mxu0 0.0
    %1662 = vmatpush2.msra.mxu0 0.0
    %1663 = vmatprep.subr.mxu0 0.0
    %1664 = vmatpush2.msra.mxu0 0.0
    %1665 = vmatprep.subr.mxu0 0.0
    %1666 = vmatpush2.msra.mxu0 0.0
    %1667 = vmatprep.subr.mxu0 0.0
    %1668 = vmatpush2.msra.mxu0 0.0
    %1669 = vmatprep.subr.mxu0 0.0
    %1670 = vmatpush2.msra.mxu0 0.0
    %1671 = vmatprep.mubr.f32.mxu0 0.0
    %1672 = vmatmul.mubr.f32.gmra.mxu0 %v1602
    %v1673 = vpop.f32.mrf.mxu0
    %v1674 = vadd.f32 %v1572, %v1673
    %v1675 = vpop.f32.mrf.mxu0
    %1676 = vmatprep.mubr.f32.mxu0 0.0
    %1677 = vmatmul.mubr.f32.gmra.mxu0 %v1605
    %v1678 = vpop.f32.mrf.mxu0
    %v1679 = vadd.f32 %v1572, %v1678
    %v1680 = vpop.f32.mrf.mxu0
    %1681 = vdwg.mxu0
    %v1682 = vmul.f32 %v1674, 0.5
    %v1683 = vmul.f32 %v1679, 0.5
    %v1684 = vmul.f32 %v1674, 0.044715
    %v1685 = vmul.f32 %v1679, 0.044715
    %v1686 = vmul.f32 %v1684, %v1674
    %v1687 = vmul.f32 %v1685, %v1679
    %v1688 = vmul.f32 %v1686, %v1674
    %v1689 = vmul.f32 %v1687, %v1679
    %v1690 = vadd.f32 %v1674, %v1688
    %v1691 = vadd.f32 %v1679, %v1689
    %v1692 = vmul.f32 %v1690, 0.7978846
    %v1693 = vmul.f32 %v1691, 0.7978846
    %v1694 = vtanh.pop %v1692
    %v1695 = vtanh.pop %v1693
    %v1696 = vadd.f32 %v1694, 1.0
    %v1697 = vadd.f32 %v1695, 1.0
    %v1698 = vmul.f32 %v1682, %v1696
    %v1699 = vmul.f32 %v1683, %v1697
    %1701 = vrot.lane.b32.xlu0 %v1572, 64
    %v1702 = vpop.permute.xlu0 %1701
    %vm1704 = vcmask 523264
    %v1706 = vsel %vm1704, %v1698, 0
    %v1709 = vsel %vm1704, %v1699, 0
    %1711 = vmatprep.subr.mxu0 0.0
    %1712 = vmatpush1.msra.mxu0 0.0
    %1713 = vmatprep.subr.mxu0 0.0
    %1714 = vmatpush1.msra.mxu0 0.0
    %1715 = vmatprep.subr.mxu0 0.0
    %1716 = vmatpush1.msra.mxu0 0.0
    %1717 = vmatprep.subr.mxu0 0.0
    %1718 = vmatpush1.msra.mxu0 0.0
    %1719 = vmatprep.subr.mxu0 0.0
    %1720 = vmatpush1.msra.mxu0 0.0
    %1721 = vmatprep.subr.mxu0 0.0
    %1722 = vmatpush1.msra.mxu0 0.0
    %1723 = vmatprep.subr.mxu0 0.0
    %1724 = vmatpush1.msra.mxu0 0.0
    %1725 = vmatprep.subr.mxu0 0.0
    %1726 = vmatpush1.msra.mxu0 0.0
    %1727 = vmatprep.subr.mxu0 0.0
    %1728 = vmatpush1.msra.mxu0 %v433
    %1729 = vmatprep.subr.mxu0 0.0
    %1730 = vmatpush1.msra.mxu0 %v432
    %1731 = vmatprep.subr.mxu0 0.0
    %1732 = vmatpush1.msra.mxu0 %v431
    %1733 = vmatprep.subr.mxu0 0.0
    %1734 = vmatpush1.msra.mxu0 %v430
    %1735 = vmatprep.subr.mxu0 0.0
    %1736 = vmatpush1.msra.mxu0 %v429
    %1737 = vmatprep.subr.mxu0 0.0
    %1738 = vmatpush1.msra.mxu0 %v428
    %1739 = vmatprep.subr.mxu0 0.0
    %1740 = vmatpush1.msra.mxu0 %v427
    %1741 = vmatprep.subr.mxu0 0.0
    %1742 = vmatpush1.msra.mxu0 %v426
    %1743 = vmatprep.subr.mxu0 0.0
    %1744 = vmatpush2.msra.mxu0 0.0
    %1745 = vmatprep.subr.mxu0 0.0
    %1746 = vmatpush2.msra.mxu0 0.0
    %1747 = vmatprep.subr.mxu0 0.0
    %1748 = vmatpush2.msra.mxu0 0.0
    %1749 = vmatprep.subr.mxu0 0.0
    %1750 = vmatpush2.msra.mxu0 0.0
    %1751 = vmatprep.subr.mxu0 0.0
    %1752 = vmatpush2.msra.mxu0 0.0
    %1753 = vmatprep.subr.mxu0 0.0
    %1754 = vmatpush2.msra.mxu0 0.0
    %1755 = vmatprep.subr.mxu0 0.0
    %1756 = vmatpush2.msra.mxu0 0.0
    %1757 = vmatprep.subr.mxu0 0.0
    %1758 = vmatpush2.msra.mxu0 0.0
    %1759 = vmatprep.subr.mxu0 0.0
    %1760 = vmatpush2.msra.mxu0 0.0
    %1761 = vmatprep.subr.mxu0 0.0
    %1762 = vmatpush2.msra.mxu0 0.0
    %1763 = vmatprep.subr.mxu0 0.0
    %1764 = vmatpush2.msra.mxu0 0.0
    %1765 = vmatprep.subr.mxu0 0.0
    %1766 = vmatpush2.msra.mxu0 0.0
    %1767 = vmatprep.subr.mxu0 0.0
    %1768 = vmatpush2.msra.mxu0 0.0
    %1769 = vmatprep.subr.mxu0 0.0
    %1770 = vmatpush2.msra.mxu0 0.0
    %1771 = vmatprep.subr.mxu0 0.0
    %1772 = vmatpush2.msra.mxu0 0.0
    %1773 = vmatprep.subr.mxu0 0.0
    %1774 = vmatpush2.msra.mxu0 0.0
    %1775 = vmatprep.mubr.f32.mxu0 0.0
    %1776 = vmatmul.mubr.f32.gmra.mxu0 %v1706
    %v1777 = vpop.f32.mrf.mxu0
    %v1778 = vadd.f32 %v1702, %v1777
    %v1779 = vpop.f32.mrf.mxu0
    %1780 = vmatprep.mubr.f32.mxu0 0.0
    %1781 = vmatmul.mubr.f32.gmra.mxu0 %v1709
    %v1782 = vpop.f32.mrf.mxu0
    %v1783 = vadd.f32 %v1702, %v1782
    %v1784 = vpop.f32.mrf.mxu0
    %1785 = vdwg.mxu0
    %v1786 = vadd.f32 %v1567, %v1778
    %v1787 = vadd.f32 %v1568, %v1783
    %v1788 = vsel %vm373, %v1786, 0.0
    %1789 = vadd.xlane.f32.xlu0 %v1788
    %v1790 = vpop.xlane.xlu0 %1789
    %v1791 = vsel %vm373, %v1787, 0.0
    %1792 = vadd.xlane.f32.xlu0 %v1791
    %v1793 = vpop.xlane.xlu0 %1792
    %v1794 = vmul.f32 %v1790, %v380
    %v1795 = vmul.f32 %v1793, %v380
    %v1796 = vsub.f32 %v1786, %v1794
    %v1797 = vsub.f32 %v1787, %v1795
    %v1798 = vmul.f32 %v1796, %v1796
    %v1799 = vmul.f32 %v1797, %v1797
    %v1800 = vsel %vm373, %v1798, 0.0
    %1801 = vadd.xlane.f32.xlu0 %v1800
    %v1802 = vpop.xlane.xlu0 %1801
    %v1803 = vsel %vm373, %v1799, 0.0
    %1804 = vadd.xlane.f32.xlu0 %v1803
    %v1805 = vpop.xlane.xlu0 %1804
    %v1806 = vmul.f32 %v1802, %v380
    %v1807 = vmul.f32 %v1805, %v380
    %v1808 = vadd.f32 %v1806, 1e-05
    %v1809 = vadd.f32 %v1807, 1e-05
    %v1810 = vrsqrt.pop %v1808
    %v1811 = vrsqrt.pop %v1809
    %v1812 = vmul.f32 %v1796, %v1810
    %v1813 = vmul.f32 %v1797, %v1811
    %1814 = vrot.lane.b32.xlu0 %v1560, 64
    %v1815 = vpop.permute.xlu0 %1814
    %v1817 = vmul.f32 %v1812, %v1815
    %v1818 = vmul.f32 %v1813, %v1815
    %1819 = vrot.lane.b32.xlu0 %v1560, 32
    %v1820 = vpop.permute.xlu0 %1819
    %v1822 = vadd.f32 %v1817, %v1820
    %v1823 = vadd.f32 %v1818, %v1820
    %s1824 = scalar_lea.vmem [#allocation6], 64
    %v1825 = vld [vmem:[%s1824] sm:$0xff]
    %v1826 = vld [vmem:[%s1824 + $0x8] sm:$0xff]
    %v1827 = vld [vmem:[%s1824 + $0x10] sm:$0xff]
    %v1828 = vld [vmem:[%s1824 + $0x18] sm:$0xff]
    %v1829 = vld [vmem:[%s1824 + $0x20] sm:$0xff]
    %v1830 = vld [vmem:[%s1824 + $0x28] sm:$0xff]
    %v1831 = vld [vmem:[%s1824 + $0x30] sm:$0xff]
    %v1832 = vld [vmem:[%s1824 + $0x38] sm:$0xff]
    %s1833 = scalar_lea.vmem [#allocation7], 96
    %v1834 = vld [vmem:[%s1833] sm:$0xff]
    %v1835 = vld [vmem:[%s1833 + $0x8] sm:$0xff]
    %v1836 = vld [vmem:[%s1833 + $0x10] sm:$0xff]
    %v1837 = vld [vmem:[%s1833 + $0x18] sm:$0xff]
    %v1838 = vld [vmem:[%s1833 + $0x20] sm:$0xff]
    %v1839 = vld [vmem:[%s1833 + $0x28] sm:$0xff]
    %v1840 = vld [vmem:[%s1833 + $0x30] sm:$0xff]
    %v1841 = vld [vmem:[%s1833 + $0x38] sm:$0xff]
    %v1842 = vld [vmem:[%s1833 + $0x40] sm:$0xff]
    %v1843 = vld [vmem:[%s1833 + $0x48] sm:$0xff]
    %v1844 = vld [vmem:[%s1833 + $0x50] sm:$0xff]
    %v1845 = vld [vmem:[%s1833 + $0x58] sm:$0xff]
    %v1846 = vlaneseq
    %v1847 = vshrl.u32 %v1846, 7
    %v1848 = vsub.s32 3, %v1847
    %v1849 = vrot.slane %v413, %v1848
    %v1851 = vsel %vm373, %v1822, 0
    %v1854 = vsel %vm373, %v1823, 0
    %1856 = vmatprep.subr.mxu0 0.0
    %1857 = vmatpush1.msra.mxu0 0.0
    %1858 = vmatprep.subr.mxu0 0.0
    %1859 = vmatpush1.msra.mxu0 0.0
    %1860 = vmatprep.subr.mxu0 0.0
    %1861 = vmatpush1.msra.mxu0 0.0
    %1862 = vmatprep.subr.mxu0 0.0
    %1863 = vmatpush1.msra.mxu0 0.0
    %1864 = vmatprep.subr.mxu0 0.0
    %1865 = vmatpush1.msra.mxu0 0.0
    %1866 = vmatprep.subr.mxu0 0.0
    %1867 = vmatpush1.msra.mxu0 0.0
    %1868 = vmatprep.subr.mxu0 0.0
    %1869 = vmatpush1.msra.mxu0 0.0
    %1870 = vmatprep.subr.mxu0 0.0
    %1871 = vmatpush1.msra.mxu0 0.0
    %1872 = vmatprep.subr.mxu0 0.0
    %1873 = vmatpush1.msra.mxu0 0.0
    %1874 = vmatprep.subr.mxu0 0.0
    %1875 = vmatpush1.msra.mxu0 0.0
    %1876 = vmatprep.subr.mxu0 0.0
    %1877 = vmatpush1.msra.mxu0 0.0
    %1878 = vmatprep.subr.mxu0 0.0
    %1879 = vmatpush1.msra.mxu0 0.0
    %1880 = vmatprep.subr.mxu0 0.0
    %1881 = vmatpush1.msra.mxu0 %v1831
    %1882 = vmatprep.subr.mxu0 0.0
    %1883 = vmatpush1.msra.mxu0 %v1829
    %1884 = vmatprep.subr.mxu0 0.0
    %1885 = vmatpush1.msra.mxu0 %v1827
    %1886 = vmatprep.subr.mxu0 0.0
    %1887 = vmatpush1.msra.mxu0 %v1825
    %1888 = vmatprep.subr.mxu0 0.0
    %1889 = vmatpush2.msra.mxu0 0.0
    %1890 = vmatprep.subr.mxu0 0.0
    %1891 = vmatpush2.msra.mxu0 0.0
    %1892 = vmatprep.subr.mxu0 0.0
    %1893 = vmatpush2.msra.mxu0 0.0
    %1894 = vmatprep.subr.mxu0 0.0
    %1895 = vmatpush2.msra.mxu0 0.0
    %1896 = vmatprep.subr.mxu0 0.0
    %1897 = vmatpush2.msra.mxu0 0.0
    %1898 = vmatprep.subr.mxu0 0.0
    %1899 = vmatpush2.msra.mxu0 0.0
    %1900 = vmatprep.subr.mxu0 0.0
    %1901 = vmatpush2.msra.mxu0 0.0
    %1902 = vmatprep.subr.mxu0 0.0
    %1903 = vmatpush2.msra.mxu0 0.0
    %1904 = vmatprep.subr.mxu0 0.0
    %1905 = vmatpush2.msra.mxu0 0.0
    %1906 = vmatprep.subr.mxu0 0.0
    %1907 = vmatpush2.msra.mxu0 0.0
    %1908 = vmatprep.subr.mxu0 0.0
    %1909 = vmatpush2.msra.mxu0 0.0
    %1910 = vmatprep.subr.mxu0 0.0
    %1911 = vmatpush2.msra.mxu0 0.0
    %1912 = vmatprep.subr.mxu0 0.0
    %1913 = vmatpush2.msra.mxu0 0.0
    %1914 = vmatprep.subr.mxu0 0.0
    %1915 = vmatpush2.msra.mxu0 0.0
    %1916 = vmatprep.subr.mxu0 0.0
    %1917 = vmatpush2.msra.mxu0 0.0
    %1918 = vmatprep.subr.mxu0 0.0
    %1919 = vmatpush2.msra.mxu0 0.0
    %1920 = vmatprep.mubr.f32.mxu0 0.0
    %1921 = vmatmul.mubr.f32.gmra.mxu0 %v1851
    %v1922 = vpop.f32.mrf.mxu0
    %v1923 = vadd.f32 %v1849, %v1922
    %v1924 = vpop.f32.mrf.mxu0
    %1925 = vmatprep.mubr.f32.mxu0 0.0
    %1926 = vmatmul.mubr.f32.gmra.mxu0 %v1854
    %v1927 = vpop.f32.mrf.mxu0
    %v1928 = vadd.f32 %v1849, %v1927
    %v1929 = vpop.f32.mrf.mxu0
    %1930 = vdwg.mxu0
    %1935 = vrot.lane.b32.xlu0 %v1825, 112
    %v1936 = vpop.permute.xlu0 %1935
    %1937 = vrot.lane.b32.xlu0 %v1827, 112
    %v1938 = vpop.permute.xlu0 %1937
    %1939 = vrot.lane.b32.xlu0 %v1829, 112
    %v1940 = vpop.permute.xlu0 %1939
    %1941 = vrot.lane.b32.xlu0 %v1831, 112
    %v1942 = vpop.permute.xlu0 %1941
    %1948 = vrot.lane.b32.xlu0 %v1849, 112
    %v1949 = vpop.permute.xlu0 %1948
    %1951 = vmatprep.subr.mxu0 0.0
    %1952 = vmatpush1.msra.mxu0 0.0
    %1953 = vmatprep.subr.mxu0 0.0
    %1954 = vmatpush1.msra.mxu0 0.0
    %1955 = vmatprep.subr.mxu0 0.0
    %1956 = vmatpush1.msra.mxu0 0.0
    %1957 = vmatprep.subr.mxu0 0.0
    %1958 = vmatpush1.msra.mxu0 0.0
    %1959 = vmatprep.subr.mxu0 0.0
    %1960 = vmatpush1.msra.mxu0 0.0
    %1961 = vmatprep.subr.mxu0 0.0
    %1962 = vmatpush1.msra.mxu0 0.0
    %1963 = vmatprep.subr.mxu0 0.0
    %1964 = vmatpush1.msra.mxu0 0.0
    %1965 = vmatprep.subr.mxu0 0.0
    %1966 = vmatpush1.msra.mxu0 0.0
    %1967 = vmatprep.subr.mxu0 0.0
    %1968 = vmatpush1.msra.mxu0 0.0
    %1969 = vmatprep.subr.mxu0 0.0
    %1970 = vmatpush1.msra.mxu0 0.0
    %1971 = vmatprep.subr.mxu0 0.0
    %1972 = vmatpush1.msra.mxu0 0.0
    %1973 = vmatprep.subr.mxu0 0.0
    %1974 = vmatpush1.msra.mxu0 0.0
    %1975 = vmatprep.subr.mxu0 0.0
    %1976 = vmatpush1.msra.mxu0 %v1942
    %1977 = vmatprep.subr.mxu0 0.0
    %1978 = vmatpush1.msra.mxu0 %v1940
    %1979 = vmatprep.subr.mxu0 0.0
    %1980 = vmatpush1.msra.mxu0 %v1938
    %1981 = vmatprep.subr.mxu0 0.0
    %1982 = vmatpush1.msra.mxu0 %v1936
    %1983 = vmatprep.subr.mxu0 0.0
    %1984 = vmatpush2.msra.mxu0 0.0
    %1985 = vmatprep.subr.mxu0 0.0
    %1986 = vmatpush2.msra.mxu0 0.0
    %1987 = vmatprep.subr.mxu0 0.0
    %1988 = vmatpush2.msra.mxu0 0.0
    %1989 = vmatprep.subr.mxu0 0.0
    %1990 = vmatpush2.msra.mxu0 0.0
    %1991 = vmatprep.subr.mxu0 0.0
    %1992 = vmatpush2.msra.mxu0 0.0
    %1993 = vmatprep.subr.mxu0 0.0
    %1994 = vmatpush2.msra.mxu0 0.0
    %1995 = vmatprep.subr.mxu0 0.0
    %1996 = vmatpush2.msra.mxu0 0.0
    %1997 = vmatprep.subr.mxu0 0.0
    %1998 = vmatpush2.msra.mxu0 0.0
    %1999 = vmatprep.subr.mxu0 0.0
    %2000 = vmatpush2.msra.mxu0 0.0
    %2001 = vmatprep.subr.mxu0 0.0
    %2002 = vmatpush2.msra.mxu0 0.0
    %2003 = vmatprep.subr.mxu0 0.0
    %2004 = vmatpush2.msra.mxu0 0.0
    %2005 = vmatprep.subr.mxu0 0.0
    %2006 = vmatpush2.msra.mxu0 0.0
    %2007 = vmatprep.subr.mxu0 0.0
    %2008 = vmatpush2.msra.mxu0 0.0
    %2009 = vmatprep.subr.mxu0 0.0
    %2010 = vmatpush2.msra.mxu0 0.0
    %2011 = vmatprep.subr.mxu0 0.0
    %2012 = vmatpush2.msra.mxu0 0.0
    %2013 = vmatprep.subr.mxu0 0.0
    %2014 = vmatpush2.msra.mxu0 0.0
    %2015 = vmatprep.mubr.f32.mxu0 0.0
    %2016 = vmatmul.mubr.f32.gmra.mxu0 %v1851
    %v2017 = vpop.f32.mrf.mxu0
    %v2018 = vadd.f32 %v1949, %v2017
    %v2019 = vpop.f32.mrf.mxu0
    %2020 = vmatprep.mubr.f32.mxu0 0.0
    %2021 = vmatmul.mubr.f32.gmra.mxu0 %v1854
    %v2022 = vpop.f32.mrf.mxu0
    %v2023 = vadd.f32 %v1949, %v2022
    %v2024 = vpop.f32.mrf.mxu0
    %2025 = vdwg.mxu0
    %2026 = vrot.lane.b32.xlu0 %v1825, 96
    %v2027 = vpop.permute.xlu0 %2026
    %2028 = vrot.lane.b32.xlu0 %v1827, 96
    %v2029 = vpop.permute.xlu0 %2028
    %2030 = vrot.lane.b32.xlu0 %v1829, 96
    %v2031 = vpop.permute.xlu0 %2030
    %2032 = vrot.lane.b32.xlu0 %v1831, 96
    %v2033 = vpop.permute.xlu0 %2032
    %2038 = vrot.lane.b32.xlu0 %v1849, 96
    %v2039 = vpop.permute.xlu0 %2038
    %2041 = vmatprep.subr.mxu0 0.0
    %2042 = vmatpush1.msra.mxu0 0.0
    %2043 = vmatprep.subr.mxu0 0.0
    %2044 = vmatpush1.msra.mxu0 0.0
    %2045 = vmatprep.subr.mxu0 0.0
    %2046 = vmatpush1.msra.mxu0 0.0
    %2047 = vmatprep.subr.mxu0 0.0
    %2048 = vmatpush1.msra.mxu0 0.0
    %2049 = vmatprep.subr.mxu0 0.0
    %2050 = vmatpush1.msra.mxu0 0.0
    %2051 = vmatprep.subr.mxu0 0.0
    %2052 = vmatpush1.msra.mxu0 0.0
    %2053 = vmatprep.subr.mxu0 0.0
    %2054 = vmatpush1.msra.mxu0 0.0
    %2055 = vmatprep.subr.mxu0 0.0
    %2056 = vmatpush1.msra.mxu0 0.0
    %2057 = vmatprep.subr.mxu0 0.0
    %2058 = vmatpush1.msra.mxu0 0.0
    %2059 = vmatprep.subr.mxu0 0.0
    %2060 = vmatpush1.msra.mxu0 0.0
    %2061 = vmatprep.subr.mxu0 0.0
    %2062 = vmatpush1.msra.mxu0 0.0
    %2063 = vmatprep.subr.mxu0 0.0
    %2064 = vmatpush1.msra.mxu0 0.0
    %2065 = vmatprep.subr.mxu0 0.0
    %2066 = vmatpush1.msra.mxu0 %v2033
    %2067 = vmatprep.subr.mxu0 0.0
    %2068 = vmatpush1.msra.mxu0 %v2031
    %2069 = vmatprep.subr.mxu0 0.0
    %2070 = vmatpush1.msra.mxu0 %v2029
    %2071 = vmatprep.subr.mxu0 0.0
    %2072 = vmatpush1.msra.mxu0 %v2027
    %2073 = vmatprep.subr.mxu0 0.0
    %2074 = vmatpush2.msra.mxu0 0.0
    %2075 = vmatprep.subr.mxu0 0.0
    %2076 = vmatpush2.msra.mxu0 0.0
    %2077 = vmatprep.subr.mxu0 0.0
    %2078 = vmatpush2.msra.mxu0 0.0
    %2079 = vmatprep.subr.mxu0 0.0
    %2080 = vmatpush2.msra.mxu0 0.0
    %2081 = vmatprep.subr.mxu0 0.0
    %2082 = vmatpush2.msra.mxu0 0.0
    %2083 = vmatprep.subr.mxu0 0.0
    %2084 = vmatpush2.msra.mxu0 0.0
    %2085 = vmatprep.subr.mxu0 0.0
    %2086 = vmatpush2.msra.mxu0 0.0
    %2087 = vmatprep.subr.mxu0 0.0
    %2088 = vmatpush2.msra.mxu0 0.0
    %2089 = vmatprep.subr.mxu0 0.0
    %2090 = vmatpush2.msra.mxu0 0.0
    %2091 = vmatprep.subr.mxu0 0.0
    %2092 = vmatpush2.msra.mxu0 0.0
    %2093 = vmatprep.subr.mxu0 0.0
    %2094 = vmatpush2.msra.mxu0 0.0
    %2095 = vmatprep.subr.mxu0 0.0
    %2096 = vmatpush2.msra.mxu0 0.0
    %2097 = vmatprep.subr.mxu0 0.0
    %2098 = vmatpush2.msra.mxu0 0.0
    %2099 = vmatprep.subr.mxu0 0.0
    %2100 = vmatpush2.msra.mxu0 0.0
    %2101 = vmatprep.subr.mxu0 0.0
    %2102 = vmatpush2.msra.mxu0 0.0
    %2103 = vmatprep.subr.mxu0 0.0
    %2104 = vmatpush2.msra.mxu0 0.0
    %2105 = vmatprep.mubr.f32.mxu0 0.0
    %2106 = vmatmul.mubr.f32.gmra.mxu0 %v1851
    %v2107 = vpop.f32.mrf.mxu0
    %v2108 = vadd.f32 %v2039, %v2107
    %v2109 = vpop.f32.mrf.mxu0
    %2110 = vmatprep.mubr.f32.mxu0 0.0
    %2111 = vmatmul.mubr.f32.gmra.mxu0 %v1854
    %v2112 = vpop.f32.mrf.mxu0
    %v2113 = vadd.f32 %v2039, %v2112
    %v2114 = vpop.f32.mrf.mxu0
    %2115 = vdwg.mxu0
    %v2117 = vsel %vm141, %v1923, 0
    %v2120 = vsel %vm141, %v1928, 0
    %v2123 = vsel %vm141, %v2018, 0
    %v2126 = vsel %vm141, %v2023, 0
    %2128 = vmatprep.subr.mxu0 0.0
    %2129 = vmatpush1.xpose.msra.mxu0 0.0
    %2130 = vmatprep.subr.mxu0 0.0
    %2131 = vmatpush1.xpose.msra.mxu0 0.0
    %2132 = vmatprep.subr.mxu0 0.0
    %2133 = vmatpush1.xpose.msra.mxu0 0.0
    %2134 = vmatprep.subr.mxu0 0.0
    %2135 = vmatpush1.xpose.msra.mxu0 0.0
    %2136 = vmatprep.subr.mxu0 0.0
    %2137 = vmatpush1.xpose.msra.mxu0 0.0
    %2138 = vmatprep.subr.mxu0 0.0
    %2139 = vmatpush1.xpose.msra.mxu0 0.0
    %2140 = vmatprep.subr.mxu0 0.0
    %2141 = vmatpush1.xpose.msra.mxu0 0.0
    %2142 = vmatprep.subr.mxu0 0.0
    %2143 = vmatpush1.xpose.msra.mxu0 0.0
    %2144 = vmatprep.subr.mxu0 0.0
    %2145 = vmatpush1.xpose.msra.mxu0 0.0
    %2146 = vmatprep.subr.mxu0 0.0
    %2147 = vmatpush1.xpose.msra.mxu0 0.0
    %2148 = vmatprep.subr.mxu0 0.0
    %2149 = vmatpush1.xpose.msra.mxu0 0.0
    %2150 = vmatprep.subr.mxu0 0.0
    %2151 = vmatpush1.xpose.msra.mxu0 0.0
    %2152 = vmatprep.subr.mxu0 0.0
    %2153 = vmatpush1.xpose.msra.mxu0 0.0
    %2154 = vmatprep.subr.mxu0 0.0
    %2155 = vmatpush1.xpose.msra.mxu0 0.0
    %2156 = vmatprep.subr.mxu0 0.0
    %2157 = vmatpush1.xpose.msra.mxu0 %v2126
    %2158 = vmatprep.subr.mxu0 0.0
    %2159 = vmatpush1.xpose.msra.mxu0 %v2123
    %2160 = vmatprep.subr.mxu0 0.0
    %2161 = vmatpush2.xpose.msra.mxu0 0.0
    %2162 = vmatprep.subr.mxu0 0.0
    %2163 = vmatpush2.xpose.msra.mxu0 0.0
    %2164 = vmatprep.subr.mxu0 0.0
    %2165 = vmatpush2.xpose.msra.mxu0 0.0
    %2166 = vmatprep.subr.mxu0 0.0
    %2167 = vmatpush2.xpose.msra.mxu0 0.0
    %2168 = vmatprep.subr.mxu0 0.0
    %2169 = vmatpush2.xpose.msra.mxu0 0.0
    %2170 = vmatprep.subr.mxu0 0.0
    %2171 = vmatpush2.xpose.msra.mxu0 0.0
    %2172 = vmatprep.subr.mxu0 0.0
    %2173 = vmatpush2.xpose.msra.mxu0 0.0
    %2174 = vmatprep.subr.mxu0 0.0
    %2175 = vmatpush2.xpose.msra.mxu0 0.0
    %2176 = vmatprep.subr.mxu0 0.0
    %2177 = vmatpush2.xpose.msra.mxu0 0.0
    %2178 = vmatprep.subr.mxu0 0.0
    %2179 = vmatpush2.xpose.msra.mxu0 0.0
    %2180 = vmatprep.subr.mxu0 0.0
    %2181 = vmatpush2.xpose.msra.mxu0 0.0
    %2182 = vmatprep.subr.mxu0 0.0
    %2183 = vmatpush2.xpose.msra.mxu0 0.0
    %2184 = vmatprep.subr.mxu0 0.0
    %2185 = vmatpush2.xpose.msra.mxu0 0.0
    %2186 = vmatprep.subr.mxu0 0.0
    %2187 = vmatpush2.xpose.msra.mxu0 0.0
    %2188 = vmatprep.subr.mxu0 0.0
    %2189 = vmatpush2.xpose.msra.mxu0 0.0
    %2190 = vmatprep.subr.mxu0 0.0
    %2191 = vmatpush2.xpose.msra.mxu0 0.0
    %2192 = vmatprep.mubr.f32.mxu0 0.0
    %2193 = vmatmul.mubr.f32.gmra.mxu0 %v2117
    %v2194 = vpop.f32.mrf.mxu0
    %v2195 = vadd.f32 0.0, %v2194
    %v2196 = vpop.f32.mrf.mxu0
    %2197 = vmatprep.mubr.f32.mxu0 0.0
    %2198 = vmatmul.mubr.f32.gmra.mxu0 %v2120
    %v2199 = vpop.f32.mrf.mxu0
    %v2200 = vadd.f32 0.0, %v2199
    %v2201 = vpop.f32.mrf.mxu0
    %2202 = vdwg.mxu0
    %v2203 = vmul.f32 %v2195, 0.25
    %v2204 = vmul.f32 %v2200, 0.25
    %v2205 = vadd.f32 %v2203, %v131
    %v2206 = vadd.f32 %v2204, %v132
    %v2207 = vsel %vm141, %v2205, -inf
    %2208 = vmax.xlane.f32.xlu0 %v2207
    %v2209 = vpop.xlane.xlu0 %2208
    %v2210 = vsel %vm141, %v2206, -inf
    %2211 = vmax.xlane.f32.xlu0 %v2210
    %v2212 = vpop.xlane.xlu0 %2211
    %v2213 = vsub.f32 %v2205, %v2209
    %v2214 = vsub.f32 %v2206, %v2212
    %v2215 = vmul.f32 %v2213, 1.442695
    %v2216 = vpow.pop %v2215
    %v2217 = vmul.f32 %v2214, 1.442695
    %v2218 = vpow.pop %v2217
    %v2219 = vsel %vm141, %v2216, 0.0
    %2220 = vadd.xlane.f32.xlu0 %v2219
    %v2221 = vpop.xlane.xlu0 %2220
    %v2222 = vsel %vm141, %v2218, 0.0
    %2223 = vadd.xlane.f32.xlu0 %v2222
    %v2224 = vpop.xlane.xlu0 %2223
    %v2225 = vrcp.pop %v2221
    %v2226 = vrcp.pop %v2224
    %v2227 = vmul.f32 %v2216, %v2225
    %v2228 = vmul.f32 %v2218, %v2226
    %v2230 = vsel %vm141, %v2227, 0
    %v2233 = vsel %vm141, %v2228, 0
    %2235 = vmatprep.subr.mxu0 0.0
    %2236 = vmatpush1.msra.mxu0 0.0
    %2237 = vmatprep.subr.mxu0 0.0
    %2238 = vmatpush1.msra.mxu0 0.0
    %2239 = vmatprep.subr.mxu0 0.0
    %2240 = vmatpush1.msra.mxu0 0.0
    %2241 = vmatprep.subr.mxu0 0.0
    %2242 = vmatpush1.msra.mxu0 0.0
    %2243 = vmatprep.subr.mxu0 0.0
    %2244 = vmatpush1.msra.mxu0 0.0
    %2245 = vmatprep.subr.mxu0 0.0
    %2246 = vmatpush1.msra.mxu0 0.0
    %2247 = vmatprep.subr.mxu0 0.0
    %2248 = vmatpush1.msra.mxu0 0.0
    %2249 = vmatprep.subr.mxu0 0.0
    %2250 = vmatpush1.msra.mxu0 0.0
    %2251 = vmatprep.subr.mxu0 0.0
    %2252 = vmatpush1.msra.mxu0 0.0
    %2253 = vmatprep.subr.mxu0 0.0
    %2254 = vmatpush1.msra.mxu0 0.0
    %2255 = vmatprep.subr.mxu0 0.0
    %2256 = vmatpush1.msra.mxu0 0.0
    %2257 = vmatprep.subr.mxu0 0.0
    %2258 = vmatpush1.msra.mxu0 0.0
    %2259 = vmatprep.subr.mxu0 0.0
    %2260 = vmatpush1.msra.mxu0 0.0
    %2261 = vmatprep.subr.mxu0 0.0
    %2262 = vmatpush1.msra.mxu0 0.0
    %2263 = vmatprep.subr.mxu0 0.0
    %2264 = vmatpush1.msra.mxu0 %v2113
    %2265 = vmatprep.subr.mxu0 0.0
    %2266 = vmatpush1.msra.mxu0 %v2108
    %2267 = vmatprep.subr.mxu0 0.0
    %2268 = vmatpush2.msra.mxu0 0.0
    %2269 = vmatprep.subr.mxu0 0.0
    %2270 = vmatpush2.msra.mxu0 0.0
    %2271 = vmatprep.subr.mxu0 0.0
    %2272 = vmatpush2.msra.mxu0 0.0
    %2273 = vmatprep.subr.mxu0 0.0
    %2274 = vmatpush2.msra.mxu0 0.0
    %2275 = vmatprep.subr.mxu0 0.0
    %2276 = vmatpush2.msra.mxu0 0.0
    %2277 = vmatprep.subr.mxu0 0.0
    %2278 = vmatpush2.msra.mxu0 0.0
    %2279 = vmatprep.subr.mxu0 0.0
    %2280 = vmatpush2.msra.mxu0 0.0
    %2281 = vmatprep.subr.mxu0 0.0
    %2282 = vmatpush2.msra.mxu0 0.0
    %2283 = vmatprep.subr.mxu0 0.0
    %2284 = vmatpush2.msra.mxu0 0.0
    %2285 = vmatprep.subr.mxu0 0.0
    %2286 = vmatpush2.msra.mxu0 0.0
    %2287 = vmatprep.subr.mxu0 0.0
    %2288 = vmatpush2.msra.mxu0 0.0
    %2289 = vmatprep.subr.mxu0 0.0
    %2290 = vmatpush2.msra.mxu0 0.0
    %2291 = vmatprep.subr.mxu0 0.0
    %2292 = vmatpush2.msra.mxu0 0.0
    %2293 = vmatprep.subr.mxu0 0.0
    %2294 = vmatpush2.msra.mxu0 0.0
    %2295 = vmatprep.subr.mxu0 0.0
    %2296 = vmatpush2.msra.mxu0 0.0
    %2297 = vmatprep.subr.mxu0 0.0
    %2298 = vmatpush2.msra.mxu0 0.0
    %2299 = vmatprep.mubr.f32.mxu0 0.0
    %2300 = vmatmul.mubr.f32.gmra.mxu0 %v2230
    %v2301 = vpop.f32.mrf.mxu0
    %v2302 = vadd.f32 0.0, %v2301
    %v2303 = vpop.f32.mrf.mxu0
    %2304 = vmatprep.mubr.f32.mxu0 0.0
    %2305 = vmatmul.mubr.f32.gmra.mxu0 %v2233
    %v2306 = vpop.f32.mrf.mxu0
    %v2307 = vadd.f32 0.0, %v2306
    %v2308 = vpop.f32.mrf.mxu0
    %2309 = vdwg.mxu0
    %2310 = vrot.lane.b32.xlu0 %v1825, 80
    %v2311 = vpop.permute.xlu0 %2310
    %2312 = vrot.lane.b32.xlu0 %v1827, 80
    %v2313 = vpop.permute.xlu0 %2312
    %2314 = vrot.lane.b32.xlu0 %v1829, 80
    %v2315 = vpop.permute.xlu0 %2314
    %2316 = vrot.lane.b32.xlu0 %v1831, 80
    %v2317 = vpop.permute.xlu0 %2316
    %2322 = vrot.lane.b32.xlu0 %v1849, 80
    %v2323 = vpop.permute.xlu0 %2322
    %2325 = vmatprep.subr.mxu0 0.0
    %2326 = vmatpush1.msra.mxu0 0.0
    %2327 = vmatprep.subr.mxu0 0.0
    %2328 = vmatpush1.msra.mxu0 0.0
    %2329 = vmatprep.subr.mxu0 0.0
    %2330 = vmatpush1.msra.mxu0 0.0
    %2331 = vmatprep.subr.mxu0 0.0
    %2332 = vmatpush1.msra.mxu0 0.0
    %2333 = vmatprep.subr.mxu0 0.0
    %2334 = vmatpush1.msra.mxu0 0.0
    %2335 = vmatprep.subr.mxu0 0.0
    %2336 = vmatpush1.msra.mxu0 0.0
    %2337 = vmatprep.subr.mxu0 0.0
    %2338 = vmatpush1.msra.mxu0 0.0
    %2339 = vmatprep.subr.mxu0 0.0
    %2340 = vmatpush1.msra.mxu0 0.0
    %2341 = vmatprep.subr.mxu0 0.0
    %2342 = vmatpush1.msra.mxu0 0.0
    %2343 = vmatprep.subr.mxu0 0.0
    %2344 = vmatpush1.msra.mxu0 0.0
    %2345 = vmatprep.subr.mxu0 0.0
    %2346 = vmatpush1.msra.mxu0 0.0
    %2347 = vmatprep.subr.mxu0 0.0
    %2348 = vmatpush1.msra.mxu0 0.0
    %2349 = vmatprep.subr.mxu0 0.0
    %2350 = vmatpush1.msra.mxu0 %v2317
    %2351 = vmatprep.subr.mxu0 0.0
    %2352 = vmatpush1.msra.mxu0 %v2315
    %2353 = vmatprep.subr.mxu0 0.0
    %2354 = vmatpush1.msra.mxu0 %v2313
    %2355 = vmatprep.subr.mxu0 0.0
    %2356 = vmatpush1.msra.mxu0 %v2311
    %2357 = vmatprep.subr.mxu0 0.0
    %2358 = vmatpush2.msra.mxu0 0.0
    %2359 = vmatprep.subr.mxu0 0.0
    %2360 = vmatpush2.msra.mxu0 0.0
    %2361 = vmatprep.subr.mxu0 0.0
    %2362 = vmatpush2.msra.mxu0 0.0
    %2363 = vmatprep.subr.mxu0 0.0
    %2364 = vmatpush2.msra.mxu0 0.0
    %2365 = vmatprep.subr.mxu0 0.0
    %2366 = vmatpush2.msra.mxu0 0.0
    %2367 = vmatprep.subr.mxu0 0.0
    %2368 = vmatpush2.msra.mxu0 0.0
    %2369 = vmatprep.subr.mxu0 0.0
    %2370 = vmatpush2.msra.mxu0 0.0
    %2371 = vmatprep.subr.mxu0 0.0
    %2372 = vmatpush2.msra.mxu0 0.0
    %2373 = vmatprep.subr.mxu0 0.0
    %2374 = vmatpush2.msra.mxu0 0.0
    %2375 = vmatprep.subr.mxu0 0.0
    %2376 = vmatpush2.msra.mxu0 0.0
    %2377 = vmatprep.subr.mxu0 0.0
    %2378 = vmatpush2.msra.mxu0 0.0
    %2379 = vmatprep.subr.mxu0 0.0
    %2380 = vmatpush2.msra.mxu0 0.0
    %2381 = vmatprep.subr.mxu0 0.0
    %2382 = vmatpush2.msra.mxu0 0.0
    %2383 = vmatprep.subr.mxu0 0.0
    %2384 = vmatpush2.msra.mxu0 0.0
    %2385 = vmatprep.subr.mxu0 0.0
    %2386 = vmatpush2.msra.mxu0 0.0
    %2387 = vmatprep.subr.mxu0 0.0
    %2388 = vmatpush2.msra.mxu0 0.0
    %2389 = vmatprep.mubr.f32.mxu0 0.0
    %2390 = vmatmul.mubr.f32.gmra.mxu0 %v1851
    %v2391 = vpop.f32.mrf.mxu0
    %v2392 = vadd.f32 %v2323, %v2391
    %v2393 = vpop.f32.mrf.mxu0
    %2394 = vmatprep.mubr.f32.mxu0 0.0
    %2395 = vmatmul.mubr.f32.gmra.mxu0 %v1854
    %v2396 = vpop.f32.mrf.mxu0
    %v2397 = vadd.f32 %v2323, %v2396
    %v2398 = vpop.f32.mrf.mxu0
    %2399 = vdwg.mxu0
    %2400 = vrot.lane.b32.xlu0 %v1825, 64
    %v2401 = vpop.permute.xlu0 %2400
    %2402 = vrot.lane.b32.xlu0 %v1827, 64
    %v2403 = vpop.permute.xlu0 %2402
    %2404 = vrot.lane.b32.xlu0 %v1829, 64
    %v2405 = vpop.permute.xlu0 %2404
    %2406 = vrot.lane.b32.xlu0 %v1831, 64
    %v2407 = vpop.permute.xlu0 %2406
    %2412 = vrot.lane.b32.xlu0 %v1849, 64
    %v2413 = vpop.permute.xlu0 %2412
    %2415 = vmatprep.subr.mxu0 0.0
    %2416 = vmatpush1.msra.mxu0 0.0
    %2417 = vmatprep.subr.mxu0 0.0
    %2418 = vmatpush1.msra.mxu0 0.0
    %2419 = vmatprep.subr.mxu0 0.0
    %2420 = vmatpush1.msra.mxu0 0.0
    %2421 = vmatprep.subr.mxu0 0.0
    %2422 = vmatpush1.msra.mxu0 0.0
    %2423 = vmatprep.subr.mxu0 0.0
    %2424 = vmatpush1.msra.mxu0 0.0
    %2425 = vmatprep.subr.mxu0 0.0
    %2426 = vmatpush1.msra.mxu0 0.0
    %2427 = vmatprep.subr.mxu0 0.0
    %2428 = vmatpush1.msra.mxu0 0.0
    %2429 = vmatprep.subr.mxu0 0.0
    %2430 = vmatpush1.msra.mxu0 0.0
    %2431 = vmatprep.subr.mxu0 0.0
    %2432 = vmatpush1.msra.mxu0 0.0
    %2433 = vmatprep.subr.mxu0 0.0
    %2434 = vmatpush1.msra.mxu0 0.0
    %2435 = vmatprep.subr.mxu0 0.0
    %2436 = vmatpush1.msra.mxu0 0.0
    %2437 = vmatprep.subr.mxu0 0.0
    %2438 = vmatpush1.msra.mxu0 0.0
    %2439 = vmatprep.subr.mxu0 0.0
    %2440 = vmatpush1.msra.mxu0 %v2407
    %2441 = vmatprep.subr.mxu0 0.0
    %2442 = vmatpush1.msra.mxu0 %v2405
    %2443 = vmatprep.subr.mxu0 0.0
    %2444 = vmatpush1.msra.mxu0 %v2403
    %2445 = vmatprep.subr.mxu0 0.0
    %2446 = vmatpush1.msra.mxu0 %v2401
    %2447 = vmatprep.subr.mxu0 0.0
    %2448 = vmatpush2.msra.mxu0 0.0
    %2449 = vmatprep.subr.mxu0 0.0
    %2450 = vmatpush2.msra.mxu0 0.0
    %2451 = vmatprep.subr.mxu0 0.0
    %2452 = vmatpush2.msra.mxu0 0.0
    %2453 = vmatprep.subr.mxu0 0.0
    %2454 = vmatpush2.msra.mxu0 0.0
    %2455 = vmatprep.subr.mxu0 0.0
    %2456 = vmatpush2.msra.mxu0 0.0
    %2457 = vmatprep.subr.mxu0 0.0
    %2458 = vmatpush2.msra.mxu0 0.0
    %2459 = vmatprep.subr.mxu0 0.0
    %2460 = vmatpush2.msra.mxu0 0.0
    %2461 = vmatprep.subr.mxu0 0.0
    %2462 = vmatpush2.msra.mxu0 0.0
    %2463 = vmatprep.subr.mxu0 0.0
    %2464 = vmatpush2.msra.mxu0 0.0
    %2465 = vmatprep.subr.mxu0 0.0
    %2466 = vmatpush2.msra.mxu0 0.0
    %2467 = vmatprep.subr.mxu0 0.0
    %2468 = vmatpush2.msra.mxu0 0.0
    %2469 = vmatprep.subr.mxu0 0.0
    %2470 = vmatpush2.msra.mxu0 0.0
    %2471 = vmatprep.subr.mxu0 0.0
    %2472 = vmatpush2.msra.mxu0 0.0
    %2473 = vmatprep.subr.mxu0 0.0
    %2474 = vmatpush2.msra.mxu0 0.0
    %2475 = vmatprep.subr.mxu0 0.0
    %2476 = vmatpush2.msra.mxu0 0.0
    %2477 = vmatprep.subr.mxu0 0.0
    %2478 = vmatpush2.msra.mxu0 0.0
    %2479 = vmatprep.mubr.f32.mxu0 0.0
    %2480 = vmatmul.mubr.f32.gmra.mxu0 %v1851
    %v2481 = vpop.f32.mrf.mxu0
    %v2482 = vadd.f32 %v2413, %v2481
    %v2483 = vpop.f32.mrf.mxu0
    %2484 = vmatprep.mubr.f32.mxu0 0.0
    %2485 = vmatmul.mubr.f32.gmra.mxu0 %v1854
    %v2486 = vpop.f32.mrf.mxu0
    %v2487 = vadd.f32 %v2413, %v2486
    %v2488 = vpop.f32.mrf.mxu0
    %2489 = vdwg.mxu0
    %2490 = vrot.lane.b32.xlu0 %v1825, 48
    %v2491 = vpop.permute.xlu0 %2490
    %2492 = vrot.lane.b32.xlu0 %v1827, 48
    %v2493 = vpop.permute.xlu0 %2492
    %2494 = vrot.lane.b32.xlu0 %v1829, 48
    %v2495 = vpop.permute.xlu0 %2494
    %2496 = vrot.lane.b32.xlu0 %v1831, 48
    %v2497 = vpop.permute.xlu0 %2496
    %2502 = vrot.lane.b32.xlu0 %v1849, 48
    %v2503 = vpop.permute.xlu0 %2502
    %2505 = vmatprep.subr.mxu0 0.0
    %2506 = vmatpush1.msra.mxu0 0.0
    %2507 = vmatprep.subr.mxu0 0.0
    %2508 = vmatpush1.msra.mxu0 0.0
    %2509 = vmatprep.subr.mxu0 0.0
    %2510 = vmatpush1.msra.mxu0 0.0
    %2511 = vmatprep.subr.mxu0 0.0
    %2512 = vmatpush1.msra.mxu0 0.0
    %2513 = vmatprep.subr.mxu0 0.0
    %2514 = vmatpush1.msra.mxu0 0.0
    %2515 = vmatprep.subr.mxu0 0.0
    %2516 = vmatpush1.msra.mxu0 0.0
    %2517 = vmatprep.subr.mxu0 0.0
    %2518 = vmatpush1.msra.mxu0 0.0
    %2519 = vmatprep.subr.mxu0 0.0
    %2520 = vmatpush1.msra.mxu0 0.0
    %2521 = vmatprep.subr.mxu0 0.0
    %2522 = vmatpush1.msra.mxu0 0.0
    %2523 = vmatprep.subr.mxu0 0.0
    %2524 = vmatpush1.msra.mxu0 0.0
    %2525 = vmatprep.subr.mxu0 0.0
    %2526 = vmatpush1.msra.mxu0 0.0
    %2527 = vmatprep.subr.mxu0 0.0
    %2528 = vmatpush1.msra.mxu0 0.0
    %2529 = vmatprep.subr.mxu0 0.0
    %2530 = vmatpush1.msra.mxu0 %v2497
    %2531 = vmatprep.subr.mxu0 0.0
    %2532 = vmatpush1.msra.mxu0 %v2495
    %2533 = vmatprep.subr.mxu0 0.0
    %2534 = vmatpush1.msra.mxu0 %v2493
    %2535 = vmatprep.subr.mxu0 0.0
    %2536 = vmatpush1.msra.mxu0 %v2491
    %2537 = vmatprep.subr.mxu0 0.0
    %2538 = vmatpush2.msra.mxu0 0.0
    %2539 = vmatprep.subr.mxu0 0.0
    %2540 = vmatpush2.msra.mxu0 0.0
    %2541 = vmatprep.subr.mxu0 0.0
    %2542 = vmatpush2.msra.mxu0 0.0
    %2543 = vmatprep.subr.mxu0 0.0
    %2544 = vmatpush2.msra.mxu0 0.0
    %2545 = vmatprep.subr.mxu0 0.0
    %2546 = vmatpush2.msra.mxu0 0.0
    %2547 = vmatprep.subr.mxu0 0.0
    %2548 = vmatpush2.msra.mxu0 0.0
    %2549 = vmatprep.subr.mxu0 0.0
    %2550 = vmatpush2.msra.mxu0 0.0
    %2551 = vmatprep.subr.mxu0 0.0
    %2552 = vmatpush2.msra.mxu0 0.0
    %2553 = vmatprep.subr.mxu0 0.0
    %2554 = vmatpush2.msra.mxu0 0.0
    %2555 = vmatprep.subr.mxu0 0.0
    %2556 = vmatpush2.msra.mxu0 0.0
    %2557 = vmatprep.subr.mxu0 0.0
    %2558 = vmatpush2.msra.mxu0 0.0
    %2559 = vmatprep.subr.mxu0 0.0
    %2560 = vmatpush2.msra.mxu0 0.0
    %2561 = vmatprep.subr.mxu0 0.0
    %2562 = vmatpush2.msra.mxu0 0.0
    %2563 = vmatprep.subr.mxu0 0.0
    %2564 = vmatpush2.msra.mxu0 0.0
    %2565 = vmatprep.subr.mxu0 0.0
    %2566 = vmatpush2.msra.mxu0 0.0
    %2567 = vmatprep.subr.mxu0 0.0
    %2568 = vmatpush2.msra.mxu0 0.0
    %2569 = vmatprep.mubr.f32.mxu0 0.0
    %2570 = vmatmul.mubr.f32.gmra.mxu0 %v1851
    %v2571 = vpop.f32.mrf.mxu0
    %v2572 = vadd.f32 %v2503, %v2571
    %v2573 = vpop.f32.mrf.mxu0
    %2574 = vmatprep.mubr.f32.mxu0 0.0
    %2575 = vmatmul.mubr.f32.gmra.mxu0 %v1854
    %v2576 = vpop.f32.mrf.mxu0
    %v2577 = vadd.f32 %v2503, %v2576
    %v2578 = vpop.f32.mrf.mxu0
    %2579 = vdwg.mxu0
    %v2581 = vsel %vm141, %v2392, 0
    %v2584 = vsel %vm141, %v2397, 0
    %v2587 = vsel %vm141, %v2482, 0
    %v2590 = vsel %vm141, %v2487, 0
    %2592 = vmatprep.subr.mxu0 0.0
    %2593 = vmatpush1.xpose.msra.mxu0 0.0
    %2594 = vmatprep.subr.mxu0 0.0
    %2595 = vmatpush1.xpose.msra.mxu0 0.0
    %2596 = vmatprep.subr.mxu0 0.0
    %2597 = vmatpush1.xpose.msra.mxu0 0.0
    %2598 = vmatprep.subr.mxu0 0.0
    %2599 = vmatpush1.xpose.msra.mxu0 0.0
    %2600 = vmatprep.subr.mxu0 0.0
    %2601 = vmatpush1.xpose.msra.mxu0 0.0
    %2602 = vmatprep.subr.mxu0 0.0
    %2603 = vmatpush1.xpose.msra.mxu0 0.0
    %2604 = vmatprep.subr.mxu0 0.0
    %2605 = vmatpush1.xpose.msra.mxu0 0.0
    %2606 = vmatprep.subr.mxu0 0.0
    %2607 = vmatpush1.xpose.msra.mxu0 0.0
    %2608 = vmatprep.subr.mxu0 0.0
    %2609 = vmatpush1.xpose.msra.mxu0 0.0
    %2610 = vmatprep.subr.mxu0 0.0
    %2611 = vmatpush1.xpose.msra.mxu0 0.0
    %2612 = vmatprep.subr.mxu0 0.0
    %2613 = vmatpush1.xpose.msra.mxu0 0.0
    %2614 = vmatprep.subr.mxu0 0.0
    %2615 = vmatpush1.xpose.msra.mxu0 0.0
    %2616 = vmatprep.subr.mxu0 0.0
    %2617 = vmatpush1.xpose.msra.mxu0 0.0
    %2618 = vmatprep.subr.mxu0 0.0
    %2619 = vmatpush1.xpose.msra.mxu0 0.0
    %2620 = vmatprep.subr.mxu0 0.0
    %2621 = vmatpush1.xpose.msra.mxu0 %v2590
    %2622 = vmatprep.subr.mxu0 0.0
    %2623 = vmatpush1.xpose.msra.mxu0 %v2587
    %2624 = vmatprep.subr.mxu0 0.0
    %2625 = vmatpush2.xpose.msra.mxu0 0.0
    %2626 = vmatprep.subr.mxu0 0.0
    %2627 = vmatpush2.xpose.msra.mxu0 0.0
    %2628 = vmatprep.subr.mxu0 0.0
    %2629 = vmatpush2.xpose.msra.mxu0 0.0
    %2630 = vmatprep.subr.mxu0 0.0
    %2631 = vmatpush2.xpose.msra.mxu0 0.0
    %2632 = vmatprep.subr.mxu0 0.0
    %2633 = vmatpush2.xpose.msra.mxu0 0.0
    %2634 = vmatprep.subr.mxu0 0.0
    %2635 = vmatpush2.xpose.msra.mxu0 0.0
    %2636 = vmatprep.subr.mxu0 0.0
    %2637 = vmatpush2.xpose.msra.mxu0 0.0
    %2638 = vmatprep.subr.mxu0 0.0
    %2639 = vmatpush2.xpose.msra.mxu0 0.0
    %2640 = vmatprep.subr.mxu0 0.0
    %2641 = vmatpush2.xpose.msra.mxu0 0.0
    %2642 = vmatprep.subr.mxu0 0.0
    %2643 = vmatpush2.xpose.msra.mxu0 0.0
    %2644 = vmatprep.subr.mxu0 0.0
    %2645 = vmatpush2.xpose.msra.mxu0 0.0
    %2646 = vmatprep.subr.mxu0 0.0
    %2647 = vmatpush2.xpose.msra.mxu0 0.0
    %2648 = vmatprep.subr.mxu0 0.0
    %2649 = vmatpush2.xpose.msra.mxu0 0.0
    %2650 = vmatprep.subr.mxu0 0.0
    %2651 = vmatpush2.xpose.msra.mxu0 0.0
    %2652 = vmatprep.subr.mxu0 0.0
    %2653 = vmatpush2.xpose.msra.mxu0 0.0
    %2654 = vmatprep.subr.mxu0 0.0
    %2655 = vmatpush2.xpose.msra.mxu0 0.0
    %2656 = vmatprep.mubr.f32.mxu0 0.0
    %2657 = vmatmul.mubr.f32.gmra.mxu0 %v2581
    %v2658 = vpop.f32.mrf.mxu0
    %v2659 = vadd.f32 0.0, %v2658
    %v2660 = vpop.f32.mrf.mxu0
    %2661 = vmatprep.mubr.f32.mxu0 0.0
    %2662 = vmatmul.mubr.f32.gmra.mxu0 %v2584
    %v2663 = vpop.f32.mrf.mxu0
    %v2664 = vadd.f32 0.0, %v2663
    %v2665 = vpop.f32.mrf.mxu0
    %2666 = vdwg.mxu0
    %v2667 = vmul.f32 %v2659, 0.25
    %v2668 = vmul.f32 %v2664, 0.25
    %v2669 = vadd.f32 %v2667, %v131
    %v2670 = vadd.f32 %v2668, %v132
    %v2671 = vsel %vm141, %v2669, -inf
    %2672 = vmax.xlane.f32.xlu0 %v2671
    %v2673 = vpop.xlane.xlu0 %2672
    %v2674 = vsel %vm141, %v2670, -inf
    %2675 = vmax.xlane.f32.xlu0 %v2674
    %v2676 = vpop.xlane.xlu0 %2675
    %v2677 = vsub.f32 %v2669, %v2673
    %v2678 = vsub.f32 %v2670, %v2676
    %v2679 = vmul.f32 %v2677, 1.442695
    %v2680 = vpow.pop %v2679
    %v2681 = vmul.f32 %v2678, 1.442695
    %v2682 = vpow.pop %v2681
    %v2683 = vsel %vm141, %v2680, 0.0
    %2684 = vadd.xlane.f32.xlu0 %v2683
    %v2685 = vpop.xlane.xlu0 %2684
    %v2686 = vsel %vm141, %v2682, 0.0
    %2687 = vadd.xlane.f32.xlu0 %v2686
    %v2688 = vpop.xlane.xlu0 %2687
    %v2689 = vrcp.pop %v2685
    %v2690 = vrcp.pop %v2688
    %v2691 = vmul.f32 %v2680, %v2689
    %v2692 = vmul.f32 %v2682, %v2690
    %v2694 = vsel %vm141, %v2691, 0
    %v2697 = vsel %vm141, %v2692, 0
    %2699 = vmatprep.subr.mxu0 0.0
    %2700 = vmatpush1.msra.mxu0 0.0
    %2701 = vmatprep.subr.mxu0 0.0
    %2702 = vmatpush1.msra.mxu0 0.0
    %2703 = vmatprep.subr.mxu0 0.0
    %2704 = vmatpush1.msra.mxu0 0.0
    %2705 = vmatprep.subr.mxu0 0.0
    %2706 = vmatpush1.msra.mxu0 0.0
    %2707 = vmatprep.subr.mxu0 0.0
    %2708 = vmatpush1.msra.mxu0 0.0
    %2709 = vmatprep.subr.mxu0 0.0
    %2710 = vmatpush1.msra.mxu0 0.0
    %2711 = vmatprep.subr.mxu0 0.0
    %2712 = vmatpush1.msra.mxu0 0.0
    %2713 = vmatprep.subr.mxu0 0.0
    %2714 = vmatpush1.msra.mxu0 0.0
    %2715 = vmatprep.subr.mxu0 0.0
    %2716 = vmatpush1.msra.mxu0 0.0
    %2717 = vmatprep.subr.mxu0 0.0
    %2718 = vmatpush1.msra.mxu0 0.0
    %2719 = vmatprep.subr.mxu0 0.0
    %2720 = vmatpush1.msra.mxu0 0.0
    %2721 = vmatprep.subr.mxu0 0.0
    %2722 = vmatpush1.msra.mxu0 0.0
    %2723 = vmatprep.subr.mxu0 0.0
    %2724 = vmatpush1.msra.mxu0 0.0
    %2725 = vmatprep.subr.mxu0 0.0
    %2726 = vmatpush1.msra.mxu0 0.0
    %2727 = vmatprep.subr.mxu0 0.0
    %2728 = vmatpush1.msra.mxu0 %v2577
    %2729 = vmatprep.subr.mxu0 0.0
    %2730 = vmatpush1.msra.mxu0 %v2572
    %2731 = vmatprep.subr.mxu0 0.0
    %2732 = vmatpush2.msra.mxu0 0.0
    %2733 = vmatprep.subr.mxu0 0.0
    %2734 = vmatpush2.msra.mxu0 0.0
    %2735 = vmatprep.subr.mxu0 0.0
    %2736 = vmatpush2.msra.mxu0 0.0
    %2737 = vmatprep.subr.mxu0 0.0
    %2738 = vmatpush2.msra.mxu0 0.0
    %2739 = vmatprep.subr.mxu0 0.0
    %2740 = vmatpush2.msra.mxu0 0.0
    %2741 = vmatprep.subr.mxu0 0.0
    %2742 = vmatpush2.msra.mxu0 0.0
    %2743 = vmatprep.subr.mxu0 0.0
    %2744 = vmatpush2.msra.mxu0 0.0
    %2745 = vmatprep.subr.mxu0 0.0
    %2746 = vmatpush2.msra.mxu0 0.0
    %2747 = vmatprep.subr.mxu0 0.0
    %2748 = vmatpush2.msra.mxu0 0.0
    %2749 = vmatprep.subr.mxu0 0.0
    %2750 = vmatpush2.msra.mxu0 0.0
    %2751 = vmatprep.subr.mxu0 0.0
    %2752 = vmatpush2.msra.mxu0 0.0
    %2753 = vmatprep.subr.mxu0 0.0
    %2754 = vmatpush2.msra.mxu0 0.0
    %2755 = vmatprep.subr.mxu0 0.0
    %2756 = vmatpush2.msra.mxu0 0.0
    %2757 = vmatprep.subr.mxu0 0.0
    %2758 = vmatpush2.msra.mxu0 0.0
    %2759 = vmatprep.subr.mxu0 0.0
    %2760 = vmatpush2.msra.mxu0 0.0
    %2761 = vmatprep.subr.mxu0 0.0
    %2762 = vmatpush2.msra.mxu0 0.0
    %2763 = vmatprep.mubr.f32.mxu0 0.0
    %2764 = vmatmul.mubr.f32.gmra.mxu0 %v2694
    %v2765 = vpop.f32.mrf.mxu0
    %v2766 = vadd.f32 0.0, %v2765
    %v2767 = vpop.f32.mrf.mxu0
    %2768 = vmatprep.mubr.f32.mxu0 0.0
    %2769 = vmatmul.mubr.f32.gmra.mxu0 %v2697
    %v2770 = vpop.f32.mrf.mxu0
    %v2771 = vadd.f32 0.0, %v2770
    %v2772 = vpop.f32.mrf.mxu0
    %2773 = vdwg.mxu0
    %v2775 = vsel %vm141, %v2766, 0
    %v2778 = vsel %vm141, %v2771, 0
    %2780 = vmatprep.subr.mxu0 0.0
    %2781 = vmatpush1.msra.mxu0 0.0
    %2782 = vmatprep.subr.mxu0 0.0
    %2783 = vmatpush1.msra.mxu0 0.0
    %2784 = vmatprep.subr.mxu0 0.0
    %2785 = vmatpush1.msra.mxu0 0.0
    %2786 = vmatprep.subr.mxu0 0.0
    %2787 = vmatpush1.msra.mxu0 0.0
    %2788 = vmatprep.subr.mxu0 0.0
    %2789 = vmatpush1.msra.mxu0 0.0
    %2790 = vmatprep.subr.mxu0 0.0
    %2791 = vmatpush1.msra.mxu0 0.0
    %2792 = vmatprep.subr.mxu0 0.0
    %2793 = vmatpush1.msra.mxu0 0.0
    %2794 = vmatprep.subr.mxu0 0.0
    %2795 = vmatpush1.msra.mxu0 0.0
    %2796 = vmatprep.subr.mxu0 0.0
    %2797 = vmatpush1.msra.mxu0 0.0
    %2798 = vmatprep.subr.mxu0 0.0
    %2799 = vmatpush1.msra.mxu0 0.0
    %2800 = vmatprep.subr.mxu0 0.0
    %2801 = vmatpush1.msra.mxu0 0.0
    %2802 = vmatprep.subr.mxu0 0.0
    %2803 = vmatpush1.msra.mxu0 0.0
    %2804 = vmatprep.subr.mxu0 0.0
    %2805 = vmatpush1.msra.mxu0 0.0
    %2806 = vmatprep.subr.mxu0 0.0
    %2807 = vmatpush1.msra.mxu0 0.0
    %2808 = vmatprep.subr.mxu0 0.0
    %2809 = vmatpush1.msra.mxu0 %v1837
    %2810 = vmatprep.subr.mxu0 0.0
    %2811 = vmatpush1.msra.mxu0 %v1836
    %2812 = vmatprep.subr.mxu0 0.0
    %2813 = vmatpush2.msra.mxu0 0.0
    %2814 = vmatprep.subr.mxu0 0.0
    %2815 = vmatpush2.msra.mxu0 0.0
    %2816 = vmatprep.subr.mxu0 0.0
    %2817 = vmatpush2.msra.mxu0 0.0
    %2818 = vmatprep.subr.mxu0 0.0
    %2819 = vmatpush2.msra.mxu0 0.0
    %2820 = vmatprep.subr.mxu0 0.0
    %2821 = vmatpush2.msra.mxu0 0.0
    %2822 = vmatprep.subr.mxu0 0.0
    %2823 = vmatpush2.msra.mxu0 0.0
    %2824 = vmatprep.subr.mxu0 0.0
    %2825 = vmatpush2.msra.mxu0 0.0
    %2826 = vmatprep.subr.mxu0 0.0
    %2827 = vmatpush2.msra.mxu0 0.0
    %2828 = vmatprep.subr.mxu0 0.0
    %2829 = vmatpush2.msra.mxu0 0.0
    %2830 = vmatprep.subr.mxu0 0.0
    %2831 = vmatpush2.msra.mxu0 0.0
    %2832 = vmatprep.subr.mxu0 0.0
    %2833 = vmatpush2.msra.mxu0 0.0
    %2834 = vmatprep.subr.mxu0 0.0
    %2835 = vmatpush2.msra.mxu0 0.0
    %2836 = vmatprep.subr.mxu0 0.0
    %2837 = vmatpush2.msra.mxu0 0.0
    %2838 = vmatprep.subr.mxu0 0.0
    %2839 = vmatpush2.msra.mxu0 0.0
    %2840 = vmatprep.subr.mxu0 0.0
    %2841 = vmatpush2.msra.mxu0 0.0
    %2842 = vmatprep.subr.mxu0 0.0
    %2843 = vmatpush2.msra.mxu0 0.0
    %2844 = vmatprep.mubr.f32.mxu0 0.0
    %2845 = vmatmul.mubr.f32.gmra.mxu0 %v2775
    %v2846 = vpop.f32.mrf.mxu0
    %v2847 = vadd.f32 0.0, %v2846
    %v2848 = vpop.f32.mrf.mxu0
    %2849 = vmatprep.mubr.f32.mxu0 0.0
    %2850 = vmatmul.mubr.f32.gmra.mxu0 %v2778
    %v2851 = vpop.f32.mrf.mxu0
    %v2852 = vadd.f32 0.0, %v2851
    %v2853 = vpop.f32.mrf.mxu0
    %2854 = vdwg.mxu0
    %v2856 = vsel %vm141, %v2302, 0
    %v2859 = vsel %vm141, %v2307, 0
    %2861 = vmatprep.subr.mxu0 0.0
    %2862 = vmatpush1.msra.mxu0 0.0
    %2863 = vmatprep.subr.mxu0 0.0
    %2864 = vmatpush1.msra.mxu0 0.0
    %2865 = vmatprep.subr.mxu0 0.0
    %2866 = vmatpush1.msra.mxu0 0.0
    %2867 = vmatprep.subr.mxu0 0.0
    %2868 = vmatpush1.msra.mxu0 0.0
    %2869 = vmatprep.subr.mxu0 0.0
    %2870 = vmatpush1.msra.mxu0 0.0
    %2871 = vmatprep.subr.mxu0 0.0
    %2872 = vmatpush1.msra.mxu0 0.0
    %2873 = vmatprep.subr.mxu0 0.0
    %2874 = vmatpush1.msra.mxu0 0.0
    %2875 = vmatprep.subr.mxu0 0.0
    %2876 = vmatpush1.msra.mxu0 0.0
    %2877 = vmatprep.subr.mxu0 0.0
    %2878 = vmatpush1.msra.mxu0 0.0
    %2879 = vmatprep.subr.mxu0 0.0
    %2880 = vmatpush1.msra.mxu0 0.0
    %2881 = vmatprep.subr.mxu0 0.0
    %2882 = vmatpush1.msra.mxu0 0.0
    %2883 = vmatprep.subr.mxu0 0.0
    %2884 = vmatpush1.msra.mxu0 0.0
    %2885 = vmatprep.subr.mxu0 0.0
    %2886 = vmatpush1.msra.mxu0 0.0
    %2887 = vmatprep.subr.mxu0 0.0
    %2888 = vmatpush1.msra.mxu0 0.0
    %2889 = vmatprep.subr.mxu0 0.0
    %2890 = vmatpush1.msra.mxu0 %v1835
    %2891 = vmatprep.subr.mxu0 0.0
    %2892 = vmatpush1.msra.mxu0 %v1834
    %2893 = vmatprep.subr.mxu0 0.0
    %2894 = vmatpush2.msra.mxu0 0.0
    %2895 = vmatprep.subr.mxu0 0.0
    %2896 = vmatpush2.msra.mxu0 0.0
    %2897 = vmatprep.subr.mxu0 0.0
    %2898 = vmatpush2.msra.mxu0 0.0
    %2899 = vmatprep.subr.mxu0 0.0
    %2900 = vmatpush2.msra.mxu0 0.0
    %2901 = vmatprep.subr.mxu0 0.0
    %2902 = vmatpush2.msra.mxu0 0.0
    %2903 = vmatprep.subr.mxu0 0.0
    %2904 = vmatpush2.msra.mxu0 0.0
    %2905 = vmatprep.subr.mxu0 0.0
    %2906 = vmatpush2.msra.mxu0 0.0
    %2907 = vmatprep.subr.mxu0 0.0
    %2908 = vmatpush2.msra.mxu0 0.0
    %2909 = vmatprep.subr.mxu0 0.0
    %2910 = vmatpush2.msra.mxu0 0.0
    %2911 = vmatprep.subr.mxu0 0.0
    %2912 = vmatpush2.msra.mxu0 0.0
    %2913 = vmatprep.subr.mxu0 0.0
    %2914 = vmatpush2.msra.mxu0 0.0
    %2915 = vmatprep.subr.mxu0 0.0
    %2916 = vmatpush2.msra.mxu0 0.0
    %2917 = vmatprep.subr.mxu0 0.0
    %2918 = vmatpush2.msra.mxu0 0.0
    %2919 = vmatprep.subr.mxu0 0.0
    %2920 = vmatpush2.msra.mxu0 0.0
    %2921 = vmatprep.subr.mxu0 0.0
    %2922 = vmatpush2.msra.mxu0 0.0
    %2923 = vmatprep.subr.mxu0 0.0
    %2924 = vmatpush2.msra.mxu0 0.0
    %2925 = vmatprep.mubr.f32.mxu0 0.0
    %2926 = vmatmul.mubr.f32.gmra.mxu0 %v2856
    %v2927 = vpop.f32.mrf.mxu0
    %v2928 = vadd.f32 %v2847, %v2927
    %v2929 = vpop.f32.mrf.mxu0
    %2930 = vmatprep.mubr.f32.mxu0 0.0
    %2931 = vmatmul.mubr.f32.gmra.mxu0 %v2859
    %v2932 = vpop.f32.mrf.mxu0
    %v2933 = vadd.f32 %v2852, %v2932
    %v2934 = vpop.f32.mrf.mxu0
    %2935 = vdwg.mxu0
    %2936 = vrot.lane.b32.xlu0 %v1849, 32
    %v2937 = vpop.permute.xlu0 %2936
    %v2939 = vadd.f32 %v2928, %v2937
    %v2940 = vadd.f32 %v2933, %v2937
    %v2941 = vadd.f32 %v1822, %v2939
    %v2942 = vadd.f32 %v1823, %v2940
    %v2943 = vsel %vm373, %v2941, 0.0
    %2944 = vadd.xlane.f32.xlu0 %v2943
    %v2945 = vpop.xlane.xlu0 %2944
    %v2946 = vsel %vm373, %v2942, 0.0
    %2947 = vadd.xlane.f32.xlu0 %v2946
    %v2948 = vpop.xlane.xlu0 %2947
    %v2949 = vmul.f32 %v2945, %v380
    %v2950 = vmul.f32 %v2948, %v380
    %v2951 = vsub.f32 %v2941, %v2949
    %v2952 = vsub.f32 %v2942, %v2950
    %v2953 = vmul.f32 %v2951, %v2951
    %v2954 = vmul.f32 %v2952, %v2952
    %v2955 = vsel %vm373, %v2953, 0.0
    %2956 = vadd.xlane.f32.xlu0 %v2955
    %v2957 = vpop.xlane.xlu0 %2956
    %v2958 = vsel %vm373, %v2954, 0.0
    %2959 = vadd.xlane.f32.xlu0 %v2958
    %v2960 = vpop.xlane.xlu0 %2959
    %v2961 = vmul.f32 %v2957, %v380
    %v2962 = vmul.f32 %v2960, %v380
    %v2963 = vadd.f32 %v2961, 1e-05
    %v2964 = vadd.f32 %v2962, 1e-05
    %v2965 = vrsqrt.pop %v2963
    %v2966 = vrsqrt.pop %v2964
    %v2967 = vmul.f32 %v2951, %v2965
    %v2968 = vmul.f32 %v2952, %v2966
    %v2969 = vlaneseq
    %v2970 = vshrl.u32 %v2969, 7
    %v2971 = vsub.s32 4, %v2970
    %v2972 = vrot.slane %v413, %v2971
    %v2973 = vmul.f32 %v2967, %v2972
    %v2974 = vmul.f32 %v2968, %v2972
    %2976 = vrot.lane.b32.xlu0 %v2972, 96
    %v2977 = vpop.permute.xlu0 %2976
    %v2979 = vadd.f32 %v2973, %v2977
    %v2980 = vadd.f32 %v2974, %v2977
    %v2981 = vlaneseq
    %v2982 = vshrl.u32 %v2981, 7
    %v2983 = vsub.s32 5, %v2982
    %v2984 = vrot.slane %v413, %v2983
    %2989 = vrot.lane.b32.xlu0 %v1825, 32
    %v2990 = vpop.permute.xlu0 %2989
    %2991 = vrot.lane.b32.xlu0 %v1826, 32
    %v2992 = vpop.permute.xlu0 %2991
    %2993 = vrot.lane.b32.xlu0 %v1827, 32
    %v2994 = vpop.permute.xlu0 %2993
    %2995 = vrot.lane.b32.xlu0 %v1828, 32
    %v2996 = vpop.permute.xlu0 %2995
    %2997 = vrot.lane.b32.xlu0 %v1829, 32
    %v2998 = vpop.permute.xlu0 %2997
    %2999 = vrot.lane.b32.xlu0 %v1830, 32
    %v3000 = vpop.permute.xlu0 %2999
    %3001 = vrot.lane.b32.xlu0 %v1831, 32
    %v3002 = vpop.permute.xlu0 %3001
    %3003 = vrot.lane.b32.xlu0 %v1832, 32
    %v3004 = vpop.permute.xlu0 %3003
    %v3005 = vsel %vm373, %v2990, %v2992
    %v3006 = vsel %vm373, %v2994, %v2996
    %v3007 = vsel %vm373, %v2998, %v3000
    %v3008 = vsel %vm373, %v3002, %v3004
    %v3014 = vsel %vm373, %v2979, 0
    %v3017 = vsel %vm373, %v2980, 0
    %3019 = vmatprep.subr.mxu0 0.0
    %3020 = vmatpush1.msra.mxu0 0.0
    %3021 = vmatprep.subr.mxu0 0.0
    %3022 = vmatpush1.msra.mxu0 0.0
    %3023 = vmatprep.subr.mxu0 0.0
    %3024 = vmatpush1.msra.mxu0 0.0
    %3025 = vmatprep.subr.mxu0 0.0
    %3026 = vmatpush1.msra.mxu0 0.0
    %3027 = vmatprep.subr.mxu0 0.0
    %3028 = vmatpush1.msra.mxu0 0.0
    %3029 = vmatprep.subr.mxu0 0.0
    %3030 = vmatpush1.msra.mxu0 0.0
    %3031 = vmatprep.subr.mxu0 0.0
    %3032 = vmatpush1.msra.mxu0 0.0
    %3033 = vmatprep.subr.mxu0 0.0
    %3034 = vmatpush1.msra.mxu0 0.0
    %3035 = vmatprep.subr.mxu0 0.0
    %3036 = vmatpush1.msra.mxu0 0.0
    %3037 = vmatprep.subr.mxu0 0.0
    %3038 = vmatpush1.msra.mxu0 0.0
    %3039 = vmatprep.subr.mxu0 0.0
    %3040 = vmatpush1.msra.mxu0 0.0
    %3041 = vmatprep.subr.mxu0 0.0
    %3042 = vmatpush1.msra.mxu0 0.0
    %3043 = vmatprep.subr.mxu0 0.0
    %3044 = vmatpush1.msra.mxu0 %v3008
    %3045 = vmatprep.subr.mxu0 0.0
    %3046 = vmatpush1.msra.mxu0 %v3007
    %3047 = vmatprep.subr.mxu0 0.0
    %3048 = vmatpush1.msra.mxu0 %v3006
    %3049 = vmatprep.subr.mxu0 0.0
    %3050 = vmatpush1.msra.mxu0 %v3005
    %3051 = vmatprep.subr.mxu0 0.0
    %3052 = vmatpush2.msra.mxu0 0.0
    %3053 = vmatprep.subr.mxu0 0.0
    %3054 = vmatpush2.msra.mxu0 0.0
    %3055 = vmatprep.subr.mxu0 0.0
    %3056 = vmatpush2.msra.mxu0 0.0
    %3057 = vmatprep.subr.mxu0 0.0
    %3058 = vmatpush2.msra.mxu0 0.0
    %3059 = vmatprep.subr.mxu0 0.0
    %3060 = vmatpush2.msra.mxu0 0.0
    %3061 = vmatprep.subr.mxu0 0.0
    %3062 = vmatpush2.msra.mxu0 0.0
    %3063 = vmatprep.subr.mxu0 0.0
    %3064 = vmatpush2.msra.mxu0 0.0
    %3065 = vmatprep.subr.mxu0 0.0
    %3066 = vmatpush2.msra.mxu0 0.0
    %3067 = vmatprep.subr.mxu0 0.0
    %3068 = vmatpush2.msra.mxu0 0.0
    %3069 = vmatprep.subr.mxu0 0.0
    %3070 = vmatpush2.msra.mxu0 0.0
    %3071 = vmatprep.subr.mxu0 0.0
    %3072 = vmatpush2.msra.mxu0 0.0
    %3073 = vmatprep.subr.mxu0 0.0
    %3074 = vmatpush2.msra.mxu0 0.0
    %3075 = vmatprep.subr.mxu0 0.0
    %3076 = vmatpush2.msra.mxu0 0.0
    %3077 = vmatprep.subr.mxu0 0.0
    %3078 = vmatpush2.msra.mxu0 0.0
    %3079 = vmatprep.subr.mxu0 0.0
    %3080 = vmatpush2.msra.mxu0 0.0
    %3081 = vmatprep.subr.mxu0 0.0
    %3082 = vmatpush2.msra.mxu0 0.0
    %3083 = vmatprep.mubr.f32.mxu0 0.0
    %3084 = vmatmul.mubr.f32.gmra.mxu0 %v3014
    %v3085 = vpop.f32.mrf.mxu0
    %v3086 = vadd.f32 %v2984, %v3085
    %v3087 = vpop.f32.mrf.mxu0
    %3088 = vmatprep.mubr.f32.mxu0 0.0
    %3089 = vmatmul.mubr.f32.gmra.mxu0 %v3017
    %v3090 = vpop.f32.mrf.mxu0
    %v3091 = vadd.f32 %v2984, %v3090
    %v3092 = vpop.f32.mrf.mxu0
    %3093 = vdwg.mxu0
    %v3094 = vmul.f32 %v3086, 0.5
    %v3095 = vmul.f32 %v3091, 0.5
    %v3096 = vmul.f32 %v3086, 0.044715
    %v3097 = vmul.f32 %v3091, 0.044715
    %v3098 = vmul.f32 %v3096, %v3086
    %v3099 = vmul.f32 %v3097, %v3091
    %v3100 = vmul.f32 %v3098, %v3086
    %v3101 = vmul.f32 %v3099, %v3091
    %v3102 = vadd.f32 %v3086, %v3100
    %v3103 = vadd.f32 %v3091, %v3101
    %v3104 = vmul.f32 %v3102, 0.7978846
    %v3105 = vmul.f32 %v3103, 0.7978846
    %v3106 = vtanh.pop %v3104
    %v3107 = vtanh.pop %v3105
    %v3108 = vadd.f32 %v3106, 1.0
    %v3109 = vadd.f32 %v3107, 1.0
    %v3110 = vmul.f32 %v3094, %v3108
    %v3111 = vmul.f32 %v3095, %v3109
    %3113 = vrot.lane.b32.xlu0 %v2984, 64
    %v3114 = vpop.permute.xlu0 %3113
    %v3117 = vsel %vm1704, %v3110, 0
    %v3120 = vsel %vm1704, %v3111, 0
    %3122 = vmatprep.subr.mxu0 0.0
    %3123 = vmatpush1.msra.mxu0 0.0
    %3124 = vmatprep.subr.mxu0 0.0
    %3125 = vmatpush1.msra.mxu0 0.0
    %3126 = vmatprep.subr.mxu0 0.0
    %3127 = vmatpush1.msra.mxu0 0.0
    %3128 = vmatprep.subr.mxu0 0.0
    %3129 = vmatpush1.msra.mxu0 0.0
    %3130 = vmatprep.subr.mxu0 0.0
    %3131 = vmatpush1.msra.mxu0 0.0
    %3132 = vmatprep.subr.mxu0 0.0
    %3133 = vmatpush1.msra.mxu0 0.0
    %3134 = vmatprep.subr.mxu0 0.0
    %3135 = vmatpush1.msra.mxu0 0.0
    %3136 = vmatprep.subr.mxu0 0.0
    %3137 = vmatpush1.msra.mxu0 0.0
    %3138 = vmatprep.subr.mxu0 0.0
    %3139 = vmatpush1.msra.mxu0 %v1845
    %3140 = vmatprep.subr.mxu0 0.0
    %3141 = vmatpush1.msra.mxu0 %v1844
    %3142 = vmatprep.subr.mxu0 0.0
    %3143 = vmatpush1.msra.mxu0 %v1843
    %3144 = vmatprep.subr.mxu0 0.0
    %3145 = vmatpush1.msra.mxu0 %v1842
    %3146 = vmatprep.subr.mxu0 0.0
    %3147 = vmatpush1.msra.mxu0 %v1841
    %3148 = vmatprep.subr.mxu0 0.0
    %3149 = vmatpush1.msra.mxu0 %v1840
    %3150 = vmatprep.subr.mxu0 0.0
    %3151 = vmatpush1.msra.mxu0 %v1839
    %3152 = vmatprep.subr.mxu0 0.0
    %3153 = vmatpush1.msra.mxu0 %v1838
    %3154 = vmatprep.subr.mxu0 0.0
    %3155 = vmatpush2.msra.mxu0 0.0
    %3156 = vmatprep.subr.mxu0 0.0
    %3157 = vmatpush2.msra.mxu0 0.0
    %3158 = vmatprep.subr.mxu0 0.0
    %3159 = vmatpush2.msra.mxu0 0.0
    %3160 = vmatprep.subr.mxu0 0.0
    %3161 = vmatpush2.msra.mxu0 0.0
    %3162 = vmatprep.subr.mxu0 0.0
    %3163 = vmatpush2.msra.mxu0 0.0
    %3164 = vmatprep.subr.mxu0 0.0
    %3165 = vmatpush2.msra.mxu0 0.0
    %3166 = vmatprep.subr.mxu0 0.0
    %3167 = vmatpush2.msra.mxu0 0.0
    %3168 = vmatprep.subr.mxu0 0.0
    %3169 = vmatpush2.msra.mxu0 0.0
    %3170 = vmatprep.subr.mxu0 0.0
    %3171 = vmatpush2.msra.mxu0 0.0
    %3172 = vmatprep.subr.mxu0 0.0
    %3173 = vmatpush2.msra.mxu0 0.0
    %3174 = vmatprep.subr.mxu0 0.0
    %3175 = vmatpush2.msra.mxu0 0.0
    %3176 = vmatprep.subr.mxu0 0.0
    %3177 = vmatpush2.msra.mxu0 0.0
    %3178 = vmatprep.subr.mxu0 0.0
    %3179 = vmatpush2.msra.mxu0 0.0
    %3180 = vmatprep.subr.mxu0 0.0
    %3181 = vmatpush2.msra.mxu0 0.0
    %3182 = vmatprep.subr.mxu0 0.0
    %3183 = vmatpush2.msra.mxu0 0.0
    %3184 = vmatprep.subr.mxu0 0.0
    %3185 = vmatpush2.msra.mxu0 0.0
    %3186 = vmatprep.mubr.f32.mxu0 0.0
    %3187 = vmatmul.mubr.f32.gmra.mxu0 %v3117
    %v3188 = vpop.f32.mrf.mxu0
    %v3189 = vadd.f32 %v3114, %v3188
    %v3190 = vpop.f32.mrf.mxu0
    %3191 = vmatprep.mubr.f32.mxu0 0.0
    %3192 = vmatmul.mubr.f32.gmra.mxu0 %v3120
    %v3193 = vpop.f32.mrf.mxu0
    %v3194 = vadd.f32 %v3114, %v3193
    %v3195 = vpop.f32.mrf.mxu0
    %3196 = vdwg.mxu0
    %v3197 = vadd.f32 %v2979, %v3189
    %v3198 = vadd.f32 %v2980, %v3194
    %v3199 = vsel %vm373, %v3197, 0.0
    %3200 = vadd.xlane.f32.xlu0 %v3199
    %v3201 = vpop.xlane.xlu0 %3200
    %v3202 = vsel %vm373, %v3198, 0.0
    %3203 = vadd.xlane.f32.xlu0 %v3202
    %v3204 = vpop.xlane.xlu0 %3203
    %v3205 = vmul.f32 %v3201, %v380
    %v3206 = vmul.f32 %v3204, %v380
    %v3207 = vsub.f32 %v3197, %v3205
    %v3208 = vsub.f32 %v3198, %v3206
    %v3209 = vmul.f32 %v3207, %v3207
    %v3210 = vmul.f32 %v3208, %v3208
    %v3211 = vsel %vm373, %v3209, 0.0
    %3212 = vadd.xlane.f32.xlu0 %v3211
    %v3213 = vpop.xlane.xlu0 %3212
    %v3214 = vsel %vm373, %v3210, 0.0
    %3215 = vadd.xlane.f32.xlu0 %v3214
    %v3216 = vpop.xlane.xlu0 %3215
    %v3217 = vmul.f32 %v3213, %v380
    %v3218 = vmul.f32 %v3216, %v380
    %v3219 = vadd.f32 %v3217, 1e-05
    %v3220 = vadd.f32 %v3218, 1e-05
    %v3221 = vrsqrt.pop %v3219
    %v3222 = vrsqrt.pop %v3220
    %v3223 = vmul.f32 %v3207, %v3221
    %v3224 = vmul.f32 %v3208, %v3222
    %3225 = vrot.lane.b32.xlu0 %v2972, 64
    %v3226 = vpop.permute.xlu0 %3225
    %v3228 = vmul.f32 %v3223, %v3226
    %v3229 = vmul.f32 %v3224, %v3226
    %3230 = vrot.lane.b32.xlu0 %v2972, 32
    %v3231 = vpop.permute.xlu0 %3230
    %v3233 = vadd.f32 %v3228, %v3231
    %v3234 = vadd.f32 %v3229, %v3231
    %v3235 = vld [vmem:[%s6] sm:$0xff]
    %v3236 = vld [vmem:[%s6 + $0x8] sm:$0xff]
    %v3237 = vld [vmem:[%s6 + $0x10] sm:$0xff]
    %v3238 = vld [vmem:[%s6 + $0x18] sm:$0xff]
    %v3239 = vlaneseq
    %v3240 = vshrl.u32 %v3239, 7
    %v3241 = vsub.s32 6, %v3240
    %v3242 = vrot.slane %v413, %v3241
    %v3244 = vsel %vm373, %v3233, 0
    %v3247 = vsel %vm373, %v3234, 0
    %3249 = vmatprep.subr.mxu0 0.0
    %3250 = vmatpush1.msra.mxu0 0.0
    %3251 = vmatprep.subr.mxu0 0.0
    %3252 = vmatpush1.msra.mxu0 0.0
    %3253 = vmatprep.subr.mxu0 0.0
    %3254 = vmatpush1.msra.mxu0 0.0
    %3255 = vmatprep.subr.mxu0 0.0
    %3256 = vmatpush1.msra.mxu0 0.0
    %3257 = vmatprep.subr.mxu0 0.0
    %3258 = vmatpush1.msra.mxu0 0.0
    %3259 = vmatprep.subr.mxu0 0.0
    %3260 = vmatpush1.msra.mxu0 0.0
    %3261 = vmatprep.subr.mxu0 0.0
    %3262 = vmatpush1.msra.mxu0 0.0
    %3263 = vmatprep.subr.mxu0 0.0
    %3264 = vmatpush1.msra.mxu0 0.0
    %3265 = vmatprep.subr.mxu0 0.0
    %3266 = vmatpush1.msra.mxu0 0.0
    %3267 = vmatprep.subr.mxu0 0.0
    %3268 = vmatpush1.msra.mxu0 0.0
    %3269 = vmatprep.subr.mxu0 0.0
    %3270 = vmatpush1.msra.mxu0 0.0
    %3271 = vmatprep.subr.mxu0 0.0
    %3272 = vmatpush1.msra.mxu0 0.0
    %3273 = vmatprep.subr.mxu0 0.0
    %3274 = vmatpush1.msra.mxu0 %v3238
    %3275 = vmatprep.subr.mxu0 0.0
    %3276 = vmatpush1.msra.mxu0 %v3237
    %3277 = vmatprep.subr.mxu0 0.0
    %3278 = vmatpush1.msra.mxu0 %v3236
    %3279 = vmatprep.subr.mxu0 0.0
    %3280 = vmatpush1.msra.mxu0 %v3235
    %3281 = vmatprep.subr.mxu0 0.0
    %3282 = vmatpush2.msra.mxu0 0.0
    %3283 = vmatprep.subr.mxu0 0.0
    %3284 = vmatpush2.msra.mxu0 0.0
    %3285 = vmatprep.subr.mxu0 0.0
    %3286 = vmatpush2.msra.mxu0 0.0
    %3287 = vmatprep.subr.mxu0 0.0
    %3288 = vmatpush2.msra.mxu0 0.0
    %3289 = vmatprep.subr.mxu0 0.0
    %3290 = vmatpush2.msra.mxu0 0.0
    %3291 = vmatprep.subr.mxu0 0.0
    %3292 = vmatpush2.msra.mxu0 0.0
    %3293 = vmatprep.subr.mxu0 0.0
    %3294 = vmatpush2.msra.mxu0 0.0
    %3295 = vmatprep.subr.mxu0 0.0
    %3296 = vmatpush2.msra.mxu0 0.0
    %3297 = vmatprep.subr.mxu0 0.0
    %3298 = vmatpush2.msra.mxu0 0.0
    %3299 = vmatprep.subr.mxu0 0.0
    %3300 = vmatpush2.msra.mxu0 0.0
    %3301 = vmatprep.subr.mxu0 0.0
    %3302 = vmatpush2.msra.mxu0 0.0
    %3303 = vmatprep.subr.mxu0 0.0
    %3304 = vmatpush2.msra.mxu0 0.0
    %3305 = vmatprep.subr.mxu0 0.0
    %3306 = vmatpush2.msra.mxu0 0.0
    %3307 = vmatprep.subr.mxu0 0.0
    %3308 = vmatpush2.msra.mxu0 0.0
    %3309 = vmatprep.subr.mxu0 0.0
    %3310 = vmatpush2.msra.mxu0 0.0
    %3311 = vmatprep.subr.mxu0 0.0
    %3312 = vmatpush2.msra.mxu0 0.0
    %3313 = vmatprep.mubr.f32.mxu0 0.0
    %3314 = vmatmul.mubr.f32.gmra.mxu0 %v3244
    %v3315 = vpop.f32.mrf.mxu0
    %v3316 = vadd.f32 %v3242, %v3315
    %v3317 = vpop.f32.mrf.mxu0
    %3318 = vmatprep.mubr.f32.mxu0 0.0
    %3319 = vmatmul.mubr.f32.gmra.mxu0 %v3247
    %v3320 = vpop.f32.mrf.mxu0
    %v3321 = vadd.f32 %v3242, %v3320
    %v3322 = vpop.f32.mrf.mxu0
    %3323 = vdwg.mxu0
    %v3324 = vsub.f32 0.0, %v3316
    %v3325 = vsub.f32 0.0, %v3321
    %v3326 = vmul.f32 %v3324, 1.442695
    %v3327 = vpow.pop %v3326
    %v3328 = vmul.f32 %v3325, 1.442695
    %v3329 = vpow.pop %v3328
    %v3330 = vadd.f32 %v3327, 1.0
    %v3331 = vadd.f32 %v3329, 1.0
    %v3332 = vrcp.pop %v3330
    %v3333 = vrcp.pop %v3331
    %3335 = vset.pattern.permute.xlu0 2
    %3336 = vperm.xlu0 %3335, %v3332
    %v3337 = vpop.permute.xlu0 %3336
    %3340 = vset.pattern.permute.xlu0 2
    %3341 = vperm.xlu0 %3340, %v3333
    %v3342 = vpop.permute.xlu0 %3341
    %v3344 = vlaneseq
    %v3345 = vshrl.u32 %v3344, 7
    %v3346 = vsub.s32 7, %v3345
    %v3347 = vrot.slane %v413, %v3346
    %v3348 = vmul.f32 %v3337, %v3347
    %v3349 = vmul.f32 %v3342, %v3347
    %v3350 = vadd.f32 %v3316, %v3348
    %v3351 = vadd.f32 %v3321, %v3349
    %3352 = vst [vmem:[%s7] sm:$0xff] %v3350
    %3353 = vst [vmem:[%s7 + $0x8] sm:$0xff] %v3351
    // Predicated region
    $region46: #{model_forward.1} parent=1 // pred_check
      _
    $region47: #{model_forward.1} parent=1 // pred_check_branch
      %3355 = sbr.rel (0) target = $region49
    $region48: #{model_forward.1} parent=1 // pred_region
      _
    $region49: #{model_forward.1} parent=1 // pred_fallthru
      _
    // Predicated region
    $region50: #{model_forward.1} parent=1 // pred_check
      _
    $region51: #{model_forward.1} parent=1 // pred_check_branch
      %3357 = sbr.rel (0) target = $region53
    $region52: #{model_forward.1} parent=1 // pred_region
      _
    $region53: #{model_forward.1} parent=1 // pred_fallthru
      _
    %3358 = vsyncpa [#allocation3], 1
    %3359 = vsyncpa [#allocation5], 1
    %3360 = vsyncpa [#allocation8], 1

</llo_original>
